<compile_context>
chip_gen: v6e
topology: v6e:2x2x1
jax: 0.10.0
libtpu: 0.0.40
codegen_flags: <defaults>
</compile_context>

<pallas_src>
import math

import jax
import jax.numpy as jnp
import numpy as np
from jax.experimental import pallas as pl
from jax.experimental.pallas import tpu as pltpu

# ----------------------------- config ---------------------------------------
N_NODES = 16                       # nodes per graph
IN_DIM = 32                        # in_dim == out_dim (required by residual)
OUT_DIM = 32
NUM_HEADS = 4
HEAD_DIM = OUT_DIM // NUM_HEADS    # "out_dim" inside MultiHeadAttentionLayer
HIDDEN = OUT_DIM * 2               # FFN hidden width
BN_EPS = 1e-5
ATTN_EPS = 1e-6
INV_SQRT_DH = 1.0 / math.sqrt(HEAD_DIM)

NUM_GRAPHS = 64                    # batch of independent graphs (one forward each)
GRAPHS_PER_STEP = 32               # grid=(2,): one step per TC on v7x, 512-wide lane axis


# ----------------------------- shared math -----------------------------------
# Written once in jnp (feature-major / transposed layout); called from inside the Pallas kernel
# (on VMEM tiles) and from the pure-XLA reference, so kernel and reference share formula/op order.
def _graph_batch_norm_t(x_t, pool_t, gamma_col, beta_col):
    """Per-graph BatchNorm (training mode, biased variance), feature-major layout.

    pool_t is symmetric block-diagonal with 1/N inside each graph's block; a single
    [2D, GN] @ [GN, GN] matmul yields both mean and E[x^2] broadcast back to every node.
    """
    d = x_t.shape[0]
    stats = jnp.dot(jnp.concatenate([x_t, x_t * x_t], axis=0), pool_t,
                    preferred_element_type=jnp.float32)           # [2D, GN]
    mean = stats[:d]
    var = stats[d:] - mean * mean                                  # biased var (E[x^2]-mean^2)
    scale = gamma_col * jax.lax.rsqrt(var + BN_EPS)                # folded affine
    return x_t * scale + (beta_col - mean * scale)


def _layer_math_t(h_t, adj_t, pool_t,
                  wqkv_t, wo_t, bo_col,
                  bn1_g, bn1_b,
                  w1_t, b1_col, w2_t, b2_col,
                  bn2_g, bn2_b):
    f32 = jnp.float32
    D = OUT_DIM

    adj_t = adj_t.astype(f32)      # bf16 storage holds exact 0/1 -> exact upcast
    pool_t = pool_t.astype(f32)    # bf16 storage holds exact 1/16 -> exact upcast

    # fused Q/K/V projection: [3D, D_in] @ [D_in, GN]; 1/sqrt(Dh) already folded into Q rows.
    qkv_t = jnp.dot(wqkv_t, h_t, preferred_element_type=f32)      # [3D, GN]
    Qs = qkv_t[0 * D:1 * D]
    K = qkv_t[1 * D:2 * D]
    V = qkv_t[2 * D:3 * D]

    # fused edge aggregation: [K*V ; K] @ A_blockdiag^T  -> [2D, GN]
    kvk_t = jnp.concatenate([K * V, K], axis=0)
    agg_t = jnp.dot(kvk_t, adj_t, preferred_element_type=f32)

    wV = Qs * agg_t[:D]                                            # sum_{u->v} V*score
    z = Qs * agg_t[D:]                                             # sum_{u->v} score
    h_attn = wV / (z + ATTN_EPS)                                   # NOTE: ill-conditioned by design

    # O projection + residual + per-graph batch-norm 1
    h1 = h_t + jnp.dot(wo_t, h_attn, preferred_element_type=f32) + bo_col
    h1 = _graph_batch_norm_t(h1, pool_t, bn1_g, bn1_b)

    # FFN + residual + per-graph batch-norm 2
    f = jnp.maximum(jnp.dot(w1_t, h1, preferred_element_type=f32) + b1_col, 0.0)
    h2 = h1 + jnp.dot(w2_t, f, preferred_element_type=f32) + b2_col
    return _graph_batch_norm_t(h2, pool_t, bn2_g, bn2_b)


# ----------------------------- kernel ----------------------------------------
def _gt_layer_kernel(h_ref, adj_ref, pool_ref,
                     wqkv_ref, wo_ref, bo_ref,
                     bn1_g_ref, bn1_b_ref,
                     w1_ref, b1_ref, w2_ref, b2_ref,
                     bn2_g_ref, bn2_b_ref,
                     out_ref):
    out_ref[...] = _layer_math_t(
        h_ref[...], adj_ref[...], pool_ref[...],
        wqkv_ref[...], wo_ref[...], bo_ref[...],
        bn1_g_ref[...], bn1_b_ref[...],
        w1_ref[...], b1_ref[...], w2_ref[...], b2_ref[...],
        bn2_g_ref[...], bn2_b_ref[...])


# ----------------------------- graph packing (device-side, jittable) ----------
def _blockdiag_adj_t(adj, graphs_per_step):
    """[B,N,N] adjacency (adj[b,v,u]=1 iff edge u->v) -> stacked per-step *transposed*
    block-diagonal [S*GN, GN] in bf16 (0/1 exactly representable). Vectorized, traceable."""
    B, N, _ = adj.shape
    S = B // graphs_per_step
    G = graphs_per_step
    GN = G * N
    adj_t = jnp.swapaxes(adj, -1, -2).reshape(S, G, N, N)         # per-graph A^T
    eye = jnp.eye(G, dtype=adj.dtype)
    bd = eye[None, :, None, :, None] * adj_t[:, :, :, None, :]    # [S,G,N,G,N]
    return bd.reshape(S * GN, GN).astype(jnp.bfloat16)


def _pool_matrix_t(graphs_per_step, n_nodes):
    """Symmetric block-diagonal per-graph mean-pooling matrix (1/N per block), bf16 (exact)."""
    m = np.kron(np.eye(graphs_per_step, dtype=np.float32),
                np.full((n_nodes, n_nodes), 1.0 / n_nodes, dtype=np.float32))
    return jnp.asarray(m, dtype=jnp.bfloat16)


# ----------------------------- wrapper ----------------------------------------
def graph_transformer_layer(h, adj, params, graphs_per_step=GRAPHS_PER_STEP):
    """Batched fused forward. h: [B,N,D] f32, adj: [B,N,N] f32 (adj[b,v,u]=1 iff edge u->v)."""
    B, N, D = h.shape
    assert D == OUT_DIM and B % graphs_per_step == 0
    S = B // graphs_per_step
    GN = graphs_per_step * N

    h_t = h.reshape(B * N, D).T                        # [D, B*N]   feature-major
    adj_t = _blockdiag_adj_t(adj, graphs_per_step)     # [S*GN, GN] bf16, per-step blocks
    pool_t = _pool_matrix_t(graphs_per_step, N)        # [GN, GN]   bf16, resident

    def resident(arr):  # weights / constants: same block every step -> DMA'd once
        return pl.BlockSpec(arr.shape, lambda s: (0, 0))

    weight_names = ("WqkvT", "WoT", "boT", "bn1_g", "bn1_b",
                    "W1T", "b1T", "W2T", "b2T", "bn2_g", "bn2_b")
    weights = [params[k] for k in weight_names]

    in_specs = ([pl.BlockSpec((D, GN), lambda s: (0, s)),      # node features (per-step cols)
                 pl.BlockSpec((GN, GN), lambda s: (s, 0)),     # transposed block-diag adjacency
                 resident(pool_t)]                             # pooling matrix
                + [resident(w) for w in weights])

    out_t = pl.pallas_call(
        _gt_layer_kernel,
        out_shape=jax.ShapeDtypeStruct((D, B * N), jnp.float32),
        grid=(S,),
        in_specs=in_specs,
        out_specs=pl.BlockSpec((D, GN), lambda s: (0, s)),     # lane-dense (512-wide) stores
        compiler_params=pltpu.CompilerParams(
            dimension_semantics=("parallel",),                 # 2 steps -> 2 TCs on v7x
            vmem_limit_bytes=32 * 1024 * 1024),
    )(h_t, adj_t, pool_t, *weights)

    return out_t.T.reshape(B, N, D)


# ----------------------------- parameter init ---------------------------------
def xavier_uniform(key, fan_in, fan_out):
    lim = math.sqrt(6.0 / (fan_in + fan_out))
    return jax.random.uniform(key, (fan_in, fan_out), jnp.float32, -lim, lim)


def init_params(key):
    ks = jax.random.split(key, 9)
    wq = xavier_uniform(ks[0], IN_DIM, OUT_DIM)
    wk = xavier_uniform(ks[1], IN_DIM, OUT_DIM)
    wv = xavier_uniform(ks[2], IN_DIM, OUT_DIM)
    wo = xavier_uniform(ks[3], OUT_DIM, OUT_DIM)
    bo = 0.01 * jax.random.normal(ks[4], (OUT_DIM,), jnp.float32)
    w1 = xavier_uniform(ks[5], OUT_DIM, HIDDEN)
    b1 = 0.01 * jax.random.normal(ks[6], (HIDDEN,), jnp.float32)
    w2 = xavier_uniform(ks[7], HIDDEN, OUT_DIM)
    b2 = 0.01 * jax.random.normal(ks[8], (OUT_DIM,), jnp.float32)
    return {
        # fused Q/K/V (use_bias=False), transposed to [3*out, in]; 1/sqrt(Dh) folded into Q rows
        "WqkvT": jnp.concatenate([(wq * INV_SQRT_DH).T, wk.T, wv.T], axis=0),
        # O projection (Linear with bias), transposed
        "WoT": wo.T, "boT": bo.reshape(OUT_DIM, 1),
        # FFN, transposed
        "W1T": w1.T, "b1T": b1.reshape(HIDDEN, 1),
        "W2T": w2.T, "b2T": b2.reshape(OUT_DIM, 1),
        # batch-norm affine params (PyTorch defaults: gamma=1, beta=0), feature-major columns
        "bn1_g": jnp.ones((OUT_DIM, 1), jnp.float32),
        "bn1_b": jnp.zeros((OUT_DIM, 1), jnp.float32),
        "bn2_g": jnp.ones((OUT_DIM, 1), jnp.float32),
        "bn2_b": jnp.zeros((OUT_DIM, 1), jnp.float32),
    }


# ----------------------------- main --------------------------------------------
if __name__ == "__main__":
    key = jax.random.PRNGKey(0)
    k_h, k_adj, k_p = jax.random.split(key, 3)

    h = jax.random.normal(k_h, (NUM_GRAPHS, N_NODES, IN_DIM), jnp.float32)

    # random directed graphs with self loops; adj[b, v, u] = 1 iff edge u -> v in graph b
    adj = (jax.random.uniform(k_adj, (NUM_GRAPHS, N_NODES, N_NODES)) < 0.3).astype(jnp.float32)
    adj = jnp.maximum(adj, jnp.eye(N_NODES, dtype=jnp.float32)[None])

    params = init_params(k_p)

    fwd = jax.jit(lambda hh, aa: graph_transformer_layer(hh, aa, params))
    out = jax.block_until_ready(fwd(h, adj))

    # Pure-XLA reference: identical math (shared _layer_math_t) on the whole batch at once.
    adj_t_full = _blockdiag_adj_t(adj, NUM_GRAPHS)                 # [B*N, B*N]
    pool_full = _pool_matrix_t(NUM_GRAPHS, N_NODES)                # [B*N, B*N]
    ref_t = _layer_math_t(h.reshape(-1, IN_DIM).T, adj_t_full, pool_full,
                          params["WqkvT"], params["WoT"], params["boT"],
                          params["bn1_g"], params["bn1_b"],
                          params["W1T"], params["b1T"], params["W2T"], params["b2T"],
                          params["bn2_g"], params["bn2_b"])
    ref = jax.block_until_ready(ref_t.T.reshape(NUM_GRAPHS, N_NODES, OUT_DIM))

    # Tolerance: the SAN-style wV/(z+1e-6) division is ill-conditioned near z ~ -1e-6, so tiny
    # backend (Pallas/MXU vs XLA) rounding differences can be locally amplified; 1e-3 is tight.
    np.testing.assert_allclose(np.asarray(out), np.asarray(ref), rtol=1e-3, atol=1e-3)

    print("KERNEL_OK")
</pallas_src>

<mosaic_0001>
module attributes {stable_mosaic.version = 11 : i64} {
  func.func @_gt_layer_kernel(%arg0: i32, %arg1: memref<32x512xf32, #tpu.memory_space<vmem>>, %arg2: memref<512x512xbf16, #tpu.memory_space<vmem>>, %arg3: memref<512x512xbf16, #tpu.memory_space<vmem>>, %arg4: memref<96x32xf32, #tpu.memory_space<vmem>>, %arg5: memref<32x32xf32, #tpu.memory_space<vmem>>, %arg6: memref<32x1xf32, #tpu.memory_space<vmem>>, %arg7: memref<32x1xf32, #tpu.memory_space<vmem>>, %arg8: memref<32x1xf32, #tpu.memory_space<vmem>>, %arg9: memref<64x32xf32, #tpu.memory_space<vmem>>, %arg10: memref<64x1xf32, #tpu.memory_space<vmem>>, %arg11: memref<32x64xf32, #tpu.memory_space<vmem>>, %arg12: memref<32x1xf32, #tpu.memory_space<vmem>>, %arg13: memref<32x1xf32, #tpu.memory_space<vmem>>, %arg14: memref<32x1xf32, #tpu.memory_space<vmem>>, %arg15: memref<32x512xf32, #tpu.memory_space<vmem>>) attributes {dimension_semantics = [#tpu.dimension_semantics<parallel>], iteration_bounds = array<i64: 2>, scalar_prefetch = 0 : i64, scratch_operands = 0 : i64, tpu.core_type = #tpu.core_type<tc>, window_params = [{transform_indices = @transform_0, window_bounds = array<i64: 32, 512>}, {transform_indices = @transform_1, window_bounds = array<i64: 512, 512>}, {pipeline_mode = #tpu.pipeline_mode<synchronous>, transform_indices = @transform_2, window_bounds = array<i64: 512, 512>}, {pipeline_mode = #tpu.pipeline_mode<synchronous>, transform_indices = @transform_3, window_bounds = array<i64: 96, 32>}, {pipeline_mode = #tpu.pipeline_mode<synchronous>, transform_indices = @transform_4, window_bounds = array<i64: 32, 32>}, {pipeline_mode = #tpu.pipeline_mode<synchronous>, transform_indices = @transform_5, window_bounds = array<i64: 32, 1>}, {pipeline_mode = #tpu.pipeline_mode<synchronous>, transform_indices = @transform_6, window_bounds = array<i64: 32, 1>}, {pipeline_mode = #tpu.pipeline_mode<synchronous>, transform_indices = @transform_7, window_bounds = array<i64: 32, 1>}, {pipeline_mode = #tpu.pipeline_mode<synchronous>, transform_indices = @transform_8, window_bounds = array<i64: 64, 32>}, {pipeline_mode = #tpu.pipeline_mode<synchronous>, transform_indices = @transform_9, window_bounds = array<i64: 64, 1>}, {pipeline_mode = #tpu.pipeline_mode<synchronous>, transform_indices = @transform_10, window_bounds = array<i64: 32, 64>}, {pipeline_mode = #tpu.pipeline_mode<synchronous>, transform_indices = @transform_11, window_bounds = array<i64: 32, 1>}, {pipeline_mode = #tpu.pipeline_mode<synchronous>, transform_indices = @transform_12, window_bounds = array<i64: 32, 1>}, {pipeline_mode = #tpu.pipeline_mode<synchronous>, transform_indices = @transform_13, window_bounds = array<i64: 32, 1>}, {transform_indices = @transform_14, window_bounds = array<i64: 32, 512>}]} {
    %c0 = arith.constant 0 : index
    %c0_0 = arith.constant 0 : index
    %0 = vector.load %arg1[%c0, %c0_0] : memref<32x512xf32, #tpu.memory_space<vmem>>, vector<32x512xf32>
    %c0_1 = arith.constant 0 : index
    %c0_2 = arith.constant 0 : index
    %1 = vector.load %arg2[%c0_1, %c0_2] : memref<512x512xbf16, #tpu.memory_space<vmem>>, vector<512x512xbf16>
    %c0_3 = arith.constant 0 : index
    %c0_4 = arith.constant 0 : index
    %2 = vector.load %arg3[%c0_3, %c0_4] : memref<512x512xbf16, #tpu.memory_space<vmem>>, vector<512x512xbf16>
    %c0_5 = arith.constant 0 : index
    %c0_6 = arith.constant 0 : index
    %3 = vector.load %arg4[%c0_5, %c0_6] : memref<96x32xf32, #tpu.memory_space<vmem>>, vector<96x32xf32>
    %c0_7 = arith.constant 0 : index
    %c0_8 = arith.constant 0 : index
    %4 = vector.load %arg5[%c0_7, %c0_8] : memref<32x32xf32, #tpu.memory_space<vmem>>, vector<32x32xf32>
    %c0_9 = arith.constant 0 : index
    %c0_10 = arith.constant 0 : index
    %5 = vector.load %arg6[%c0_9, %c0_10] : memref<32x1xf32, #tpu.memory_space<vmem>>, vector<32x1xf32>
    %c0_11 = arith.constant 0 : index
    %c0_12 = arith.constant 0 : index
    %6 = vector.load %arg7[%c0_11, %c0_12] : memref<32x1xf32, #tpu.memory_space<vmem>>, vector<32x1xf32>
    %c0_13 = arith.constant 0 : index
    %c0_14 = arith.constant 0 : index
    %7 = vector.load %arg8[%c0_13, %c0_14] : memref<32x1xf32, #tpu.memory_space<vmem>>, vector<32x1xf32>
    %c0_15 = arith.constant 0 : index
    %c0_16 = arith.constant 0 : index
    %8 = vector.load %arg9[%c0_15, %c0_16] : memref<64x32xf32, #tpu.memory_space<vmem>>, vector<64x32xf32>
    %c0_17 = arith.constant 0 : index
    %c0_18 = arith.constant 0 : index
    %9 = vector.load %arg10[%c0_17, %c0_18] : memref<64x1xf32, #tpu.memory_space<vmem>>, vector<64x1xf32>
    %c0_19 = arith.constant 0 : index
    %c0_20 = arith.constant 0 : index
    %10 = vector.load %arg11[%c0_19, %c0_20] : memref<32x64xf32, #tpu.memory_space<vmem>>, vector<32x64xf32>
    %c0_21 = arith.constant 0 : index
    %c0_22 = arith.constant 0 : index
    %11 = vector.load %arg12[%c0_21, %c0_22] : memref<32x1xf32, #tpu.memory_space<vmem>>, vector<32x1xf32>
    %c0_23 = arith.constant 0 : index
    %c0_24 = arith.constant 0 : index
    %12 = vector.load %arg13[%c0_23, %c0_24] : memref<32x1xf32, #tpu.memory_space<vmem>>, vector<32x1xf32>
    %c0_25 = arith.constant 0 : index
    %c0_26 = arith.constant 0 : index
    %13 = vector.load %arg14[%c0_25, %c0_26] : memref<32x1xf32, #tpu.memory_space<vmem>>, vector<32x1xf32>
    %14 = arith.extf %1 : vector<512x512xbf16> to vector<512x512xf32>
    %15 = arith.extf %2 : vector<512x512xbf16> to vector<512x512xf32>
    %cst = arith.constant dense<0.000000e+00> : vector<96x512xf32>
    %16 = tpu.matmul %3, %0, %cst {dimension_numbers = #tpu.dot_dimension_numbers<[1], [0], [0], [1], [0, 0, 1, 1], [], []>} : vector<96x32xf32>, vector<32x512xf32>, vector<96x512xf32> -> vector<96x512xf32>
    %17 = vector.extract_strided_slice %16 {offsets = [0, 0], sizes = [32, 512], strides = [1, 1]} : vector<96x512xf32> to vector<32x512xf32>
    %18 = vector.extract_strided_slice %16 {offsets = [32, 0], sizes = [32, 512], strides = [1, 1]} : vector<96x512xf32> to vector<32x512xf32>
    %19 = vector.extract_strided_slice %16 {offsets = [64, 0], sizes = [32, 512], strides = [1, 1]} : vector<96x512xf32> to vector<32x512xf32>
    %20 = arith.mulf %18, %19 : vector<32x512xf32>
    %21 = tpu.concatenate %20, %18 in 0 : vector<32x512xf32>, vector<32x512xf32> -> vector<64x512xf32>
    %cst_27 = arith.constant dense<0.000000e+00> : vector<64x512xf32>
    %22 = tpu.matmul %21, %14, %cst_27 {dimension_numbers = #tpu.dot_dimension_numbers<[1], [0], [0], [1], [0, 0, 1, 1], [], []>} : vector<64x512xf32>, vector<512x512xf32>, vector<64x512xf32> -> vector<64x512xf32>
    %23 = vector.extract_strided_slice %22 {offsets = [0, 0], sizes = [32, 512], strides = [1, 1]} : vector<64x512xf32> to vector<32x512xf32>
    %24 = arith.mulf %17, %23 : vector<32x512xf32>
    %25 = vector.extract_strided_slice %22 {offsets = [32, 0], sizes = [32, 512], strides = [1, 1]} : vector<64x512xf32> to vector<32x512xf32>
    %26 = arith.mulf %17, %25 : vector<32x512xf32>
    %cst_28 = arith.constant 9.99999997E-7 : f32
    %27 = vector.broadcast %cst_28 : f32 to vector<32x512xf32>
    %28 = arith.addf %26, %27 : vector<32x512xf32>
    %29 = arith.divf %24, %28 : vector<32x512xf32>
    %cst_29 = arith.constant dense<0.000000e+00> : vector<32x512xf32>
    %30 = tpu.matmul %4, %29, %cst_29 {dimension_numbers = #tpu.dot_dimension_numbers<[1], [0], [0], [1], [0, 0, 1, 1], [], []>} : vector<32x32xf32>, vector<32x512xf32>, vector<32x512xf32> -> vector<32x512xf32>
    %31 = arith.addf %0, %30 : vector<32x512xf32>
    %32 = vector.broadcast %5 : vector<32x1xf32> to vector<32x512xf32>
    %33 = arith.addf %31, %32 : vector<32x512xf32>
    %34 = arith.mulf %33, %33 : vector<32x512xf32>
    %35 = tpu.concatenate %33, %34 in 0 : vector<32x512xf32>, vector<32x512xf32> -> vector<64x512xf32>
    %cst_30 = arith.constant dense<0.000000e+00> : vector<64x512xf32>
    %36 = tpu.matmul %35, %15, %cst_30 {dimension_numbers = #tpu.dot_dimension_numbers<[1], [0], [0], [1], [0, 0, 1, 1], [], []>} : vector<64x512xf32>, vector<512x512xf32>, vector<64x512xf32> -> vector<64x512xf32>
    %37 = vector.extract_strided_slice %36 {offsets = [0, 0], sizes = [32, 512], strides = [1, 1]} : vector<64x512xf32> to vector<32x512xf32>
    %38 = vector.extract_strided_slice %36 {offsets = [32, 0], sizes = [32, 512], strides = [1, 1]} : vector<64x512xf32> to vector<32x512xf32>
    %39 = arith.mulf %37, %37 : vector<32x512xf32>
    %40 = arith.subf %38, %39 : vector<32x512xf32>
    %cst_31 = arith.constant 9.99999974E-6 : f32
    %41 = vector.broadcast %cst_31 : f32 to vector<32x512xf32>
    %42 = arith.addf %40, %41 : vector<32x512xf32>
    %43 = math.rsqrt %42 : vector<32x512xf32>
    %44 = vector.broadcast %6 : vector<32x1xf32> to vector<32x512xf32>
    %45 = arith.mulf %44, %43 : vector<32x512xf32>
    %46 = arith.mulf %33, %45 : vector<32x512xf32>
    %47 = arith.mulf %37, %45 : vector<32x512xf32>
    %48 = vector.broadcast %7 : vector<32x1xf32> to vector<32x512xf32>
    %49 = arith.subf %48, %47 : vector<32x512xf32>
    %50 = arith.addf %46, %49 : vector<32x512xf32>
    %cst_32 = arith.constant dense<0.000000e+00> : vector<64x512xf32>
    %51 = tpu.matmul %8, %50, %cst_32 {dimension_numbers = #tpu.dot_dimension_numbers<[1], [0], [0], [1], [0, 0, 1, 1], [], []>} : vector<64x32xf32>, vector<32x512xf32>, vector<64x512xf32> -> vector<64x512xf32>
    %52 = vector.broadcast %9 : vector<64x1xf32> to vector<64x512xf32>
    %53 = arith.addf %51, %52 : vector<64x512xf32>
    %cst_33 = arith.constant 0.000000e+00 : f32
    %54 = vector.broadcast %cst_33 : f32 to vector<64x512xf32>
    %55 = arith.maximumf %53, %54 : vector<64x512xf32>
    %cst_34 = arith.constant dense<0.000000e+00> : vector<32x512xf32>
    %56 = tpu.matmul %10, %55, %cst_34 {dimension_numbers = #tpu.dot_dimension_numbers<[1], [0], [0], [1], [0, 0, 1, 1], [], []>} : vector<32x64xf32>, vector<64x512xf32>, vector<32x512xf32> -> vector<32x512xf32>
    %57 = arith.addf %50, %56 : vector<32x512xf32>
    %58 = vector.broadcast %11 : vector<32x1xf32> to vector<32x512xf32>
    %59 = arith.addf %57, %58 : vector<32x512xf32>
    %60 = arith.mulf %59, %59 : vector<32x512xf32>
    %61 = tpu.concatenate %59, %60 in 0 : vector<32x512xf32>, vector<32x512xf32> -> vector<64x512xf32>
    %cst_35 = arith.constant dense<0.000000e+00> : vector<64x512xf32>
    %62 = tpu.matmul %61, %15, %cst_35 {dimension_numbers = #tpu.dot_dimension_numbers<[1], [0], [0], [1], [0, 0, 1, 1], [], []>} : vector<64x512xf32>, vector<512x512xf32>, vector<64x512xf32> -> vector<64x512xf32>
    %63 = vector.extract_strided_slice %62 {offsets = [0, 0], sizes = [32, 512], strides = [1, 1]} : vector<64x512xf32> to vector<32x512xf32>
    %64 = vector.extract_strided_slice %62 {offsets = [32, 0], sizes = [32, 512], strides = [1, 1]} : vector<64x512xf32> to vector<32x512xf32>
    %65 = arith.mulf %63, %63 : vector<32x512xf32>
    %66 = arith.subf %64, %65 : vector<32x512xf32>
    %cst_36 = arith.constant 9.99999974E-6 : f32
    %67 = vector.broadcast %cst_36 : f32 to vector<32x512xf32>
    %68 = arith.addf %66, %67 : vector<32x512xf32>
    %69 = math.rsqrt %68 : vector<32x512xf32>
    %70 = vector.broadcast %12 : vector<32x1xf32> to vector<32x512xf32>
    %71 = arith.mulf %70, %69 : vector<32x512xf32>
    %72 = arith.mulf %59, %71 : vector<32x512xf32>
    %73 = arith.mulf %63, %71 : vector<32x512xf32>
    %74 = vector.broadcast %13 : vector<32x1xf32> to vector<32x512xf32>
    %75 = arith.subf %74, %73 : vector<32x512xf32>
    %76 = arith.addf %72, %75 : vector<32x512xf32>
    %c0_37 = arith.constant 0 : index
    %c0_38 = arith.constant 0 : index
    %77 = vector.load %arg15[%c0_37, %c0_38] : memref<32x512xf32, #tpu.memory_space<vmem>>, vector<32x512xf32>
    tpu.vector_store %arg15[%c0_37, %c0_38], %76 {strides = array<i32>} : memref<32x512xf32, #tpu.memory_space<vmem>>, vector<32x512xf32>,
    return
  }
  func.func @transform_0(%arg0: i32) -> (i32, i32) {
    %c0_i32 = arith.constant 0 : i32
    %c0_i32_0 = arith.constant 0 : i32
    return %c0_i32, %arg0 : i32, i32
  }
  func.func @transform_1(%arg0: i32) -> (i32, i32) {
    %c0_i32 = arith.constant 0 : i32
    %c0_i32_0 = arith.constant 0 : i32
    return %arg0, %c0_i32 : i32, i32
  }
  func.func @transform_2(%arg0: i32) -> (i32, i32) {
    %c0_i32 = arith.constant 0 : i32
    %c0_i32_0 = arith.constant 0 : i32
    %c0_i32_1 = arith.constant 0 : i32
    return %c0_i32, %c0_i32_0 : i32, i32
  }
  func.func @transform_3(%arg0: i32) -> (i32, i32) {
    %c0_i32 = arith.constant 0 : i32
    %c0_i32_0 = arith.constant 0 : i32
    %c0_i32_1 = arith.constant 0 : i32
    return %c0_i32, %c0_i32_0 : i32, i32
  }
  func.func @transform_4(%arg0: i32) -> (i32, i32) {
    %c0_i32 = arith.constant 0 : i32
    %c0_i32_0 = arith.constant 0 : i32
    %c0_i32_1 = arith.constant 0 : i32
    return %c0_i32, %c0_i32_0 : i32, i32
  }
  func.func @transform_5(%arg0: i32) -> (i32, i32) {
    %c0_i32 = arith.constant 0 : i32
    %c0_i32_0 = arith.constant 0 : i32
    %c0_i32_1 = arith.constant 0 : i32
    return %c0_i32, %c0_i32_0 : i32, i32
  }
  func.func @transform_6(%arg0: i32) -> (i32, i32) {
    %c0_i32 = arith.constant 0 : i32
    %c0_i32_0 = arith.constant 0 : i32
    %c0_i32_1 = arith.constant 0 : i32
    return %c0_i32, %c0_i32_0 : i32, i32
  }
  func.func @transform_7(%arg0: i32) -> (i32, i32) {
    %c0_i32 = arith.constant 0 : i32
    %c0_i32_0 = arith.constant 0 : i32
    %c0_i32_1 = arith.constant 0 : i32
    return %c0_i32, %c0_i32_0 : i32, i32
  }
  func.func @transform_8(%arg0: i32) -> (i32, i32) {
    %c0_i32 = arith.constant 0 : i32
    %c0_i32_0 = arith.constant 0 : i32
    %c0_i32_1 = arith.constant 0 : i32
    return %c0_i32, %c0_i32_0 : i32, i32
  }
  func.func @transform_9(%arg0: i32) -> (i32, i32) {
    %c0_i32 = arith.constant 0 : i32
    %c0_i32_0 = arith.constant 0 : i32
    %c0_i32_1 = arith.constant 0 : i32
    return %c0_i32, %c0_i32_0 : i32, i32
  }
  func.func @transform_10(%arg0: i32) -> (i32, i32) {
    %c0_i32 = arith.constant 0 : i32
    %c0_i32_0 = arith.constant 0 : i32
    %c0_i32_1 = arith.constant 0 : i32
    return %c0_i32, %c0_i32_0 : i32, i32
  }
  func.func @transform_11(%arg0: i32) -> (i32, i32) {
    %c0_i32 = arith.constant 0 : i32
    %c0_i32_0 = arith.constant 0 : i32
    %c0_i32_1 = arith.constant 0 : i32
    return %c0_i32, %c0_i32_0 : i32, i32
  }
  func.func @transform_12(%arg0: i32) -> (i32, i32) {
    %c0_i32 = arith.constant 0 : i32
    %c0_i32_0 = arith.constant 0 : i32
    %c0_i32_1 = arith.constant 0 : i32
    return %c0_i32, %c0_i32_0 : i32, i32
  }
  func.func @transform_13(%arg0: i32) -> (i32, i32) {
    %c0_i32 = arith.constant 0 : i32
    %c0_i32_0 = arith.constant 0 : i32
    %c0_i32_1 = arith.constant 0 : i32
    return %c0_i32, %c0_i32_0 : i32, i32
  }
  func.func @transform_14(%arg0: i32) -> (i32, i32) {
    %c0_i32 = arith.constant 0 : i32
    %c0_i32_0 = arith.constant 0 : i32
    return %c0_i32, %arg0 : i32, i32
  }
}

</mosaic_0001>

<llo_original>
// kernel: _lambda_.1
$region0: #{_lambda_.1}
  #allocation0 [shape = 'u32[]', space=smem, size = 0x4, offset = 0x4, fixed_abs, tag = 'smem constant byte address 0x4 - core index']
  #allocation1 [shape = 'u32[144,128]{1,0:T(1,128)}', space=vmem, size = 0x12000, scoped, tag = 'internal scratch']
  %s0 = inlined_call_operand.vmem [shape: f32[32,1024], index: 0, kind: input, shape index: {}]
  %s1 = inlined_call_operand.vmem [shape: bf16[1024,512], index: 1, kind: input, shape index: {}]
  %s2 = inlined_call_operand.vmem [shape: bf16[512,512], index: 2, kind: input, shape index: {}]
  %s3 = inlined_call_operand.vmem [shape: f32[96,32], index: 3, kind: input, shape index: {}]
  %s4 = inlined_call_operand.vmem [shape: f32[32,32], index: 4, kind: input, shape index: {}]
  %s5 = inlined_call_operand.vmem [shape: f32[32,1], index: 5, kind: input, shape index: {}]
  %s6 = inlined_call_operand.vmem [shape: f32[32,1], index: 6, kind: input, shape index: {}, may-alias: {6,12}]
  %s7 = inlined_call_operand.vmem [shape: f32[32,1], index: 7, kind: input, shape index: {}, may-alias: {7,13}]
  %s8 = inlined_call_operand.vmem [shape: f32[64,32], index: 8, kind: input, shape index: {}]
  %s9 = inlined_call_operand.vmem [shape: f32[64,1], index: 9, kind: input, shape index: {}]
  %s10 = inlined_call_operand.vmem [shape: f32[32,64], index: 10, kind: input, shape index: {}]
  %s11 = inlined_call_operand.vmem [shape: f32[32,1], index: 11, kind: input, shape index: {}]
  %s12 = inlined_call_operand.vmem [shape: f32[32,1], index: 12, kind: input, shape index: {}, may-alias: {6,12}]
  %s13 = inlined_call_operand.vmem [shape: f32[32,1], index: 13, kind: input, shape index: {}, may-alias: {7,13}]
  %s14 = inlined_call_operand.vmem [shape: f32[32,1024], index: 14, kind: output, shape index: {}]
  %s15 = sld [smem:[#allocation0]]
  $region131: #{_lambda_.1} parent=0
    _
  %s17 = ssub.s32 1, %s15
  %s18 = scalar_select 0, %s17, %s15
  $region1: #{_lambda_.1} parent=0
    #allocation2 [shape = 'u8[131072]{0}', space=vmem, size = 0x20000, scoped, tag = 'input window, operand 0']
    #allocation3 [shape = 'u8[131072]{0}', space=vmem, size = 0x20000, scoped, tag = 'output window, operand 0']
    loop: start=0, step=1, limit=4
    $region2: #{_lambda_.1} parent=1 // loop_pre_header
      _
    $region3: #{_lambda_.1} parent=1 // loop_header
      %s20 = sphi 0, %s24
      %p21 = scmp.ge.s32.totalorder %s20, 4
      %s30 = sphi 0, %s32
      %s33 = sphi 0, %s30
      %s34 = sphi 0, %s33
      %s50 = sphi 0, %s34
      %s56 = sphi 0, %s58
      %s59 = sphi 0, %s56
      %s60 = sphi 0, %s59
      %s76 = sphi 0, %s60
      %s80 = sphi 0, %s80
      %s82 = sphi 0, %s80
      %s83 = sphi 0, %s82
      %s97 = sphi 0, %s83
      %s101 = sphi 0, %s101
      %s103 = sphi 0, %s101
      %s104 = sphi 0, %s103
      %s118 = sphi 0, %s104
      %s122 = sphi 0, %s122
      %s124 = sphi 0, %s122
      %s125 = sphi 0, %s124
      %s139 = sphi 0, %s125
      %s143 = sphi 0, %s143
      %s145 = sphi 0, %s143
      %s146 = sphi 0, %s145
      %s160 = sphi 0, %s146
      %s164 = sphi 0, %s164
      %s166 = sphi 0, %s164
      %s167 = sphi 0, %s166
      %s181 = sphi 0, %s167
      %s185 = sphi 0, %s185
      %s187 = sphi 0, %s185
      %s188 = sphi 0, %s187
      %s202 = sphi 0, %s188
      %s206 = sphi 0, %s206
      %s208 = sphi 0, %s206
      %s209 = sphi 0, %s208
      %s223 = sphi 0, %s209
      %s227 = sphi 0, %s227
      %s229 = sphi 0, %s227
      %s230 = sphi 0, %s229
      %s244 = sphi 0, %s230
      %s248 = sphi 0, %s248
      %s250 = sphi 0, %s248
      %s251 = sphi 0, %s250
      %s265 = sphi 0, %s251
      %s269 = sphi 0, %s269
      %s271 = sphi 0, %s269
      %s272 = sphi 0, %s271
      %s286 = sphi 0, %s272
      %s290 = sphi 0, %s290
      %s292 = sphi 0, %s290
      %s293 = sphi 0, %s292
      %s307 = sphi 0, %s293
      %s311 = sphi 0, %s311
      %s313 = sphi 0, %s311
      %s314 = sphi 0, %s313
      %s328 = sphi 0, %s314
      %s334 = sphi 0, %s336
      %s337 = sphi 0, %s334
      %s338 = sphi 0, %s337
      %s354 = sphi 0, %s338
    $region4: #{_lambda_.1} parent=1 // loop_header_branch
      %23 = sbr.rel (%p21) target = $region8
    $region5: #{_lambda_.1} parent=1 // loop_body
      %s25 = ssub.s32 %s20, 1
      %s26 = ssub.s32 %s20, 2
      %s27 = sadd.s32 %s20, 1
      %s28 = ssub.s32 %s20, %s27
      %p29 = scmp.eq.s32.totalorder %s28, 0
      %s31 = sadd.s32 %s30, 1
      %s32 = scalar_select %p29, %s30, %s31
      %p35 = pneg %p29
      %p36 = scmp.eq.s32.totalorder %s20, 1
      %p37 = por %p35, %p36
      %p38 = scmp.ne.s32.totalorder %s30, %s33
      %p39 = scmp.eq.s32.totalorder %s20, 0
      %p40 = por %p38, %p39
      %p41 = scmp.ne.s32.totalorder %s30, %s33
      %p42 = scmp.eq.s32.totalorder %s25, 1
      %p43 = por %p41, %p42
      %p44 = scmp.ne.s32.totalorder %s33, %s34
      %p45 = scmp.eq.s32.totalorder %s25, 0
      %p46 = por %p44, %p45
      %p47 = scmp.ne.s32.totalorder %s33, %s34
      %p48 = scmp.eq.s32.totalorder %s26, 1
      %p49 = por %p47, %p48
      %p51 = scmp.ne.s32.totalorder %s34, %s50
      %p52 = scmp.eq.s32.totalorder %s26, 0
      %p53 = por %p51, %p52
      %s54 = ssub.s32 %s20, %s27
      %p55 = scmp.eq.s32.totalorder %s54, 0
      %s57 = sadd.s32 %s56, 1
      %s58 = scalar_select %p55, %s56, %s57
      %p61 = pneg %p55
      %p62 = scmp.eq.s32.totalorder %s20, 1
      %p63 = por %p61, %p62
      %p64 = scmp.ne.s32.totalorder %s56, %s59
      %p65 = scmp.eq.s32.totalorder %s20, 0
      %p66 = por %p64, %p65
      %p67 = scmp.ne.s32.totalorder %s56, %s59
      %p68 = scmp.eq.s32.totalorder %s25, 1
      %p69 = por %p67, %p68
      %p70 = scmp.ne.s32.totalorder %s59, %s60
      %p71 = scmp.eq.s32.totalorder %s25, 0
      %p72 = por %p70, %p71
      %p73 = scmp.ne.s32.totalorder %s59, %s60
      %p74 = scmp.eq.s32.totalorder %s26, 1
      %p75 = por %p73, %p74
      %p77 = scmp.ne.s32.totalorder %s60, %s76
      %p78 = scmp.eq.s32.totalorder %s26, 0
      %p79 = por %p77, %p78
      %s81 = sadd.s32 %s80, 1
      %p84 = scmp.eq.s32.totalorder %s20, 1
      %p85 = scmp.ne.s32.totalorder %s80, %s82
      %p86 = scmp.eq.s32.totalorder %s20, 0
      %p87 = por %p85, %p86
      %p88 = scmp.ne.s32.totalorder %s80, %s82
      %p89 = scmp.eq.s32.totalorder %s25, 1
      %p90 = por %p88, %p89
      %p91 = scmp.ne.s32.totalorder %s82, %s83
      %p92 = scmp.eq.s32.totalorder %s25, 0
      %p93 = por %p91, %p92
      %p94 = scmp.ne.s32.totalorder %s82, %s83
      %p95 = scmp.eq.s32.totalorder %s26, 1
      %p96 = por %p94, %p95
      %p98 = scmp.ne.s32.totalorder %s83, %s97
      %p99 = scmp.eq.s32.totalorder %s26, 0
      %p100 = por %p98, %p99
      %s102 = sadd.s32 %s101, 1
      %p105 = scmp.eq.s32.totalorder %s20, 1
      %p106 = scmp.ne.s32.totalorder %s101, %s103
      %p107 = scmp.eq.s32.totalorder %s20, 0
      %p108 = por %p106, %p107
      %p109 = scmp.ne.s32.totalorder %s101, %s103
      %p110 = scmp.eq.s32.totalorder %s25, 1
      %p111 = por %p109, %p110
      %p112 = scmp.ne.s32.totalorder %s103, %s104
      %p113 = scmp.eq.s32.totalorder %s25, 0
      %p114 = por %p112, %p113
      %p115 = scmp.ne.s32.totalorder %s103, %s104
      %p116 = scmp.eq.s32.totalorder %s26, 1
      %p117 = por %p115, %p116
      %p119 = scmp.ne.s32.totalorder %s104, %s118
      %p120 = scmp.eq.s32.totalorder %s26, 0
      %p121 = por %p119, %p120
      %s123 = sadd.s32 %s122, 1
      %p126 = scmp.eq.s32.totalorder %s20, 1
      %p127 = scmp.ne.s32.totalorder %s122, %s124
      %p128 = scmp.eq.s32.totalorder %s20, 0
      %p129 = por %p127, %p128
      %p130 = scmp.ne.s32.totalorder %s122, %s124
      %p131 = scmp.eq.s32.totalorder %s25, 1
      %p132 = por %p130, %p131
      %p133 = scmp.ne.s32.totalorder %s124, %s125
      %p134 = scmp.eq.s32.totalorder %s25, 0
      %p135 = por %p133, %p134
      %p136 = scmp.ne.s32.totalorder %s124, %s125
      %p137 = scmp.eq.s32.totalorder %s26, 1
      %p138 = por %p136, %p137
      %p140 = scmp.ne.s32.totalorder %s125, %s139
      %p141 = scmp.eq.s32.totalorder %s26, 0
      %p142 = por %p140, %p141
      %s144 = sadd.s32 %s143, 1
      %p147 = scmp.eq.s32.totalorder %s20, 1
      %p148 = scmp.ne.s32.totalorder %s143, %s145
      %p149 = scmp.eq.s32.totalorder %s20, 0
      %p150 = por %p148, %p149
      %p151 = scmp.ne.s32.totalorder %s143, %s145
      %p152 = scmp.eq.s32.totalorder %s25, 1
      %p153 = por %p151, %p152
      %p154 = scmp.ne.s32.totalorder %s145, %s146
      %p155 = scmp.eq.s32.totalorder %s25, 0
      %p156 = por %p154, %p155
      %p157 = scmp.ne.s32.totalorder %s145, %s146
      %p158 = scmp.eq.s32.totalorder %s26, 1
      %p159 = por %p157, %p158
      %p161 = scmp.ne.s32.totalorder %s146, %s160
      %p162 = scmp.eq.s32.totalorder %s26, 0
      %p163 = por %p161, %p162
      %s165 = sadd.s32 %s164, 1
      %p168 = scmp.eq.s32.totalorder %s20, 1
      %p169 = scmp.ne.s32.totalorder %s164, %s166
      %p170 = scmp.eq.s32.totalorder %s20, 0
      %p171 = por %p169, %p170
      %p172 = scmp.ne.s32.totalorder %s164, %s166
      %p173 = scmp.eq.s32.totalorder %s25, 1
      %p174 = por %p172, %p173
      %p175 = scmp.ne.s32.totalorder %s166, %s167
      %p176 = scmp.eq.s32.totalorder %s25, 0
      %p177 = por %p175, %p176
      %p178 = scmp.ne.s32.totalorder %s166, %s167
      %p179 = scmp.eq.s32.totalorder %s26, 1
      %p180 = por %p178, %p179
      %p182 = scmp.ne.s32.totalorder %s167, %s181
      %p183 = scmp.eq.s32.totalorder %s26, 0
      %p184 = por %p182, %p183
      %s186 = sadd.s32 %s185, 1
      %p189 = scmp.eq.s32.totalorder %s20, 1
      %p190 = scmp.ne.s32.totalorder %s185, %s187
      %p191 = scmp.eq.s32.totalorder %s20, 0
      %p192 = por %p190, %p191
      %p193 = scmp.ne.s32.totalorder %s185, %s187
      %p194 = scmp.eq.s32.totalorder %s25, 1
      %p195 = por %p193, %p194
      %p196 = scmp.ne.s32.totalorder %s187, %s188
      %p197 = scmp.eq.s32.totalorder %s25, 0
      %p198 = por %p196, %p197
      %p199 = scmp.ne.s32.totalorder %s187, %s188
      %p200 = scmp.eq.s32.totalorder %s26, 1
      %p201 = por %p199, %p200
      %p203 = scmp.ne.s32.totalorder %s188, %s202
      %p204 = scmp.eq.s32.totalorder %s26, 0
      %p205 = por %p203, %p204
      %s207 = sadd.s32 %s206, 1
      %p210 = scmp.eq.s32.totalorder %s20, 1
      %p211 = scmp.ne.s32.totalorder %s206, %s208
      %p212 = scmp.eq.s32.totalorder %s20, 0
      %p213 = por %p211, %p212
      %p214 = scmp.ne.s32.totalorder %s206, %s208
      %p215 = scmp.eq.s32.totalorder %s25, 1
      %p216 = por %p214, %p215
      %p217 = scmp.ne.s32.totalorder %s208, %s209
      %p218 = scmp.eq.s32.totalorder %s25, 0
      %p219 = por %p217, %p218
      %p220 = scmp.ne.s32.totalorder %s208, %s209
      %p221 = scmp.eq.s32.totalorder %s26, 1
      %p222 = por %p220, %p221
      %p224 = scmp.ne.s32.totalorder %s209, %s223
      %p225 = scmp.eq.s32.totalorder %s26, 0
      %p226 = por %p224, %p225
      %s228 = sadd.s32 %s227, 1
      %p231 = scmp.eq.s32.totalorder %s20, 1
      %p232 = scmp.ne.s32.totalorder %s227, %s229
      %p233 = scmp.eq.s32.totalorder %s20, 0
      %p234 = por %p232, %p233
      %p235 = scmp.ne.s32.totalorder %s227, %s229
      %p236 = scmp.eq.s32.totalorder %s25, 1
      %p237 = por %p235, %p236
      %p238 = scmp.ne.s32.totalorder %s229, %s230
      %p239 = scmp.eq.s32.totalorder %s25, 0
      %p240 = por %p238, %p239
      %p241 = scmp.ne.s32.totalorder %s229, %s230
      %p242 = scmp.eq.s32.totalorder %s26, 1
      %p243 = por %p241, %p242
      %p245 = scmp.ne.s32.totalorder %s230, %s244
      %p246 = scmp.eq.s32.totalorder %s26, 0
      %p247 = por %p245, %p246
      %s249 = sadd.s32 %s248, 1
      %p252 = scmp.eq.s32.totalorder %s20, 1
      %p253 = scmp.ne.s32.totalorder %s248, %s250
      %p254 = scmp.eq.s32.totalorder %s20, 0
      %p255 = por %p253, %p254
      %p256 = scmp.ne.s32.totalorder %s248, %s250
      %p257 = scmp.eq.s32.totalorder %s25, 1
      %p258 = por %p256, %p257
      %p259 = scmp.ne.s32.totalorder %s250, %s251
      %p260 = scmp.eq.s32.totalorder %s25, 0
      %p261 = por %p259, %p260
      %p262 = scmp.ne.s32.totalorder %s250, %s251
      %p263 = scmp.eq.s32.totalorder %s26, 1
      %p264 = por %p262, %p263
      %p266 = scmp.ne.s32.totalorder %s251, %s265
      %p267 = scmp.eq.s32.totalorder %s26, 0
      %p268 = por %p266, %p267
      %s270 = sadd.s32 %s269, 1
      %p273 = scmp.eq.s32.totalorder %s20, 1
      %p274 = scmp.ne.s32.totalorder %s269, %s271
      %p275 = scmp.eq.s32.totalorder %s20, 0
      %p276 = por %p274, %p275
      %p277 = scmp.ne.s32.totalorder %s269, %s271
      %p278 = scmp.eq.s32.totalorder %s25, 1
      %p279 = por %p277, %p278
      %p280 = scmp.ne.s32.totalorder %s271, %s272
      %p281 = scmp.eq.s32.totalorder %s25, 0
      %p282 = por %p280, %p281
      %p283 = scmp.ne.s32.totalorder %s271, %s272
      %p284 = scmp.eq.s32.totalorder %s26, 1
      %p285 = por %p283, %p284
      %p287 = scmp.ne.s32.totalorder %s272, %s286
      %p288 = scmp.eq.s32.totalorder %s26, 0
      %p289 = por %p287, %p288
      %s291 = sadd.s32 %s290, 1
      %p294 = scmp.eq.s32.totalorder %s20, 1
      %p295 = scmp.ne.s32.totalorder %s290, %s292
      %p296 = scmp.eq.s32.totalorder %s20, 0
      %p297 = por %p295, %p296
      %p298 = scmp.ne.s32.totalorder %s290, %s292
      %p299 = scmp.eq.s32.totalorder %s25, 1
      %p300 = por %p298, %p299
      %p301 = scmp.ne.s32.totalorder %s292, %s293
      %p302 = scmp.eq.s32.totalorder %s25, 0
      %p303 = por %p301, %p302
      %p304 = scmp.ne.s32.totalorder %s292, %s293
      %p305 = scmp.eq.s32.totalorder %s26, 1
      %p306 = por %p304, %p305
      %p308 = scmp.ne.s32.totalorder %s293, %s307
      %p309 = scmp.eq.s32.totalorder %s26, 0
      %p310 = por %p308, %p309
      %s312 = sadd.s32 %s311, 1
      %p315 = scmp.eq.s32.totalorder %s20, 1
      %p316 = scmp.ne.s32.totalorder %s311, %s313
      %p317 = scmp.eq.s32.totalorder %s20, 0
      %p318 = por %p316, %p317
      %p319 = scmp.ne.s32.totalorder %s311, %s313
      %p320 = scmp.eq.s32.totalorder %s25, 1
      %p321 = por %p319, %p320
      %p322 = scmp.ne.s32.totalorder %s313, %s314
      %p323 = scmp.eq.s32.totalorder %s25, 0
      %p324 = por %p322, %p323
      %p325 = scmp.ne.s32.totalorder %s313, %s314
      %p326 = scmp.eq.s32.totalorder %s26, 1
      %p327 = por %p325, %p326
      %p329 = scmp.ne.s32.totalorder %s314, %s328
      %p330 = scmp.eq.s32.totalorder %s26, 0
      %p331 = por %p329, %p330
      %s332 = ssub.s32 %s20, %s27
      %p333 = scmp.eq.s32.totalorder %s332, 0
      %s335 = sadd.s32 %s334, 1
      %s336 = scalar_select %p333, %s334, %s335
      %p339 = pneg %p333
      %p340 = scmp.eq.s32.totalorder %s20, 1
      %p341 = por %p339, %p340
      %p342 = scmp.ne.s32.totalorder %s334, %s337
      %p343 = scmp.eq.s32.totalorder %s20, 0
      %p344 = por %p342, %p343
      %p345 = scmp.ne.s32.totalorder %s334, %s337
      %p346 = scmp.eq.s32.totalorder %s25, 1
      %p347 = por %p345, %p346
      %p348 = scmp.ne.s32.totalorder %s337, %s338
      %p349 = scmp.eq.s32.totalorder %s25, 0
      %p350 = por %p348, %p349
      %p351 = scmp.ne.s32.totalorder %s337, %s338
      %p352 = scmp.eq.s32.totalorder %s26, 1
      %p353 = por %p351, %p352
      %p355 = scmp.ne.s32.totalorder %s338, %s354
      %p356 = scmp.eq.s32.totalorder %s26, 0
      %p357 = por %p355, %p356
      %p358 = scmp.le.s32.totalorder 1, %s20
      %p359 = scmp.lt.s32.totalorder %s20, 3
      %p360 = pnand %p358, %p359
      %p361 = pneg %p360
      // Predicated region
      $region9: #{_lambda_.1} parent=5 // pred_check
        _
      $region10: #{_lambda_.1} parent=5 // pred_check_branch
        %363 = sbr.rel (%p360) target = $region12
      $region11: #{_lambda_.1} parent=5 // pred_region
        %s364 = ssub.s32 %s20, 1
        // Predicated region
        $region13: #{_lambda_.1} parent=11 // pred_check
          %p365 = pneg %p93
        $region14: #{_lambda_.1} parent=11 // pred_check_branch
          %367 = sbr.rel (%p365) target = $region16
        $region15: #{_lambda_.1} parent=11 // pred_region
          _
        $region16: #{_lambda_.1} parent=11 // pred_fallthru
          _
        // Predicated region
        $region17: #{_lambda_.1} parent=11 // pred_check
          %p368 = pneg %p114
        $region18: #{_lambda_.1} parent=11 // pred_check_branch
          %370 = sbr.rel (%p368) target = $region20
        $region19: #{_lambda_.1} parent=11 // pred_region
          _
        $region20: #{_lambda_.1} parent=11 // pred_fallthru
          _
        // Predicated region
        $region21: #{_lambda_.1} parent=11 // pred_check
          %p371 = pneg %p135
        $region22: #{_lambda_.1} parent=11 // pred_check_branch
          %373 = sbr.rel (%p371) target = $region24
        $region23: #{_lambda_.1} parent=11 // pred_region
          _
        $region24: #{_lambda_.1} parent=11 // pred_fallthru
          _
        // Predicated region
        $region25: #{_lambda_.1} parent=11 // pred_check
          %p374 = pneg %p156
        $region26: #{_lambda_.1} parent=11 // pred_check_branch
          %376 = sbr.rel (%p374) target = $region28
        $region27: #{_lambda_.1} parent=11 // pred_region
          _
        $region28: #{_lambda_.1} parent=11 // pred_fallthru
          _
        // Predicated region
        $region29: #{_lambda_.1} parent=11 // pred_check
          %p377 = pneg %p177
        $region30: #{_lambda_.1} parent=11 // pred_check_branch
          %379 = sbr.rel (%p377) target = $region32
        $region31: #{_lambda_.1} parent=11 // pred_region
          _
        $region32: #{_lambda_.1} parent=11 // pred_fallthru
          _
        // Predicated region
        $region33: #{_lambda_.1} parent=11 // pred_check
          %p380 = pneg %p198
        $region34: #{_lambda_.1} parent=11 // pred_check_branch
          %382 = sbr.rel (%p380) target = $region36
        $region35: #{_lambda_.1} parent=11 // pred_region
          _
        $region36: #{_lambda_.1} parent=11 // pred_fallthru
          _
        // Predicated region
        $region37: #{_lambda_.1} parent=11 // pred_check
          %p383 = pneg %p219
        $region38: #{_lambda_.1} parent=11 // pred_check_branch
          %385 = sbr.rel (%p383) target = $region40
        $region39: #{_lambda_.1} parent=11 // pred_region
          _
        $region40: #{_lambda_.1} parent=11 // pred_fallthru
          _
        // Predicated region
        $region41: #{_lambda_.1} parent=11 // pred_check
          %p386 = pneg %p240
        $region42: #{_lambda_.1} parent=11 // pred_check_branch
          %388 = sbr.rel (%p386) target = $region44
        $region43: #{_lambda_.1} parent=11 // pred_region
          _
        $region44: #{_lambda_.1} parent=11 // pred_fallthru
          _
        // Predicated region
        $region45: #{_lambda_.1} parent=11 // pred_check
          %p389 = pneg %p261
        $region46: #{_lambda_.1} parent=11 // pred_check_branch
          %391 = sbr.rel (%p389) target = $region48
        $region47: #{_lambda_.1} parent=11 // pred_region
          _
        $region48: #{_lambda_.1} parent=11 // pred_fallthru
          _
        // Predicated region
        $region49: #{_lambda_.1} parent=11 // pred_check
          %p392 = pneg %p282
        $region50: #{_lambda_.1} parent=11 // pred_check_branch
          %394 = sbr.rel (%p392) target = $region52
        $region51: #{_lambda_.1} parent=11 // pred_region
          _
        $region52: #{_lambda_.1} parent=11 // pred_fallthru
          _
        // Predicated region
        $region53: #{_lambda_.1} parent=11 // pred_check
          %p395 = pneg %p303
        $region54: #{_lambda_.1} parent=11 // pred_check_branch
          %397 = sbr.rel (%p395) target = $region56
        $region55: #{_lambda_.1} parent=11 // pred_region
          _
        $region56: #{_lambda_.1} parent=11 // pred_fallthru
          _
        // Predicated region
        $region57: #{_lambda_.1} parent=11 // pred_check
          %p398 = pneg %p324
        $region58: #{_lambda_.1} parent=11 // pred_check_branch
          %400 = sbr.rel (%p398) target = $region60
        $region59: #{_lambda_.1} parent=11 // pred_region
          _
        $region60: #{_lambda_.1} parent=11 // pred_fallthru
          _
      $region12: #{_lambda_.1} parent=5 // pred_fallthru
        _
      %p401 = scmp.lt.s32.totalorder %s20, 2
      // Predicated region
      $region61: #{_lambda_.1} parent=5 // pred_check
        %p402 = pneg %p401
      $region62: #{_lambda_.1} parent=5 // pred_check_branch
        %404 = sbr.rel (%p402) target = $region64
      $region63: #{_lambda_.1} parent=5 // pred_region
        // Predicated region
        $region65: #{_lambda_.1} parent=63 // pred_check
          %p405 = pneg %p40
        $region66: #{_lambda_.1} parent=63 // pred_check_branch
          %407 = sbr.rel (%p405) target = $region68
        $region67: #{_lambda_.1} parent=63 // pred_region
          %s408 = sand.u32 %s30, 1
          %s409 = sand.u32 %s30, 1
          %s410 = smul.addr %s409, 128
          %s411 = scalar_lea.vmem [#allocation2], %s410
          %s412 = smul.u32 4, %s20
          %s413 = smul.addr %s412, 8
          %s414 = scalar_lea.vmem %s0, %s413
          // Predicated region
          $region69: #{_lambda_.1} parent=67 // pred_check
            _
          $region70: #{_lambda_.1} parent=67 // pred_check_branch
            %416 = sbr.rel (0) target = $region72
          $region71: #{_lambda_.1} parent=67 // pred_region
            // Predicated region
            $region73: #{_lambda_.1} parent=71 // pred_check
              _
            $region74: #{_lambda_.1} parent=71 // pred_check_branch
              %418 = sbr.rel (0) target = $region76
            $region75: #{_lambda_.1} parent=71 // pred_region
              loop: start=0, step=1, limit=1
              $region77: #{_lambda_.1} parent=75 // loop_pre_header
                _
              $region78: #{_lambda_.1} parent=75 // loop_header
                %s420 = sphi 0, %s424
                %p421 = scmp.ge.s32.totalorder %s420, 1
                %s425 = sphi %s414, %s414
                %s426 = sphi %s411, %s411
              $region79: #{_lambda_.1} parent=75 // loop_header_branch
                %423 = sbr.rel (%p421) target = $region83
              $region80: #{_lambda_.1} parent=75 // loop_body
                %v427 = vld [vmem:[%s425] sm:$0xff]
                %428 = vst [vmem:[%s426] sm:$0xff] %v427
                %v429 = vld [vmem:[%s425 + $0x8] sm:$0xff]
                %430 = vst [vmem:[%s426 + $0x8] sm:$0xff] %v429
                %v431 = vld [vmem:[%s425 + $0x10] sm:$0xff]
                %432 = vst [vmem:[%s426 + $0x10] sm:$0xff] %v431
                %v433 = vld [vmem:[%s425 + $0x18] sm:$0xff]
                %434 = vst [vmem:[%s426 + $0x18] sm:$0xff] %v433
                %v435 = vld [vmem:[%s425 + $0x40] sm:$0xff]
                %436 = vst [vmem:[%s426 + $0x20] sm:$0xff] %v435
                %v437 = vld [vmem:[%s425 + $0x48] sm:$0xff]
                %438 = vst [vmem:[%s426 + $0x28] sm:$0xff] %v437
                %v439 = vld [vmem:[%s425 + $0x50] sm:$0xff]
                %440 = vst [vmem:[%s426 + $0x30] sm:$0xff] %v439
                %v441 = vld [vmem:[%s425 + $0x58] sm:$0xff]
                %442 = vst [vmem:[%s426 + $0x38] sm:$0xff] %v441
                %v443 = vld [vmem:[%s425 + $0x80] sm:$0xff]
                %444 = vst [vmem:[%s426 + $0x40] sm:$0xff] %v443
                %v445 = vld [vmem:[%s425 + $0x88] sm:$0xff]
                %446 = vst [vmem:[%s426 + $0x48] sm:$0xff] %v445
                %v447 = vld [vmem:[%s425 + $0x90] sm:$0xff]
                %448 = vst [vmem:[%s426 + $0x50] sm:$0xff] %v447
                %v449 = vld [vmem:[%s425 + $0x98] sm:$0xff]
                %450 = vst [vmem:[%s426 + $0x58] sm:$0xff] %v449
                %v451 = vld [vmem:[%s425 + $0xc0] sm:$0xff]
                %452 = vst [vmem:[%s426 + $0x60] sm:$0xff] %v451
                %v453 = vld [vmem:[%s425 + $0xc8] sm:$0xff]
                %454 = vst [vmem:[%s426 + $0x68] sm:$0xff] %v453
                %v455 = vld [vmem:[%s425 + $0xd0] sm:$0xff]
                %456 = vst [vmem:[%s426 + $0x70] sm:$0xff] %v455
                %v457 = vld [vmem:[%s425 + $0xd8] sm:$0xff]
                %458 = vst [vmem:[%s426 + $0x78] sm:$0xff] %v457
              $region81: #{_lambda_.1} parent=75 // loop_footer
                %s424 = sadd.s32 1, %s420
              $region82: #{_lambda_.1} parent=75 // loop_footer_branch
                %419 = sbr.rel target = $region78
              $region83: #{_lambda_.1} parent=75 // loop_exit
                _
            $region76: #{_lambda_.1} parent=71 // pred_fallthru
              _
            // Predicated region
            $region84: #{_lambda_.1} parent=71 // pred_check
              _
            $region85: #{_lambda_.1} parent=71 // pred_check_branch
              %460 = sbr.rel target = $region87
            $region86: #{_lambda_.1} parent=71 // pred_region
              _
            $region87: #{_lambda_.1} parent=71 // pred_fallthru
              _
          $region72: #{_lambda_.1} parent=67 // pred_fallthru
            _
          %461 = vnop
        $region68: #{_lambda_.1} parent=63 // pred_fallthru
          _
        // Predicated region
        $region88: #{_lambda_.1} parent=63 // pred_check
          %p462 = pneg %p66
        $region89: #{_lambda_.1} parent=63 // pred_check_branch
          %464 = sbr.rel (%p462) target = $region91
        $region90: #{_lambda_.1} parent=63 // pred_region
          %s465 = smul.u32 64, %s20
          %p466 = scmp.lt.s32.totalorder %s465, 127
          %s467 = scalar_select %p466, %s465, 127
          %s468 = smul.addr %s467, 4
          %s469 = smul.addr %s468, 4
          %s470 = scalar_lea.vmem %s1, %s469
          %s471 = smul.u32 64, %s20
        $region91: #{_lambda_.1} parent=63 // pred_fallthru
          _
      $region64: #{_lambda_.1} parent=5 // pred_fallthru
        _
      %p472 = scmp.le.s32.totalorder 1, %s20
      %p473 = scmp.lt.s32.totalorder %s20, 3
      %p474 = pnand %p472, %p473
      %p475 = pneg %p474
      // Predicated region
      $region92: #{_lambda_.1} parent=5 // pred_check
        _
      $region93: #{_lambda_.1} parent=5 // pred_check_branch
        %477 = sbr.rel (%p474) target = $region95
      $region94: #{_lambda_.1} parent=5 // pred_region
        %s478 = ssub.s32 %s20, 1
        %s479 = sand.u32 %s33, 1
        %s480 = sand.u32 %s33, 1
        %s481 = smul.addr %s480, 128
        %s482 = scalar_lea.vmem [#allocation2], %s481
        // Predicated region
        $region96: #{_lambda_.1} parent=94 // pred_check
          %p483 = pneg %p46
        $region97: #{_lambda_.1} parent=94 // pred_check_branch
          %485 = sbr.rel (%p483) target = $region99
        $region98: #{_lambda_.1} parent=94 // pred_region
          _
        $region99: #{_lambda_.1} parent=94 // pred_fallthru
          _
        %s486 = sand.u32 %s33, 1
        %s487 = sand.u32 %s33, 1
        %s488 = smul.addr %s487, 128
        %s489 = scalar_lea.vmem [#allocation2], %s488
        %p490 = pneg %p46
        %p491 = pneg %p43
        %s492 = smul.u32 64, %s25
        %p493 = scmp.lt.s32.totalorder %s492, 127
        %s494 = scalar_select %p493, %s492, 127
        %s495 = smul.addr %s494, 4
        %s496 = smul.addr %s495, 4
        %s497 = scalar_lea.vmem %s1, %s496
        %p498 = pneg %p72
        %p499 = pneg %p69
        %p500 = pneg %p93
        %p501 = pneg %p90
        %p502 = pneg %p114
        %p503 = pneg %p111
        %p504 = pneg %p135
        %p505 = pneg %p132
        %p506 = pneg %p156
        %p507 = pneg %p153
        %p508 = pneg %p177
        %p509 = pneg %p174
        %p510 = pneg %p198
        %p511 = pneg %p195
        %p512 = pneg %p219
        %p513 = pneg %p216
        %p514 = pneg %p240
        %p515 = pneg %p237
        %p516 = pneg %p261
        %p517 = pneg %p258
        %p518 = pneg %p282
        %p519 = pneg %p279
        %p520 = pneg %p303
        %p521 = pneg %p300
        %p522 = pneg %p324
        %p523 = pneg %p321
        %p524 = pneg %p350
        %p525 = pneg %p347
        %s526 = sand.u32 %s337, 1
        %s527 = sand.u32 %s337, 1
        %s528 = smul.addr %s527, 128
        %s529 = scalar_lea.vmem [#allocation3], %s528
        %s530 = smul.u32 4, %s25
        %s531 = smul.u32 64, %s25
        %p532 = scmp.lt.s32.totalorder %s531, 127
        %s533 = scalar_select %p532, %s531, 127
        %s534 = smul.addr %s533, 4
        %s535 = smul.addr %s534, 4
        %s536 = scalar_lea.vmem %s1, %s535
        %s537 = smul.u32 64, %s25
        %s538 = smul.u32 4, %s25
        %v539 = vld [vmem:[%s482] sm:$0xff]
        %v540 = vld [vmem:[%s482 + $0x8] sm:$0xff]
        %v541 = vld [vmem:[%s482 + $0x10] sm:$0xff]
        %v542 = vld [vmem:[%s482 + $0x18] sm:$0xff]
        %v543 = vld [vmem:[%s482 + $0x20] sm:$0xff]
        %v544 = vld [vmem:[%s482 + $0x28] sm:$0xff]
        %v545 = vld [vmem:[%s482 + $0x30] sm:$0xff]
        %v546 = vld [vmem:[%s482 + $0x38] sm:$0xff]
        %v547 = vld [vmem:[%s482 + $0x40] sm:$0xff]
        %v548 = vld [vmem:[%s482 + $0x48] sm:$0xff]
        %v549 = vld [vmem:[%s482 + $0x50] sm:$0xff]
        %v550 = vld [vmem:[%s482 + $0x58] sm:$0xff]
        %v551 = vld [vmem:[%s482 + $0x60] sm:$0xff]
        %v552 = vld [vmem:[%s482 + $0x68] sm:$0xff]
        %v553 = vld [vmem:[%s482 + $0x70] sm:$0xff]
        %v554 = vld [vmem:[%s482 + $0x78] sm:$0xff]
        %v555 = vld [vmem:[%s536] sm:$0xff]
        %v556 = vld [vmem:[%s536 + $0x8] sm:$0xff]
        %v557 = vld [vmem:[%s536 + $0x10] sm:$0xff]
        %v558 = vld [vmem:[%s536 + $0x18] sm:$0xff]
        %v559 = vld [vmem:[%s536 + $0x20] sm:$0xff]
        %v560 = vld [vmem:[%s536 + $0x28] sm:$0xff]
        %v561 = vld [vmem:[%s536 + $0x30] sm:$0xff]
        %v562 = vld [vmem:[%s536 + $0x38] sm:$0xff]
        %v563 = vld [vmem:[%s536 + $0x40] sm:$0xff]
        %v564 = vld [vmem:[%s536 + $0x48] sm:$0xff]
        %v565 = vld [vmem:[%s536 + $0x50] sm:$0xff]
        %v566 = vld [vmem:[%s536 + $0x58] sm:$0xff]
        %v567 = vld [vmem:[%s536 + $0x60] sm:$0xff]
        %v568 = vld [vmem:[%s536 + $0x68] sm:$0xff]
        %v569 = vld [vmem:[%s536 + $0x70] sm:$0xff]
        %v570 = vld [vmem:[%s536 + $0x78] sm:$0xff]
        %v571 = vld [vmem:[%s536 + $0x80] sm:$0xff]
        %v572 = vld [vmem:[%s536 + $0x88] sm:$0xff]
        %v573 = vld [vmem:[%s536 + $0x90] sm:$0xff]
        %v574 = vld [vmem:[%s536 + $0x98] sm:$0xff]
        %v575 = vld [vmem:[%s536 + $0xa0] sm:$0xff]
        %v576 = vld [vmem:[%s536 + $0xa8] sm:$0xff]
        %v577 = vld [vmem:[%s536 + $0xb0] sm:$0xff]
        %v578 = vld [vmem:[%s536 + $0xb8] sm:$0xff]
        %v579 = vld [vmem:[%s536 + $0xc0] sm:$0xff]
        %v580 = vld [vmem:[%s536 + $0xc8] sm:$0xff]
        %v581 = vld [vmem:[%s536 + $0xd0] sm:$0xff]
        %v582 = vld [vmem:[%s536 + $0xd8] sm:$0xff]
        %v583 = vld [vmem:[%s536 + $0xe0] sm:$0xff]
        %v584 = vld [vmem:[%s536 + $0xe8] sm:$0xff]
        %v585 = vld [vmem:[%s536 + $0xf0] sm:$0xff]
        %v586 = vld [vmem:[%s536 + $0xf8] sm:$0xff]
        %v587 = vld [vmem:[%s536 + $0x100] sm:$0xff]
        %v588 = vld [vmem:[%s536 + $0x108] sm:$0xff]
        %v589 = vld [vmem:[%s536 + $0x110] sm:$0xff]
        %v590 = vld [vmem:[%s536 + $0x118] sm:$0xff]
        %v591 = vld [vmem:[%s536 + $0x120] sm:$0xff]
        %v592 = vld [vmem:[%s536 + $0x128] sm:$0xff]
        %v593 = vld [vmem:[%s536 + $0x130] sm:$0xff]
        %v594 = vld [vmem:[%s536 + $0x138] sm:$0xff]
        %v595 = vld [vmem:[%s536 + $0x140] sm:$0xff]
        %v596 = vld [vmem:[%s536 + $0x148] sm:$0xff]
        %v597 = vld [vmem:[%s536 + $0x150] sm:$0xff]
        %v598 = vld [vmem:[%s536 + $0x158] sm:$0xff]
        %v599 = vld [vmem:[%s536 + $0x160] sm:$0xff]
        %v600 = vld [vmem:[%s536 + $0x168] sm:$0xff]
        %v601 = vld [vmem:[%s536 + $0x170] sm:$0xff]
        %v602 = vld [vmem:[%s536 + $0x178] sm:$0xff]
        %v603 = vld [vmem:[%s536 + $0x180] sm:$0xff]
        %v604 = vld [vmem:[%s536 + $0x188] sm:$0xff]
        %v605 = vld [vmem:[%s536 + $0x190] sm:$0xff]
        %v606 = vld [vmem:[%s536 + $0x198] sm:$0xff]
        %v607 = vld [vmem:[%s536 + $0x1a0] sm:$0xff]
        %v608 = vld [vmem:[%s536 + $0x1a8] sm:$0xff]
        %v609 = vld [vmem:[%s536 + $0x1b0] sm:$0xff]
        %v610 = vld [vmem:[%s536 + $0x1b8] sm:$0xff]
        %v611 = vld [vmem:[%s536 + $0x1c0] sm:$0xff]
        %v612 = vld [vmem:[%s536 + $0x1c8] sm:$0xff]
        %v613 = vld [vmem:[%s536 + $0x1d0] sm:$0xff]
        %v614 = vld [vmem:[%s536 + $0x1d8] sm:$0xff]
        %v615 = vld [vmem:[%s536 + $0x1e0] sm:$0xff]
        %v616 = vld [vmem:[%s536 + $0x1e8] sm:$0xff]
        %v617 = vld [vmem:[%s536 + $0x1f0] sm:$0xff]
        %v618 = vld [vmem:[%s536 + $0x1f8] sm:$0xff]
        %v619 = vld [vmem:[%s536 + $0x200] sm:$0xff]
        %v620 = vld [vmem:[%s536 + $0x208] sm:$0xff]
        %v621 = vld [vmem:[%s536 + $0x210] sm:$0xff]
        %v622 = vld [vmem:[%s536 + $0x218] sm:$0xff]
        %v623 = vld [vmem:[%s536 + $0x220] sm:$0xff]
        %v624 = vld [vmem:[%s536 + $0x228] sm:$0xff]
        %v625 = vld [vmem:[%s536 + $0x230] sm:$0xff]
        %v626 = vld [vmem:[%s536 + $0x238] sm:$0xff]
        %v627 = vld [vmem:[%s536 + $0x240] sm:$0xff]
        %v628 = vld [vmem:[%s536 + $0x248] sm:$0xff]
        %v629 = vld [vmem:[%s536 + $0x250] sm:$0xff]
        %v630 = vld [vmem:[%s536 + $0x258] sm:$0xff]
        %v631 = vld [vmem:[%s536 + $0x260] sm:$0xff]
        %v632 = vld [vmem:[%s536 + $0x268] sm:$0xff]
        %v633 = vld [vmem:[%s536 + $0x270] sm:$0xff]
        %v634 = vld [vmem:[%s536 + $0x278] sm:$0xff]
        %v635 = vld [vmem:[%s536 + $0x280] sm:$0xff]
        %v636 = vld [vmem:[%s536 + $0x288] sm:$0xff]
        %v637 = vld [vmem:[%s536 + $0x290] sm:$0xff]
        %v638 = vld [vmem:[%s536 + $0x298] sm:$0xff]
        %v639 = vld [vmem:[%s536 + $0x2a0] sm:$0xff]
        %v640 = vld [vmem:[%s536 + $0x2a8] sm:$0xff]
        %v641 = vld [vmem:[%s536 + $0x2b0] sm:$0xff]
        %v642 = vld [vmem:[%s536 + $0x2b8] sm:$0xff]
        %v643 = vld [vmem:[%s536 + $0x2c0] sm:$0xff]
        %v644 = vld [vmem:[%s536 + $0x2c8] sm:$0xff]
        %v645 = vld [vmem:[%s536 + $0x2d0] sm:$0xff]
        %v646 = vld [vmem:[%s536 + $0x2d8] sm:$0xff]
        %v647 = vld [vmem:[%s536 + $0x2e0] sm:$0xff]
        %v648 = vld [vmem:[%s536 + $0x2e8] sm:$0xff]
        %v649 = vld [vmem:[%s536 + $0x2f0] sm:$0xff]
        %v650 = vld [vmem:[%s536 + $0x2f8] sm:$0xff]
        %v651 = vld [vmem:[%s536 + $0x300] sm:$0xff]
        %v652 = vld [vmem:[%s536 + $0x308] sm:$0xff]
        %v653 = vld [vmem:[%s536 + $0x310] sm:$0xff]
        %v654 = vld [vmem:[%s536 + $0x318] sm:$0xff]
        %v655 = vld [vmem:[%s536 + $0x320] sm:$0xff]
        %v656 = vld [vmem:[%s536 + $0x328] sm:$0xff]
        %v657 = vld [vmem:[%s536 + $0x330] sm:$0xff]
        %v658 = vld [vmem:[%s536 + $0x338] sm:$0xff]
        %v659 = vld [vmem:[%s536 + $0x340] sm:$0xff]
        %v660 = vld [vmem:[%s536 + $0x348] sm:$0xff]
        %v661 = vld [vmem:[%s536 + $0x350] sm:$0xff]
        %v662 = vld [vmem:[%s536 + $0x358] sm:$0xff]
        %v663 = vld [vmem:[%s536 + $0x360] sm:$0xff]
        %v664 = vld [vmem:[%s536 + $0x368] sm:$0xff]
        %v665 = vld [vmem:[%s536 + $0x370] sm:$0xff]
        %v666 = vld [vmem:[%s536 + $0x378] sm:$0xff]
        %v667 = vld [vmem:[%s536 + $0x380] sm:$0xff]
        %v668 = vld [vmem:[%s536 + $0x388] sm:$0xff]
        %v669 = vld [vmem:[%s536 + $0x390] sm:$0xff]
        %v670 = vld [vmem:[%s536 + $0x398] sm:$0xff]
        %v671 = vld [vmem:[%s536 + $0x3a0] sm:$0xff]
        %v672 = vld [vmem:[%s536 + $0x3a8] sm:$0xff]
        %v673 = vld [vmem:[%s536 + $0x3b0] sm:$0xff]
        %v674 = vld [vmem:[%s536 + $0x3b8] sm:$0xff]
        %v675 = vld [vmem:[%s536 + $0x3c0] sm:$0xff]
        %v676 = vld [vmem:[%s536 + $0x3c8] sm:$0xff]
        %v677 = vld [vmem:[%s536 + $0x3d0] sm:$0xff]
        %v678 = vld [vmem:[%s536 + $0x3d8] sm:$0xff]
        %v679 = vld [vmem:[%s536 + $0x3e0] sm:$0xff]
        %v680 = vld [vmem:[%s536 + $0x3e8] sm:$0xff]
        %v681 = vld [vmem:[%s536 + $0x3f0] sm:$0xff]
        %v682 = vld [vmem:[%s536 + $0x3f8] sm:$0xff]
        %v683 = vld [vmem:[%s2] sm:$0xff]
        %v684 = vld [vmem:[%s2 + $0x8] sm:$0xff]
        %v685 = vld [vmem:[%s2 + $0x10] sm:$0xff]
        %v686 = vld [vmem:[%s2 + $0x18] sm:$0xff]
        %v687 = vld [vmem:[%s2 + $0x20] sm:$0xff]
        %v688 = vld [vmem:[%s2 + $0x28] sm:$0xff]
        %v689 = vld [vmem:[%s2 + $0x30] sm:$0xff]
        %v690 = vld [vmem:[%s2 + $0x38] sm:$0xff]
        %v691 = vld [vmem:[%s2 + $0x40] sm:$0xff]
        %v692 = vld [vmem:[%s2 + $0x48] sm:$0xff]
        %v693 = vld [vmem:[%s2 + $0x50] sm:$0xff]
        %v694 = vld [vmem:[%s2 + $0x58] sm:$0xff]
        %v695 = vld [vmem:[%s2 + $0x60] sm:$0xff]
        %v696 = vld [vmem:[%s2 + $0x68] sm:$0xff]
        %v697 = vld [vmem:[%s2 + $0x70] sm:$0xff]
        %v698 = vld [vmem:[%s2 + $0x78] sm:$0xff]
        %v699 = vld [vmem:[%s2 + $0x80] sm:$0xff]
        %v700 = vld [vmem:[%s2 + $0x88] sm:$0xff]
        %v701 = vld [vmem:[%s2 + $0x90] sm:$0xff]
        %v702 = vld [vmem:[%s2 + $0x98] sm:$0xff]
        %v703 = vld [vmem:[%s2 + $0xa0] sm:$0xff]
        %v704 = vld [vmem:[%s2 + $0xa8] sm:$0xff]
        %v705 = vld [vmem:[%s2 + $0xb0] sm:$0xff]
        %v706 = vld [vmem:[%s2 + $0xb8] sm:$0xff]
        %v707 = vld [vmem:[%s2 + $0xc0] sm:$0xff]
        %v708 = vld [vmem:[%s2 + $0xc8] sm:$0xff]
        %v709 = vld [vmem:[%s2 + $0xd0] sm:$0xff]
        %v710 = vld [vmem:[%s2 + $0xd8] sm:$0xff]
        %v711 = vld [vmem:[%s2 + $0xe0] sm:$0xff]
        %v712 = vld [vmem:[%s2 + $0xe8] sm:$0xff]
        %v713 = vld [vmem:[%s2 + $0xf0] sm:$0xff]
        %v714 = vld [vmem:[%s2 + $0xf8] sm:$0xff]
        %v715 = vld [vmem:[%s2 + $0x100] sm:$0xff]
        %v716 = vld [vmem:[%s2 + $0x108] sm:$0xff]
        %v717 = vld [vmem:[%s2 + $0x110] sm:$0xff]
        %v718 = vld [vmem:[%s2 + $0x118] sm:$0xff]
        %v719 = vld [vmem:[%s2 + $0x120] sm:$0xff]
        %v720 = vld [vmem:[%s2 + $0x128] sm:$0xff]
        %v721 = vld [vmem:[%s2 + $0x130] sm:$0xff]
        %v722 = vld [vmem:[%s2 + $0x138] sm:$0xff]
        %v723 = vld [vmem:[%s2 + $0x140] sm:$0xff]
        %v724 = vld [vmem:[%s2 + $0x148] sm:$0xff]
        %v725 = vld [vmem:[%s2 + $0x150] sm:$0xff]
        %v726 = vld [vmem:[%s2 + $0x158] sm:$0xff]
        %v727 = vld [vmem:[%s2 + $0x160] sm:$0xff]
        %v728 = vld [vmem:[%s2 + $0x168] sm:$0xff]
        %v729 = vld [vmem:[%s2 + $0x170] sm:$0xff]
        %v730 = vld [vmem:[%s2 + $0x178] sm:$0xff]
        %v731 = vld [vmem:[%s2 + $0x180] sm:$0xff]
        %v732 = vld [vmem:[%s2 + $0x188] sm:$0xff]
        %v733 = vld [vmem:[%s2 + $0x190] sm:$0xff]
        %v734 = vld [vmem:[%s2 + $0x198] sm:$0xff]
        %v735 = vld [vmem:[%s2 + $0x1a0] sm:$0xff]
        %v736 = vld [vmem:[%s2 + $0x1a8] sm:$0xff]
        %v737 = vld [vmem:[%s2 + $0x1b0] sm:$0xff]
        %v738 = vld [vmem:[%s2 + $0x1b8] sm:$0xff]
        %v739 = vld [vmem:[%s2 + $0x1c0] sm:$0xff]
        %v740 = vld [vmem:[%s2 + $0x1c8] sm:$0xff]
        %v741 = vld [vmem:[%s2 + $0x1d0] sm:$0xff]
        %v742 = vld [vmem:[%s2 + $0x1d8] sm:$0xff]
        %v743 = vld [vmem:[%s2 + $0x1e0] sm:$0xff]
        %v744 = vld [vmem:[%s2 + $0x1e8] sm:$0xff]
        %v745 = vld [vmem:[%s2 + $0x1f0] sm:$0xff]
        %v746 = vld [vmem:[%s2 + $0x1f8] sm:$0xff]
        %v747 = vld [vmem:[%s2 + $0x200] sm:$0xff]
        %v748 = vld [vmem:[%s2 + $0x208] sm:$0xff]
        %v749 = vld [vmem:[%s2 + $0x210] sm:$0xff]
        %v750 = vld [vmem:[%s2 + $0x218] sm:$0xff]
        %v751 = vld [vmem:[%s2 + $0x220] sm:$0xff]
        %v752 = vld [vmem:[%s2 + $0x228] sm:$0xff]
        %v753 = vld [vmem:[%s2 + $0x230] sm:$0xff]
        %v754 = vld [vmem:[%s2 + $0x238] sm:$0xff]
        %v755 = vld [vmem:[%s2 + $0x240] sm:$0xff]
        %v756 = vld [vmem:[%s2 + $0x248] sm:$0xff]
        %v757 = vld [vmem:[%s2 + $0x250] sm:$0xff]
        %v758 = vld [vmem:[%s2 + $0x258] sm:$0xff]
        %v759 = vld [vmem:[%s2 + $0x260] sm:$0xff]
        %v760 = vld [vmem:[%s2 + $0x268] sm:$0xff]
        %v761 = vld [vmem:[%s2 + $0x270] sm:$0xff]
        %v762 = vld [vmem:[%s2 + $0x278] sm:$0xff]
        %v763 = vld [vmem:[%s2 + $0x280] sm:$0xff]
        %v764 = vld [vmem:[%s2 + $0x288] sm:$0xff]
        %v765 = vld [vmem:[%s2 + $0x290] sm:$0xff]
        %v766 = vld [vmem:[%s2 + $0x298] sm:$0xff]
        %v767 = vld [vmem:[%s2 + $0x2a0] sm:$0xff]
        %v768 = vld [vmem:[%s2 + $0x2a8] sm:$0xff]
        %v769 = vld [vmem:[%s2 + $0x2b0] sm:$0xff]
        %v770 = vld [vmem:[%s2 + $0x2b8] sm:$0xff]
        %v771 = vld [vmem:[%s2 + $0x2c0] sm:$0xff]
        %v772 = vld [vmem:[%s2 + $0x2c8] sm:$0xff]
        %v773 = vld [vmem:[%s2 + $0x2d0] sm:$0xff]
        %v774 = vld [vmem:[%s2 + $0x2d8] sm:$0xff]
        %v775 = vld [vmem:[%s2 + $0x2e0] sm:$0xff]
        %v776 = vld [vmem:[%s2 + $0x2e8] sm:$0xff]
        %v777 = vld [vmem:[%s2 + $0x2f0] sm:$0xff]
        %v778 = vld [vmem:[%s2 + $0x2f8] sm:$0xff]
        %v779 = vld [vmem:[%s2 + $0x300] sm:$0xff]
        %v780 = vld [vmem:[%s2 + $0x308] sm:$0xff]
        %v781 = vld [vmem:[%s2 + $0x310] sm:$0xff]
        %v782 = vld [vmem:[%s2 + $0x318] sm:$0xff]
        %v783 = vld [vmem:[%s2 + $0x320] sm:$0xff]
        %v784 = vld [vmem:[%s2 + $0x328] sm:$0xff]
        %v785 = vld [vmem:[%s2 + $0x330] sm:$0xff]
        %v786 = vld [vmem:[%s2 + $0x338] sm:$0xff]
        %v787 = vld [vmem:[%s2 + $0x340] sm:$0xff]
        %v788 = vld [vmem:[%s2 + $0x348] sm:$0xff]
        %v789 = vld [vmem:[%s2 + $0x350] sm:$0xff]
        %v790 = vld [vmem:[%s2 + $0x358] sm:$0xff]
        %v791 = vld [vmem:[%s2 + $0x360] sm:$0xff]
        %v792 = vld [vmem:[%s2 + $0x368] sm:$0xff]
        %v793 = vld [vmem:[%s2 + $0x370] sm:$0xff]
        %v794 = vld [vmem:[%s2 + $0x378] sm:$0xff]
        %v795 = vld [vmem:[%s2 + $0x380] sm:$0xff]
        %v796 = vld [vmem:[%s2 + $0x388] sm:$0xff]
        %v797 = vld [vmem:[%s2 + $0x390] sm:$0xff]
        %v798 = vld [vmem:[%s2 + $0x398] sm:$0xff]
        %v799 = vld [vmem:[%s2 + $0x3a0] sm:$0xff]
        %v800 = vld [vmem:[%s2 + $0x3a8] sm:$0xff]
        %v801 = vld [vmem:[%s2 + $0x3b0] sm:$0xff]
        %v802 = vld [vmem:[%s2 + $0x3b8] sm:$0xff]
        %v803 = vld [vmem:[%s2 + $0x3c0] sm:$0xff]
        %v804 = vld [vmem:[%s2 + $0x3c8] sm:$0xff]
        %v805 = vld [vmem:[%s2 + $0x3d0] sm:$0xff]
        %v806 = vld [vmem:[%s2 + $0x3d8] sm:$0xff]
        %v807 = vld [vmem:[%s2 + $0x3e0] sm:$0xff]
        %v808 = vld [vmem:[%s2 + $0x3e8] sm:$0xff]
        %v809 = vld [vmem:[%s2 + $0x3f0] sm:$0xff]
        %v810 = vld [vmem:[%s2 + $0x3f8] sm:$0xff]
        %v811 = vld [vmem:[%s3] sm:$0xff]
        %v812 = vld [vmem:[%s3 + $0x8] sm:$0xff]
        %v813 = vld [vmem:[%s3 + $0x10] sm:$0xff]
        %v814 = vld [vmem:[%s3 + $0x18] sm:$0xff]
        %v815 = vld [vmem:[%s3 + $0x20] sm:$0xff]
        %v816 = vld [vmem:[%s3 + $0x28] sm:$0xff]
        %v817 = vld [vmem:[%s3 + $0x30] sm:$0xff]
        %v818 = vld [vmem:[%s3 + $0x38] sm:$0xff]
        %v819 = vld [vmem:[%s3 + $0x40] sm:$0xff]
        %v820 = vld [vmem:[%s3 + $0x48] sm:$0xff]
        %v821 = vld [vmem:[%s3 + $0x50] sm:$0xff]
        %v822 = vld [vmem:[%s3 + $0x58] sm:$0xff]
        %v823 = vld [vmem:[%s4] sm:$0xff]
        %v824 = vld [vmem:[%s4 + $0x8] sm:$0xff]
        %v825 = vld [vmem:[%s4 + $0x10] sm:$0xff]
        %v826 = vld [vmem:[%s4 + $0x18] sm:$0xff]
        %v827 = vld [vmem:[%s5] sm:$0xff]
        %v828 = vld [vmem:[%s5 + $0x8] sm:$0xff]
        %v829 = vld [vmem:[%s5 + $0x10] sm:$0xff]
        %v830 = vld [vmem:[%s5 + $0x18] sm:$0xff]
        %v831 = vld [vmem:[%s6] sm:$0xff]
        %v832 = vld [vmem:[%s6 + $0x8] sm:$0xff]
        %v833 = vld [vmem:[%s6 + $0x10] sm:$0xff]
        %v834 = vld [vmem:[%s6 + $0x18] sm:$0xff]
        %v835 = vld [vmem:[%s7] sm:$0xff]
        %v836 = vld [vmem:[%s7 + $0x8] sm:$0xff]
        %v837 = vld [vmem:[%s7 + $0x10] sm:$0xff]
        %v838 = vld [vmem:[%s7 + $0x18] sm:$0xff]
        %v839 = vld [vmem:[%s8] sm:$0xff]
        %v840 = vld [vmem:[%s8 + $0x8] sm:$0xff]
        %v841 = vld [vmem:[%s8 + $0x10] sm:$0xff]
        %v842 = vld [vmem:[%s8 + $0x18] sm:$0xff]
        %v843 = vld [vmem:[%s8 + $0x20] sm:$0xff]
        %v844 = vld [vmem:[%s8 + $0x28] sm:$0xff]
        %v845 = vld [vmem:[%s8 + $0x30] sm:$0xff]
        %v846 = vld [vmem:[%s8 + $0x38] sm:$0xff]
        %v847 = vld [vmem:[%s9] sm:$0xff]
        %v848 = vld [vmem:[%s9 + $0x8] sm:$0xff]
        %v849 = vld [vmem:[%s9 + $0x10] sm:$0xff]
        %v850 = vld [vmem:[%s9 + $0x18] sm:$0xff]
        %v851 = vld [vmem:[%s9 + $0x20] sm:$0xff]
        %v852 = vld [vmem:[%s9 + $0x28] sm:$0xff]
        %v853 = vld [vmem:[%s9 + $0x30] sm:$0xff]
        %v854 = vld [vmem:[%s9 + $0x38] sm:$0xff]
        %v855 = vld [vmem:[%s10] sm:$0xff]
        %v856 = vld [vmem:[%s10 + $0x8] sm:$0xff]
        %v857 = vld [vmem:[%s10 + $0x10] sm:$0xff]
        %v858 = vld [vmem:[%s10 + $0x18] sm:$0xff]
        %v859 = vld [vmem:[%s11] sm:$0xff]
        %v860 = vld [vmem:[%s11 + $0x8] sm:$0xff]
        %v861 = vld [vmem:[%s11 + $0x10] sm:$0xff]
        %v862 = vld [vmem:[%s11 + $0x18] sm:$0xff]
        %v863 = vld [vmem:[%s12] sm:$0xff]
        %v864 = vld [vmem:[%s12 + $0x8] sm:$0xff]
        %v865 = vld [vmem:[%s12 + $0x10] sm:$0xff]
        %v866 = vld [vmem:[%s12 + $0x18] sm:$0xff]
        %v867 = vld [vmem:[%s13] sm:$0xff]
        %v868 = vld [vmem:[%s13 + $0x8] sm:$0xff]
        %v869 = vld [vmem:[%s13 + $0x10] sm:$0xff]
        %v870 = vld [vmem:[%s13 + $0x18] sm:$0xff]
        %v871 = vunpack.c.l.bf16 %v555
        %v872 = vunpack.c.h.bf16 %v555
        %v873 = vunpack.c.l.bf16 %v556
        %v874 = vunpack.c.h.bf16 %v556
        %v875 = vunpack.c.l.bf16 %v557
        %v876 = vunpack.c.h.bf16 %v557
        %v877 = vunpack.c.l.bf16 %v558
        %v878 = vunpack.c.h.bf16 %v558
        %v879 = vunpack.c.l.bf16 %v559
        %v880 = vunpack.c.h.bf16 %v559
        %v881 = vunpack.c.l.bf16 %v560
        %v882 = vunpack.c.h.bf16 %v560
        %v883 = vunpack.c.l.bf16 %v561
        %v884 = vunpack.c.h.bf16 %v561
        %v885 = vunpack.c.l.bf16 %v562
        %v886 = vunpack.c.h.bf16 %v562
        %v887 = vunpack.c.l.bf16 %v563
        %v888 = vunpack.c.h.bf16 %v563
        %v889 = vunpack.c.l.bf16 %v564
        %v890 = vunpack.c.h.bf16 %v564
        %v891 = vunpack.c.l.bf16 %v565
        %v892 = vunpack.c.h.bf16 %v565
        %v893 = vunpack.c.l.bf16 %v566
        %v894 = vunpack.c.h.bf16 %v566
        %v895 = vunpack.c.l.bf16 %v567
        %v896 = vunpack.c.h.bf16 %v567
        %v897 = vunpack.c.l.bf16 %v568
        %v898 = vunpack.c.h.bf16 %v568
        %v899 = vunpack.c.l.bf16 %v569
        %v900 = vunpack.c.h.bf16 %v569
        %v901 = vunpack.c.l.bf16 %v570
        %v902 = vunpack.c.h.bf16 %v570
        %v903 = vunpack.c.l.bf16 %v571
        %v904 = vunpack.c.h.bf16 %v571
        %v905 = vunpack.c.l.bf16 %v572
        %v906 = vunpack.c.h.bf16 %v572
        %v907 = vunpack.c.l.bf16 %v573
        %v908 = vunpack.c.h.bf16 %v573
        %v909 = vunpack.c.l.bf16 %v574
        %v910 = vunpack.c.h.bf16 %v574
        %v911 = vunpack.c.l.bf16 %v575
        %v912 = vunpack.c.h.bf16 %v575
        %v913 = vunpack.c.l.bf16 %v576
        %v914 = vunpack.c.h.bf16 %v576
        %v915 = vunpack.c.l.bf16 %v577
        %v916 = vunpack.c.h.bf16 %v577
        %v917 = vunpack.c.l.bf16 %v578
        %v918 = vunpack.c.h.bf16 %v578
        %v919 = vunpack.c.l.bf16 %v579
        %v920 = vunpack.c.h.bf16 %v579
        %v921 = vunpack.c.l.bf16 %v580
        %v922 = vunpack.c.h.bf16 %v580
        %v923 = vunpack.c.l.bf16 %v581
        %v924 = vunpack.c.h.bf16 %v581
        %v925 = vunpack.c.l.bf16 %v582
        %v926 = vunpack.c.h.bf16 %v582
        %v927 = vunpack.c.l.bf16 %v583
        %v928 = vunpack.c.h.bf16 %v583
        %v929 = vunpack.c.l.bf16 %v584
        %v930 = vunpack.c.h.bf16 %v584
        %v931 = vunpack.c.l.bf16 %v585
        %v932 = vunpack.c.h.bf16 %v585
        %v933 = vunpack.c.l.bf16 %v586
        %v934 = vunpack.c.h.bf16 %v586
        %v935 = vunpack.c.l.bf16 %v587
        %v936 = vunpack.c.h.bf16 %v587
        %v937 = vunpack.c.l.bf16 %v588
        %v938 = vunpack.c.h.bf16 %v588
        %v939 = vunpack.c.l.bf16 %v589
        %v940 = vunpack.c.h.bf16 %v589
        %v941 = vunpack.c.l.bf16 %v590
        %v942 = vunpack.c.h.bf16 %v590
        %v943 = vunpack.c.l.bf16 %v591
        %v944 = vunpack.c.h.bf16 %v591
        %v945 = vunpack.c.l.bf16 %v592
        %v946 = vunpack.c.h.bf16 %v592
        %v947 = vunpack.c.l.bf16 %v593
        %v948 = vunpack.c.h.bf16 %v593
        %v949 = vunpack.c.l.bf16 %v594
        %v950 = vunpack.c.h.bf16 %v594
        %v951 = vunpack.c.l.bf16 %v595
        %v952 = vunpack.c.h.bf16 %v595
        %v953 = vunpack.c.l.bf16 %v596
        %v954 = vunpack.c.h.bf16 %v596
        %v955 = vunpack.c.l.bf16 %v597
        %v956 = vunpack.c.h.bf16 %v597
        %v957 = vunpack.c.l.bf16 %v598
        %v958 = vunpack.c.h.bf16 %v598
        %v959 = vunpack.c.l.bf16 %v599
        %v960 = vunpack.c.h.bf16 %v599
        %v961 = vunpack.c.l.bf16 %v600
        %v962 = vunpack.c.h.bf16 %v600
        %v963 = vunpack.c.l.bf16 %v601
        %v964 = vunpack.c.h.bf16 %v601
        %v965 = vunpack.c.l.bf16 %v602
        %v966 = vunpack.c.h.bf16 %v602
        %v967 = vunpack.c.l.bf16 %v603
        %v968 = vunpack.c.h.bf16 %v603
        %v969 = vunpack.c.l.bf16 %v604
        %v970 = vunpack.c.h.bf16 %v604
        %v971 = vunpack.c.l.bf16 %v605
        %v972 = vunpack.c.h.bf16 %v605
        %v973 = vunpack.c.l.bf16 %v606
        %v974 = vunpack.c.h.bf16 %v606
        %v975 = vunpack.c.l.bf16 %v607
        %v976 = vunpack.c.h.bf16 %v607
        %v977 = vunpack.c.l.bf16 %v608
        %v978 = vunpack.c.h.bf16 %v608
        %v979 = vunpack.c.l.bf16 %v609
        %v980 = vunpack.c.h.bf16 %v609
        %v981 = vunpack.c.l.bf16 %v610
        %v982 = vunpack.c.h.bf16 %v610
        %v983 = vunpack.c.l.bf16 %v611
        %v984 = vunpack.c.h.bf16 %v611
        %v985 = vunpack.c.l.bf16 %v612
        %v986 = vunpack.c.h.bf16 %v612
        %v987 = vunpack.c.l.bf16 %v613
        %v988 = vunpack.c.h.bf16 %v613
        %v989 = vunpack.c.l.bf16 %v614
        %v990 = vunpack.c.h.bf16 %v614
        %v991 = vunpack.c.l.bf16 %v615
        %v992 = vunpack.c.h.bf16 %v615
        %v993 = vunpack.c.l.bf16 %v616
        %v994 = vunpack.c.h.bf16 %v616
        %v995 = vunpack.c.l.bf16 %v617
        %v996 = vunpack.c.h.bf16 %v617
        %v997 = vunpack.c.l.bf16 %v618
        %v998 = vunpack.c.h.bf16 %v618
        %v999 = vunpack.c.l.bf16 %v619
        %v1000 = vunpack.c.h.bf16 %v619
        %v1001 = vunpack.c.l.bf16 %v620
        %v1002 = vunpack.c.h.bf16 %v620
        %v1003 = vunpack.c.l.bf16 %v621
        %v1004 = vunpack.c.h.bf16 %v621
        %v1005 = vunpack.c.l.bf16 %v622
        %v1006 = vunpack.c.h.bf16 %v622
        %v1007 = vunpack.c.l.bf16 %v623
        %v1008 = vunpack.c.h.bf16 %v623
        %v1009 = vunpack.c.l.bf16 %v624
        %v1010 = vunpack.c.h.bf16 %v624
        %v1011 = vunpack.c.l.bf16 %v625
        %v1012 = vunpack.c.h.bf16 %v625
        %v1013 = vunpack.c.l.bf16 %v626
        %v1014 = vunpack.c.h.bf16 %v626
        %v1015 = vunpack.c.l.bf16 %v627
        %v1016 = vunpack.c.h.bf16 %v627
        %v1017 = vunpack.c.l.bf16 %v628
        %v1018 = vunpack.c.h.bf16 %v628
        %v1019 = vunpack.c.l.bf16 %v629
        %v1020 = vunpack.c.h.bf16 %v629
        %v1021 = vunpack.c.l.bf16 %v630
        %v1022 = vunpack.c.h.bf16 %v630
        %v1023 = vunpack.c.l.bf16 %v631
        %v1024 = vunpack.c.h.bf16 %v631
        %v1025 = vunpack.c.l.bf16 %v632
        %v1026 = vunpack.c.h.bf16 %v632
        %v1027 = vunpack.c.l.bf16 %v633
        %v1028 = vunpack.c.h.bf16 %v633
        %v1029 = vunpack.c.l.bf16 %v634
        %v1030 = vunpack.c.h.bf16 %v634
        %v1031 = vunpack.c.l.bf16 %v635
        %v1032 = vunpack.c.h.bf16 %v635
        %v1033 = vunpack.c.l.bf16 %v636
        %v1034 = vunpack.c.h.bf16 %v636
        %v1035 = vunpack.c.l.bf16 %v637
        %v1036 = vunpack.c.h.bf16 %v637
        %v1037 = vunpack.c.l.bf16 %v638
        %v1038 = vunpack.c.h.bf16 %v638
        %v1039 = vunpack.c.l.bf16 %v639
        %v1040 = vunpack.c.h.bf16 %v639
        %v1041 = vunpack.c.l.bf16 %v640
        %v1042 = vunpack.c.h.bf16 %v640
        %v1043 = vunpack.c.l.bf16 %v641
        %v1044 = vunpack.c.h.bf16 %v641
        %v1045 = vunpack.c.l.bf16 %v642
        %v1046 = vunpack.c.h.bf16 %v642
        %v1047 = vunpack.c.l.bf16 %v643
        %v1048 = vunpack.c.h.bf16 %v643
        %v1049 = vunpack.c.l.bf16 %v644
        %v1050 = vunpack.c.h.bf16 %v644
        %v1051 = vunpack.c.l.bf16 %v645
        %v1052 = vunpack.c.h.bf16 %v645
        %v1053 = vunpack.c.l.bf16 %v646
        %v1054 = vunpack.c.h.bf16 %v646
        %v1055 = vunpack.c.l.bf16 %v647
        %v1056 = vunpack.c.h.bf16 %v647
        %v1057 = vunpack.c.l.bf16 %v648
        %v1058 = vunpack.c.h.bf16 %v648
        %v1059 = vunpack.c.l.bf16 %v649
        %v1060 = vunpack.c.h.bf16 %v649
        %v1061 = vunpack.c.l.bf16 %v650
        %v1062 = vunpack.c.h.bf16 %v650
        %v1063 = vunpack.c.l.bf16 %v651
        %v1064 = vunpack.c.h.bf16 %v651
        %v1065 = vunpack.c.l.bf16 %v652
        %v1066 = vunpack.c.h.bf16 %v652
        %v1067 = vunpack.c.l.bf16 %v653
        %v1068 = vunpack.c.h.bf16 %v653
        %v1069 = vunpack.c.l.bf16 %v654
        %v1070 = vunpack.c.h.bf16 %v654
        %v1071 = vunpack.c.l.bf16 %v655
        %v1072 = vunpack.c.h.bf16 %v655
        %v1073 = vunpack.c.l.bf16 %v656
        %v1074 = vunpack.c.h.bf16 %v656
        %v1075 = vunpack.c.l.bf16 %v657
        %v1076 = vunpack.c.h.bf16 %v657
        %v1077 = vunpack.c.l.bf16 %v658
        %v1078 = vunpack.c.h.bf16 %v658
        %v1079 = vunpack.c.l.bf16 %v659
        %v1080 = vunpack.c.h.bf16 %v659
        %v1081 = vunpack.c.l.bf16 %v660
        %v1082 = vunpack.c.h.bf16 %v660
        %v1083 = vunpack.c.l.bf16 %v661
        %v1084 = vunpack.c.h.bf16 %v661
        %v1085 = vunpack.c.l.bf16 %v662
        %v1086 = vunpack.c.h.bf16 %v662
        %v1087 = vunpack.c.l.bf16 %v663
        %v1088 = vunpack.c.h.bf16 %v663
        %v1089 = vunpack.c.l.bf16 %v664
        %v1090 = vunpack.c.h.bf16 %v664
        %v1091 = vunpack.c.l.bf16 %v665
        %v1092 = vunpack.c.h.bf16 %v665
        %v1093 = vunpack.c.l.bf16 %v666
        %v1094 = vunpack.c.h.bf16 %v666
        %v1095 = vunpack.c.l.bf16 %v667
        %v1096 = vunpack.c.h.bf16 %v667
        %v1097 = vunpack.c.l.bf16 %v668
        %v1098 = vunpack.c.h.bf16 %v668
        %v1099 = vunpack.c.l.bf16 %v669
        %v1100 = vunpack.c.h.bf16 %v669
        %v1101 = vunpack.c.l.bf16 %v670
        %v1102 = vunpack.c.h.bf16 %v670
        %v1103 = vunpack.c.l.bf16 %v671
        %v1104 = vunpack.c.h.bf16 %v671
        %v1105 = vunpack.c.l.bf16 %v672
        %v1106 = vunpack.c.h.bf16 %v672
        %v1107 = vunpack.c.l.bf16 %v673
        %v1108 = vunpack.c.h.bf16 %v673
        %v1109 = vunpack.c.l.bf16 %v674
        %v1110 = vunpack.c.h.bf16 %v674
        %v1111 = vunpack.c.l.bf16 %v675
        %v1112 = vunpack.c.h.bf16 %v675
        %v1113 = vunpack.c.l.bf16 %v676
        %v1114 = vunpack.c.h.bf16 %v676
        %v1115 = vunpack.c.l.bf16 %v677
        %v1116 = vunpack.c.h.bf16 %v677
        %v1117 = vunpack.c.l.bf16 %v678
        %v1118 = vunpack.c.h.bf16 %v678
        %v1119 = vunpack.c.l.bf16 %v679
        %v1120 = vunpack.c.h.bf16 %v679
        %v1121 = vunpack.c.l.bf16 %v680
        %v1122 = vunpack.c.h.bf16 %v680
        %v1123 = vunpack.c.l.bf16 %v681
        %v1124 = vunpack.c.h.bf16 %v681
        %v1125 = vunpack.c.l.bf16 %v682
        %v1126 = vunpack.c.h.bf16 %v682
        %v1127 = vunpack.c.l.bf16 %v683
        %v1128 = vunpack.c.h.bf16 %v683
        %v1129 = vunpack.c.l.bf16 %v684
        %v1130 = vunpack.c.h.bf16 %v684
        %v1131 = vunpack.c.l.bf16 %v685
        %v1132 = vunpack.c.h.bf16 %v685
        %v1133 = vunpack.c.l.bf16 %v686
        %v1134 = vunpack.c.h.bf16 %v686
        %v1135 = vunpack.c.l.bf16 %v687
        %v1136 = vunpack.c.h.bf16 %v687
        %v1137 = vunpack.c.l.bf16 %v688
        %v1138 = vunpack.c.h.bf16 %v688
        %v1139 = vunpack.c.l.bf16 %v689
        %v1140 = vunpack.c.h.bf16 %v689
        %v1141 = vunpack.c.l.bf16 %v690
        %v1142 = vunpack.c.h.bf16 %v690
        %v1143 = vunpack.c.l.bf16 %v691
        %v1144 = vunpack.c.h.bf16 %v691
        %v1145 = vunpack.c.l.bf16 %v692
        %v1146 = vunpack.c.h.bf16 %v692
        %v1147 = vunpack.c.l.bf16 %v693
        %v1148 = vunpack.c.h.bf16 %v693
        %v1149 = vunpack.c.l.bf16 %v694
        %v1150 = vunpack.c.h.bf16 %v694
        %v1151 = vunpack.c.l.bf16 %v695
        %v1152 = vunpack.c.h.bf16 %v695
        %v1153 = vunpack.c.l.bf16 %v696
        %v1154 = vunpack.c.h.bf16 %v696
        %v1155 = vunpack.c.l.bf16 %v697
        %v1156 = vunpack.c.h.bf16 %v697
        %v1157 = vunpack.c.l.bf16 %v698
        %v1158 = vunpack.c.h.bf16 %v698
        %v1159 = vunpack.c.l.bf16 %v699
        %v1160 = vunpack.c.h.bf16 %v699
        %v1161 = vunpack.c.l.bf16 %v700
        %v1162 = vunpack.c.h.bf16 %v700
        %v1163 = vunpack.c.l.bf16 %v701
        %v1164 = vunpack.c.h.bf16 %v701
        %v1165 = vunpack.c.l.bf16 %v702
        %v1166 = vunpack.c.h.bf16 %v702
        %v1167 = vunpack.c.l.bf16 %v703
        %v1168 = vunpack.c.h.bf16 %v703
        %v1169 = vunpack.c.l.bf16 %v704
        %v1170 = vunpack.c.h.bf16 %v704
        %v1171 = vunpack.c.l.bf16 %v705
        %v1172 = vunpack.c.h.bf16 %v705
        %v1173 = vunpack.c.l.bf16 %v706
        %v1174 = vunpack.c.h.bf16 %v706
        %v1175 = vunpack.c.l.bf16 %v707
        %v1176 = vunpack.c.h.bf16 %v707
        %v1177 = vunpack.c.l.bf16 %v708
        %v1178 = vunpack.c.h.bf16 %v708
        %v1179 = vunpack.c.l.bf16 %v709
        %v1180 = vunpack.c.h.bf16 %v709
        %v1181 = vunpack.c.l.bf16 %v710
        %v1182 = vunpack.c.h.bf16 %v710
        %v1183 = vunpack.c.l.bf16 %v711
        %v1184 = vunpack.c.h.bf16 %v711
        %v1185 = vunpack.c.l.bf16 %v712
        %v1186 = vunpack.c.h.bf16 %v712
        %v1187 = vunpack.c.l.bf16 %v713
        %v1188 = vunpack.c.h.bf16 %v713
        %v1189 = vunpack.c.l.bf16 %v714
        %v1190 = vunpack.c.h.bf16 %v714
        %v1191 = vunpack.c.l.bf16 %v715
        %v1192 = vunpack.c.h.bf16 %v715
        %v1193 = vunpack.c.l.bf16 %v716
        %v1194 = vunpack.c.h.bf16 %v716
        %v1195 = vunpack.c.l.bf16 %v717
        %v1196 = vunpack.c.h.bf16 %v717
        %v1197 = vunpack.c.l.bf16 %v718
        %v1198 = vunpack.c.h.bf16 %v718
        %v1199 = vunpack.c.l.bf16 %v719
        %v1200 = vunpack.c.h.bf16 %v719
        %v1201 = vunpack.c.l.bf16 %v720
        %v1202 = vunpack.c.h.bf16 %v720
        %v1203 = vunpack.c.l.bf16 %v721
        %v1204 = vunpack.c.h.bf16 %v721
        %v1205 = vunpack.c.l.bf16 %v722
        %v1206 = vunpack.c.h.bf16 %v722
        %v1207 = vunpack.c.l.bf16 %v723
        %v1208 = vunpack.c.h.bf16 %v723
        %v1209 = vunpack.c.l.bf16 %v724
        %v1210 = vunpack.c.h.bf16 %v724
        %v1211 = vunpack.c.l.bf16 %v725
        %v1212 = vunpack.c.h.bf16 %v725
        %v1213 = vunpack.c.l.bf16 %v726
        %v1214 = vunpack.c.h.bf16 %v726
        %v1215 = vunpack.c.l.bf16 %v727
        %v1216 = vunpack.c.h.bf16 %v727
        %v1217 = vunpack.c.l.bf16 %v728
        %v1218 = vunpack.c.h.bf16 %v728
        %v1219 = vunpack.c.l.bf16 %v729
        %v1220 = vunpack.c.h.bf16 %v729
        %v1221 = vunpack.c.l.bf16 %v730
        %v1222 = vunpack.c.h.bf16 %v730
        %v1223 = vunpack.c.l.bf16 %v731
        %v1224 = vunpack.c.h.bf16 %v731
        %v1225 = vunpack.c.l.bf16 %v732
        %v1226 = vunpack.c.h.bf16 %v732
        %v1227 = vunpack.c.l.bf16 %v733
        %v1228 = vunpack.c.h.bf16 %v733
        %v1229 = vunpack.c.l.bf16 %v734
        %v1230 = vunpack.c.h.bf16 %v734
        %v1231 = vunpack.c.l.bf16 %v735
        %v1232 = vunpack.c.h.bf16 %v735
        %v1233 = vunpack.c.l.bf16 %v736
        %v1234 = vunpack.c.h.bf16 %v736
        %v1235 = vunpack.c.l.bf16 %v737
        %v1236 = vunpack.c.h.bf16 %v737
        %v1237 = vunpack.c.l.bf16 %v738
        %v1238 = vunpack.c.h.bf16 %v738
        %v1239 = vunpack.c.l.bf16 %v739
        %v1240 = vunpack.c.h.bf16 %v739
        %v1241 = vunpack.c.l.bf16 %v740
        %v1242 = vunpack.c.h.bf16 %v740
        %v1243 = vunpack.c.l.bf16 %v741
        %v1244 = vunpack.c.h.bf16 %v741
        %v1245 = vunpack.c.l.bf16 %v742
        %v1246 = vunpack.c.h.bf16 %v742
        %v1247 = vunpack.c.l.bf16 %v743
        %v1248 = vunpack.c.h.bf16 %v743
        %v1249 = vunpack.c.l.bf16 %v744
        %v1250 = vunpack.c.h.bf16 %v744
        %v1251 = vunpack.c.l.bf16 %v745
        %v1252 = vunpack.c.h.bf16 %v745
        %v1253 = vunpack.c.l.bf16 %v746
        %v1254 = vunpack.c.h.bf16 %v746
        %v1255 = vunpack.c.l.bf16 %v747
        %v1256 = vunpack.c.h.bf16 %v747
        %v1257 = vunpack.c.l.bf16 %v748
        %v1258 = vunpack.c.h.bf16 %v748
        %v1259 = vunpack.c.l.bf16 %v749
        %v1260 = vunpack.c.h.bf16 %v749
        %v1261 = vunpack.c.l.bf16 %v750
        %v1262 = vunpack.c.h.bf16 %v750
        %v1263 = vunpack.c.l.bf16 %v751
        %v1264 = vunpack.c.h.bf16 %v751
        %v1265 = vunpack.c.l.bf16 %v752
        %v1266 = vunpack.c.h.bf16 %v752
        %v1267 = vunpack.c.l.bf16 %v753
        %v1268 = vunpack.c.h.bf16 %v753
        %v1269 = vunpack.c.l.bf16 %v754
        %v1270 = vunpack.c.h.bf16 %v754
        %v1271 = vunpack.c.l.bf16 %v755
        %v1272 = vunpack.c.h.bf16 %v755
        %v1273 = vunpack.c.l.bf16 %v756
        %v1274 = vunpack.c.h.bf16 %v756
        %v1275 = vunpack.c.l.bf16 %v757
        %v1276 = vunpack.c.h.bf16 %v757
        %v1277 = vunpack.c.l.bf16 %v758
        %v1278 = vunpack.c.h.bf16 %v758
        %v1279 = vunpack.c.l.bf16 %v759
        %v1280 = vunpack.c.h.bf16 %v759
        %v1281 = vunpack.c.l.bf16 %v760
        %v1282 = vunpack.c.h.bf16 %v760
        %v1283 = vunpack.c.l.bf16 %v761
        %v1284 = vunpack.c.h.bf16 %v761
        %v1285 = vunpack.c.l.bf16 %v762
        %v1286 = vunpack.c.h.bf16 %v762
        %v1287 = vunpack.c.l.bf16 %v763
        %v1288 = vunpack.c.h.bf16 %v763
        %v1289 = vunpack.c.l.bf16 %v764
        %v1290 = vunpack.c.h.bf16 %v764
        %v1291 = vunpack.c.l.bf16 %v765
        %v1292 = vunpack.c.h.bf16 %v765
        %v1293 = vunpack.c.l.bf16 %v766
        %v1294 = vunpack.c.h.bf16 %v766
        %v1295 = vunpack.c.l.bf16 %v767
        %v1296 = vunpack.c.h.bf16 %v767
        %v1297 = vunpack.c.l.bf16 %v768
        %v1298 = vunpack.c.h.bf16 %v768
        %v1299 = vunpack.c.l.bf16 %v769
        %v1300 = vunpack.c.h.bf16 %v769
        %v1301 = vunpack.c.l.bf16 %v770
        %v1302 = vunpack.c.h.bf16 %v770
        %v1303 = vunpack.c.l.bf16 %v771
        %v1304 = vunpack.c.h.bf16 %v771
        %v1305 = vunpack.c.l.bf16 %v772
        %v1306 = vunpack.c.h.bf16 %v772
        %v1307 = vunpack.c.l.bf16 %v773
        %v1308 = vunpack.c.h.bf16 %v773
        %v1309 = vunpack.c.l.bf16 %v774
        %v1310 = vunpack.c.h.bf16 %v774
        %v1311 = vunpack.c.l.bf16 %v775
        %v1312 = vunpack.c.h.bf16 %v775
        %v1313 = vunpack.c.l.bf16 %v776
        %v1314 = vunpack.c.h.bf16 %v776
        %v1315 = vunpack.c.l.bf16 %v777
        %v1316 = vunpack.c.h.bf16 %v777
        %v1317 = vunpack.c.l.bf16 %v778
        %v1318 = vunpack.c.h.bf16 %v778
        %v1319 = vunpack.c.l.bf16 %v779
        %v1320 = vunpack.c.h.bf16 %v779
        %v1321 = vunpack.c.l.bf16 %v780
        %v1322 = vunpack.c.h.bf16 %v780
        %v1323 = vunpack.c.l.bf16 %v781
        %v1324 = vunpack.c.h.bf16 %v781
        %v1325 = vunpack.c.l.bf16 %v782
        %v1326 = vunpack.c.h.bf16 %v782
        %v1327 = vunpack.c.l.bf16 %v783
        %v1328 = vunpack.c.h.bf16 %v783
        %v1329 = vunpack.c.l.bf16 %v784
        %v1330 = vunpack.c.h.bf16 %v784
        %v1331 = vunpack.c.l.bf16 %v785
        %v1332 = vunpack.c.h.bf16 %v785
        %v1333 = vunpack.c.l.bf16 %v786
        %v1334 = vunpack.c.h.bf16 %v786
        %v1335 = vunpack.c.l.bf16 %v787
        %v1336 = vunpack.c.h.bf16 %v787
        %v1337 = vunpack.c.l.bf16 %v788
        %v1338 = vunpack.c.h.bf16 %v788
        %v1339 = vunpack.c.l.bf16 %v789
        %v1340 = vunpack.c.h.bf16 %v789
        %v1341 = vunpack.c.l.bf16 %v790
        %v1342 = vunpack.c.h.bf16 %v790
        %v1343 = vunpack.c.l.bf16 %v791
        %v1344 = vunpack.c.h.bf16 %v791
        %v1345 = vunpack.c.l.bf16 %v792
        %v1346 = vunpack.c.h.bf16 %v792
        %v1347 = vunpack.c.l.bf16 %v793
        %v1348 = vunpack.c.h.bf16 %v793
        %v1349 = vunpack.c.l.bf16 %v794
        %v1350 = vunpack.c.h.bf16 %v794
        %v1351 = vunpack.c.l.bf16 %v795
        %v1352 = vunpack.c.h.bf16 %v795
        %v1353 = vunpack.c.l.bf16 %v796
        %v1354 = vunpack.c.h.bf16 %v796
        %v1355 = vunpack.c.l.bf16 %v797
        %v1356 = vunpack.c.h.bf16 %v797
        %v1357 = vunpack.c.l.bf16 %v798
        %v1358 = vunpack.c.h.bf16 %v798
        %v1359 = vunpack.c.l.bf16 %v799
        %v1360 = vunpack.c.h.bf16 %v799
        %v1361 = vunpack.c.l.bf16 %v800
        %v1362 = vunpack.c.h.bf16 %v800
        %v1363 = vunpack.c.l.bf16 %v801
        %v1364 = vunpack.c.h.bf16 %v801
        %v1365 = vunpack.c.l.bf16 %v802
        %v1366 = vunpack.c.h.bf16 %v802
        %v1367 = vunpack.c.l.bf16 %v803
        %v1368 = vunpack.c.h.bf16 %v803
        %v1369 = vunpack.c.l.bf16 %v804
        %v1370 = vunpack.c.h.bf16 %v804
        %v1371 = vunpack.c.l.bf16 %v805
        %v1372 = vunpack.c.h.bf16 %v805
        %v1373 = vunpack.c.l.bf16 %v806
        %v1374 = vunpack.c.h.bf16 %v806
        %v1375 = vunpack.c.l.bf16 %v807
        %v1376 = vunpack.c.h.bf16 %v807
        %v1377 = vunpack.c.l.bf16 %v808
        %v1378 = vunpack.c.h.bf16 %v808
        %v1379 = vunpack.c.l.bf16 %v809
        %v1380 = vunpack.c.h.bf16 %v809
        %v1381 = vunpack.c.l.bf16 %v810
        %v1382 = vunpack.c.h.bf16 %v810
        %vm1383 = vcmask 261120
        %v1385 = vsel %vm1383, %v811, 0
        %v1388 = vsel %vm1383, %v812, 0
        %v1391 = vsel %vm1383, %v813, 0
        %v1394 = vsel %vm1383, %v814, 0
        %v1397 = vsel %vm1383, %v815, 0
        %v1400 = vsel %vm1383, %v816, 0
        %v1403 = vsel %vm1383, %v817, 0
        %v1406 = vsel %vm1383, %v818, 0
        %v1409 = vsel %vm1383, %v819, 0
        %v1412 = vsel %vm1383, %v820, 0
        %v1415 = vsel %vm1383, %v821, 0
        %v1418 = vsel %vm1383, %v822, 0
        %1420 = vmatprep.subr.mxu0 0.0
        %1421 = vmatpush1.msra.mxu0 0.0
        %1422 = vmatprep.subr.mxu0 0.0
        %1423 = vmatpush1.msra.mxu0 0.0
        %1424 = vmatprep.subr.mxu0 0.0
        %1425 = vmatpush1.msra.mxu0 0.0
        %1426 = vmatprep.subr.mxu0 0.0
        %1427 = vmatpush1.msra.mxu0 0.0
        %1428 = vmatprep.subr.mxu0 0.0
        %1429 = vmatpush1.msra.mxu0 0.0
        %1430 = vmatprep.subr.mxu0 0.0
        %1431 = vmatpush1.msra.mxu0 0.0
        %1432 = vmatprep.subr.mxu0 0.0
        %1433 = vmatpush1.msra.mxu0 0.0
        %1434 = vmatprep.subr.mxu0 0.0
        %1435 = vmatpush1.msra.mxu0 0.0
        %1436 = vmatprep.subr.mxu0 0.0
        %1437 = vmatpush1.msra.mxu0 0.0
        %1438 = vmatprep.subr.mxu0 0.0
        %1439 = vmatpush1.msra.mxu0 0.0
        %1440 = vmatprep.subr.mxu0 0.0
        %1441 = vmatpush1.msra.mxu0 0.0
        %1442 = vmatprep.subr.mxu0 0.0
        %1443 = vmatpush1.msra.mxu0 0.0
        %1444 = vmatprep.subr.mxu0 %v552
        %1445 = vmatpush1.msra.mxu0 %v551
        %1446 = vmatprep.subr.mxu0 %v548
        %1447 = vmatpush1.msra.mxu0 %v547
        %1448 = vmatprep.subr.mxu0 %v544
        %1449 = vmatpush1.msra.mxu0 %v543
        %1450 = vmatprep.subr.mxu0 %v540
        %1451 = vmatpush1.msra.mxu0 %v539
        %1452 = vmatprep.subr.mxu0 0.0
        %1453 = vmatpush2.msra.mxu0 0.0
        %1454 = vmatprep.subr.mxu0 0.0
        %1455 = vmatpush2.msra.mxu0 0.0
        %1456 = vmatprep.subr.mxu0 0.0
        %1457 = vmatpush2.msra.mxu0 0.0
        %1458 = vmatprep.subr.mxu0 0.0
        %1459 = vmatpush2.msra.mxu0 0.0
        %1460 = vmatprep.subr.mxu0 0.0
        %1461 = vmatpush2.msra.mxu0 0.0
        %1462 = vmatprep.subr.mxu0 0.0
        %1463 = vmatpush2.msra.mxu0 0.0
        %1464 = vmatprep.subr.mxu0 0.0
        %1465 = vmatpush2.msra.mxu0 0.0
        %1466 = vmatprep.subr.mxu0 0.0
        %1467 = vmatpush2.msra.mxu0 0.0
        %1468 = vmatprep.subr.mxu0 0.0
        %1469 = vmatpush2.msra.mxu0 0.0
        %1470 = vmatprep.subr.mxu0 0.0
        %1471 = vmatpush2.msra.mxu0 0.0
        %1472 = vmatprep.subr.mxu0 0.0
        %1473 = vmatpush2.msra.mxu0 0.0
        %1474 = vmatprep.subr.mxu0 0.0
        %1475 = vmatpush2.msra.mxu0 0.0
        %1476 = vmatprep.subr.mxu0 0.0
        %1477 = vmatpush2.msra.mxu0 0.0
        %1478 = vmatprep.subr.mxu0 0.0
        %1479 = vmatpush2.msra.mxu0 0.0
        %1480 = vmatprep.subr.mxu0 0.0
        %1481 = vmatpush2.msra.mxu0 0.0
        %1482 = vmatprep.subr.mxu0 0.0
        %1483 = vmatpush2.msra.mxu0 0.0
        %1484 = vmatprep.mubr.f32.mxu0 0.0
        %1485 = vmatmul.mubr.f32.gmra.mxu0 %v1385
        %v1486 = vpop.f32.mrf.mxu0
        %v1487 = vadd.f32 0.0, %v1486
        %v1488 = vpop.f32.mrf.mxu0
        %v1489 = vadd.f32 0.0, %v1488
        %1490 = vmatprep.mubr.f32.mxu0 0.0
        %1491 = vmatmul.mubr.f32.gmra.mxu0 %v1388
        %v1492 = vpop.f32.mrf.mxu0
        %v1493 = vadd.f32 0.0, %v1492
        %v1494 = vpop.f32.mrf.mxu0
        %v1495 = vadd.f32 0.0, %v1494
        %1496 = vmatprep.mubr.f32.mxu0 0.0
        %1497 = vmatmul.mubr.f32.gmra.mxu0 %v1391
        %v1498 = vpop.f32.mrf.mxu0
        %v1499 = vadd.f32 0.0, %v1498
        %v1500 = vpop.f32.mrf.mxu0
        %v1501 = vadd.f32 0.0, %v1500
        %1502 = vmatprep.mubr.f32.mxu0 0.0
        %1503 = vmatmul.mubr.f32.gmra.mxu0 %v1394
        %v1504 = vpop.f32.mrf.mxu0
        %v1505 = vadd.f32 0.0, %v1504
        %v1506 = vpop.f32.mrf.mxu0
        %v1507 = vadd.f32 0.0, %v1506
        %1508 = vmatprep.mubr.f32.mxu0 0.0
        %1509 = vmatmul.mubr.f32.gmra.mxu0 %v1397
        %v1510 = vpop.f32.mrf.mxu0
        %v1511 = vadd.f32 0.0, %v1510
        %v1512 = vpop.f32.mrf.mxu0
        %v1513 = vadd.f32 0.0, %v1512
        %1514 = vmatprep.mubr.f32.mxu0 0.0
        %1515 = vmatmul.mubr.f32.gmra.mxu0 %v1400
        %v1516 = vpop.f32.mrf.mxu0
        %v1517 = vadd.f32 0.0, %v1516
        %v1518 = vpop.f32.mrf.mxu0
        %v1519 = vadd.f32 0.0, %v1518
        %1520 = vmatprep.mubr.f32.mxu0 0.0
        %1521 = vmatmul.mubr.f32.gmra.mxu0 %v1403
        %v1522 = vpop.f32.mrf.mxu0
        %v1523 = vadd.f32 0.0, %v1522
        %v1524 = vpop.f32.mrf.mxu0
        %v1525 = vadd.f32 0.0, %v1524
        %1526 = vmatprep.mubr.f32.mxu0 0.0
        %1527 = vmatmul.mubr.f32.gmra.mxu0 %v1406
        %v1528 = vpop.f32.mrf.mxu0
        %v1529 = vadd.f32 0.0, %v1528
        %v1530 = vpop.f32.mrf.mxu0
        %v1531 = vadd.f32 0.0, %v1530
        %1532 = vmatprep.mubr.f32.mxu0 0.0
        %1533 = vmatmul.mubr.f32.gmra.mxu0 %v1409
        %v1534 = vpop.f32.mrf.mxu0
        %v1535 = vadd.f32 0.0, %v1534
        %v1536 = vpop.f32.mrf.mxu0
        %v1537 = vadd.f32 0.0, %v1536
        %1538 = vmatprep.mubr.f32.mxu0 0.0
        %1539 = vmatmul.mubr.f32.gmra.mxu0 %v1412
        %v1540 = vpop.f32.mrf.mxu0
        %v1541 = vadd.f32 0.0, %v1540
        %v1542 = vpop.f32.mrf.mxu0
        %v1543 = vadd.f32 0.0, %v1542
        %1544 = vmatprep.mubr.f32.mxu0 0.0
        %1545 = vmatmul.mubr.f32.gmra.mxu0 %v1415
        %v1546 = vpop.f32.mrf.mxu0
        %v1547 = vadd.f32 0.0, %v1546
        %v1548 = vpop.f32.mrf.mxu0
        %v1549 = vadd.f32 0.0, %v1548
        %1550 = vmatprep.mubr.f32.mxu0 0.0
        %1551 = vmatmul.mubr.f32.gmra.mxu0 %v1418
        %v1552 = vpop.f32.mrf.mxu0
        %v1553 = vadd.f32 0.0, %v1552
        %v1554 = vpop.f32.mrf.mxu0
        %v1555 = vadd.f32 0.0, %v1554
        %1556 = vdwg.mxu0
        %1557 = vmatprep.subr.mxu0 0.0
        %1558 = vmatpush1.msra.mxu0 0.0
        %1559 = vmatprep.subr.mxu0 0.0
        %1560 = vmatpush1.msra.mxu0 0.0
        %1561 = vmatprep.subr.mxu0 0.0
        %1562 = vmatpush1.msra.mxu0 0.0
        %1563 = vmatprep.subr.mxu0 0.0
        %1564 = vmatpush1.msra.mxu0 0.0
        %1565 = vmatprep.subr.mxu0 0.0
        %1566 = vmatpush1.msra.mxu0 0.0
        %1567 = vmatprep.subr.mxu0 0.0
        %1568 = vmatpush1.msra.mxu0 0.0
        %1569 = vmatprep.subr.mxu0 0.0
        %1570 = vmatpush1.msra.mxu0 0.0
        %1571 = vmatprep.subr.mxu0 0.0
        %1572 = vmatpush1.msra.mxu0 0.0
        %1573 = vmatprep.subr.mxu0 0.0
        %1574 = vmatpush1.msra.mxu0 0.0
        %1575 = vmatprep.subr.mxu0 0.0
        %1576 = vmatpush1.msra.mxu0 0.0
        %1577 = vmatprep.subr.mxu0 0.0
        %1578 = vmatpush1.msra.mxu0 0.0
        %1579 = vmatprep.subr.mxu0 0.0
        %1580 = vmatpush1.msra.mxu0 0.0
        %1581 = vmatprep.subr.mxu0 %v554
        %1582 = vmatpush1.msra.mxu0 %v553
        %1583 = vmatprep.subr.mxu0 %v550
        %1584 = vmatpush1.msra.mxu0 %v549
        %1585 = vmatprep.subr.mxu0 %v546
        %1586 = vmatpush1.msra.mxu0 %v545
        %1587 = vmatprep.subr.mxu0 %v542
        %1588 = vmatpush1.msra.mxu0 %v541
        %1589 = vmatprep.subr.mxu0 0.0
        %1590 = vmatpush2.msra.mxu0 0.0
        %1591 = vmatprep.subr.mxu0 0.0
        %1592 = vmatpush2.msra.mxu0 0.0
        %1593 = vmatprep.subr.mxu0 0.0
        %1594 = vmatpush2.msra.mxu0 0.0
        %1595 = vmatprep.subr.mxu0 0.0
        %1596 = vmatpush2.msra.mxu0 0.0
        %1597 = vmatprep.subr.mxu0 0.0
        %1598 = vmatpush2.msra.mxu0 0.0
        %1599 = vmatprep.subr.mxu0 0.0
        %1600 = vmatpush2.msra.mxu0 0.0
        %1601 = vmatprep.subr.mxu0 0.0
        %1602 = vmatpush2.msra.mxu0 0.0
        %1603 = vmatprep.subr.mxu0 0.0
        %1604 = vmatpush2.msra.mxu0 0.0
        %1605 = vmatprep.subr.mxu0 0.0
        %1606 = vmatpush2.msra.mxu0 0.0
        %1607 = vmatprep.subr.mxu0 0.0
        %1608 = vmatpush2.msra.mxu0 0.0
        %1609 = vmatprep.subr.mxu0 0.0
        %1610 = vmatpush2.msra.mxu0 0.0
        %1611 = vmatprep.subr.mxu0 0.0
        %1612 = vmatpush2.msra.mxu0 0.0
        %1613 = vmatprep.subr.mxu0 0.0
        %1614 = vmatpush2.msra.mxu0 0.0
        %1615 = vmatprep.subr.mxu0 0.0
        %1616 = vmatpush2.msra.mxu0 0.0
        %1617 = vmatprep.subr.mxu0 0.0
        %1618 = vmatpush2.msra.mxu0 0.0
        %1619 = vmatprep.subr.mxu0 0.0
        %1620 = vmatpush2.msra.mxu0 0.0
        %1621 = vmatprep.mubr.f32.mxu0 0.0
        %1622 = vmatmul.mubr.f32.gmra.mxu0 %v1385
        %v1623 = vpop.f32.mrf.mxu0
        %v1624 = vadd.f32 0.0, %v1623
        %v1625 = vpop.f32.mrf.mxu0
        %v1626 = vadd.f32 0.0, %v1625
        %1627 = vmatprep.mubr.f32.mxu0 0.0
        %1628 = vmatmul.mubr.f32.gmra.mxu0 %v1388
        %v1629 = vpop.f32.mrf.mxu0
        %v1630 = vadd.f32 0.0, %v1629
        %v1631 = vpop.f32.mrf.mxu0
        %v1632 = vadd.f32 0.0, %v1631
        %1633 = vmatprep.mubr.f32.mxu0 0.0
        %1634 = vmatmul.mubr.f32.gmra.mxu0 %v1391
        %v1635 = vpop.f32.mrf.mxu0
        %v1636 = vadd.f32 0.0, %v1635
        %v1637 = vpop.f32.mrf.mxu0
        %v1638 = vadd.f32 0.0, %v1637
        %1639 = vmatprep.mubr.f32.mxu0 0.0
        %1640 = vmatmul.mubr.f32.gmra.mxu0 %v1394
        %v1641 = vpop.f32.mrf.mxu0
        %v1642 = vadd.f32 0.0, %v1641
        %v1643 = vpop.f32.mrf.mxu0
        %v1644 = vadd.f32 0.0, %v1643
        %1645 = vmatprep.mubr.f32.mxu0 0.0
        %1646 = vmatmul.mubr.f32.gmra.mxu0 %v1397
        %v1647 = vpop.f32.mrf.mxu0
        %v1648 = vadd.f32 0.0, %v1647
        %v1649 = vpop.f32.mrf.mxu0
        %v1650 = vadd.f32 0.0, %v1649
        %1651 = vmatprep.mubr.f32.mxu0 0.0
        %1652 = vmatmul.mubr.f32.gmra.mxu0 %v1400
        %v1653 = vpop.f32.mrf.mxu0
        %v1654 = vadd.f32 0.0, %v1653
        %v1655 = vpop.f32.mrf.mxu0
        %v1656 = vadd.f32 0.0, %v1655
        %1657 = vmatprep.mubr.f32.mxu0 0.0
        %1658 = vmatmul.mubr.f32.gmra.mxu0 %v1403
        %v1659 = vpop.f32.mrf.mxu0
        %v1660 = vadd.f32 0.0, %v1659
        %v1661 = vpop.f32.mrf.mxu0
        %v1662 = vadd.f32 0.0, %v1661
        %1663 = vmatprep.mubr.f32.mxu0 0.0
        %1664 = vmatmul.mubr.f32.gmra.mxu0 %v1406
        %v1665 = vpop.f32.mrf.mxu0
        %v1666 = vadd.f32 0.0, %v1665
        %v1667 = vpop.f32.mrf.mxu0
        %v1668 = vadd.f32 0.0, %v1667
        %1669 = vmatprep.mubr.f32.mxu0 0.0
        %1670 = vmatmul.mubr.f32.gmra.mxu0 %v1409
        %v1671 = vpop.f32.mrf.mxu0
        %v1672 = vadd.f32 0.0, %v1671
        %v1673 = vpop.f32.mrf.mxu0
        %v1674 = vadd.f32 0.0, %v1673
        %1675 = vmatprep.mubr.f32.mxu0 0.0
        %1676 = vmatmul.mubr.f32.gmra.mxu0 %v1412
        %v1677 = vpop.f32.mrf.mxu0
        %v1678 = vadd.f32 0.0, %v1677
        %v1679 = vpop.f32.mrf.mxu0
        %v1680 = vadd.f32 0.0, %v1679
        %1681 = vmatprep.mubr.f32.mxu0 0.0
        %1682 = vmatmul.mubr.f32.gmra.mxu0 %v1415
        %v1683 = vpop.f32.mrf.mxu0
        %v1684 = vadd.f32 0.0, %v1683
        %v1685 = vpop.f32.mrf.mxu0
        %v1686 = vadd.f32 0.0, %v1685
        %1687 = vmatprep.mubr.f32.mxu0 0.0
        %1688 = vmatmul.mubr.f32.gmra.mxu0 %v1418
        %v1689 = vpop.f32.mrf.mxu0
        %v1690 = vadd.f32 0.0, %v1689
        %v1691 = vpop.f32.mrf.mxu0
        %v1692 = vadd.f32 0.0, %v1691
        %1693 = vdwg.mxu0
        %v1694 = vmul.f32 %v1511, %v1535
        %v1695 = vmul.f32 %v1513, %v1537
        %v1696 = vmul.f32 %v1648, %v1672
        %v1697 = vmul.f32 %v1650, %v1674
        %v1698 = vmul.f32 %v1517, %v1541
        %v1699 = vmul.f32 %v1519, %v1543
        %v1700 = vmul.f32 %v1654, %v1678
        %v1701 = vmul.f32 %v1656, %v1680
        %v1702 = vmul.f32 %v1523, %v1547
        %v1703 = vmul.f32 %v1525, %v1549
        %v1704 = vmul.f32 %v1660, %v1684
        %v1705 = vmul.f32 %v1662, %v1686
        %v1706 = vmul.f32 %v1529, %v1553
        %v1707 = vmul.f32 %v1531, %v1555
        %v1708 = vmul.f32 %v1666, %v1690
        %v1709 = vmul.f32 %v1668, %v1692
        %1710 = vmatprep.subr.mxu0 %v932
        %1711 = vmatpush1.msra.mxu0 %v931
        %1712 = vmatprep.subr.mxu0 %v928
        %1713 = vmatpush1.msra.mxu0 %v927
        %1714 = vmatprep.subr.mxu0 %v924
        %1715 = vmatpush1.msra.mxu0 %v923
        %1716 = vmatprep.subr.mxu0 %v920
        %1717 = vmatpush1.msra.mxu0 %v919
        %1718 = vmatprep.subr.mxu0 %v916
        %1719 = vmatpush1.msra.mxu0 %v915
        %1720 = vmatprep.subr.mxu0 %v912
        %1721 = vmatpush1.msra.mxu0 %v911
        %1722 = vmatprep.subr.mxu0 %v908
        %1723 = vmatpush1.msra.mxu0 %v907
        %1724 = vmatprep.subr.mxu0 %v904
        %1725 = vmatpush1.msra.mxu0 %v903
        %1726 = vmatprep.subr.mxu0 %v900
        %1727 = vmatpush1.msra.mxu0 %v899
        %1728 = vmatprep.subr.mxu0 %v896
        %1729 = vmatpush1.msra.mxu0 %v895
        %1730 = vmatprep.subr.mxu0 %v892
        %1731 = vmatpush1.msra.mxu0 %v891
        %1732 = vmatprep.subr.mxu0 %v888
        %1733 = vmatpush1.msra.mxu0 %v887
        %1734 = vmatprep.subr.mxu0 %v884
        %1735 = vmatpush1.msra.mxu0 %v883
        %1736 = vmatprep.subr.mxu0 %v880
        %1737 = vmatpush1.msra.mxu0 %v879
        %1738 = vmatprep.subr.mxu0 %v876
        %1739 = vmatpush1.msra.mxu0 %v875
        %1740 = vmatprep.subr.mxu0 %v872
        %1741 = vmatpush1.msra.mxu0 %v871
        %1742 = vmatprep.subr.mxu0 %v996
        %1743 = vmatpush2.msra.mxu0 %v995
        %1744 = vmatprep.subr.mxu0 %v992
        %1745 = vmatpush2.msra.mxu0 %v991
        %1746 = vmatprep.subr.mxu0 %v988
        %1747 = vmatpush2.msra.mxu0 %v987
        %1748 = vmatprep.subr.mxu0 %v984
        %1749 = vmatpush2.msra.mxu0 %v983
        %1750 = vmatprep.subr.mxu0 %v980
        %1751 = vmatpush2.msra.mxu0 %v979
        %1752 = vmatprep.subr.mxu0 %v976
        %1753 = vmatpush2.msra.mxu0 %v975
        %1754 = vmatprep.subr.mxu0 %v972
        %1755 = vmatpush2.msra.mxu0 %v971
        %1756 = vmatprep.subr.mxu0 %v968
        %1757 = vmatpush2.msra.mxu0 %v967
        %1758 = vmatprep.subr.mxu0 %v964
        %1759 = vmatpush2.msra.mxu0 %v963
        %1760 = vmatprep.subr.mxu0 %v960
        %1761 = vmatpush2.msra.mxu0 %v959
        %1762 = vmatprep.subr.mxu0 %v956
        %1763 = vmatpush2.msra.mxu0 %v955
        %1764 = vmatprep.subr.mxu0 %v952
        %1765 = vmatpush2.msra.mxu0 %v951
        %1766 = vmatprep.subr.mxu0 %v948
        %1767 = vmatpush2.msra.mxu0 %v947
        %1768 = vmatprep.subr.mxu0 %v944
        %1769 = vmatpush2.msra.mxu0 %v943
        %1770 = vmatprep.subr.mxu0 %v940
        %1771 = vmatpush2.msra.mxu0 %v939
        %1772 = vmatprep.subr.mxu0 %v936
        %1773 = vmatpush2.msra.mxu0 %v935
        %1774 = vmatprep.mubr.f32.mxu0 %v1695
        %1775 = vmatmul.mubr.f32.gmra.mxu0 %v1694
        %v1776 = vpop.f32.mrf.mxu0
        %v1777 = vadd.f32 0.0, %v1776
        %v1778 = vpop.f32.mrf.mxu0
        %v1779 = vadd.f32 0.0, %v1778
        %1780 = vmatprep.mubr.f32.mxu0 %v1699
        %1781 = vmatmul.mubr.f32.gmra.mxu0 %v1698
        %v1782 = vpop.f32.mrf.mxu0
        %v1783 = vadd.f32 0.0, %v1782
        %v1784 = vpop.f32.mrf.mxu0
        %v1785 = vadd.f32 0.0, %v1784
        %1786 = vmatprep.mubr.f32.mxu0 %v1703
        %1787 = vmatmul.mubr.f32.gmra.mxu0 %v1702
        %v1788 = vpop.f32.mrf.mxu0
        %v1789 = vadd.f32 0.0, %v1788
        %v1790 = vpop.f32.mrf.mxu0
        %v1791 = vadd.f32 0.0, %v1790
        %1792 = vmatprep.mubr.f32.mxu0 %v1707
        %1793 = vmatmul.mubr.f32.gmra.mxu0 %v1706
        %v1794 = vpop.f32.mrf.mxu0
        %v1795 = vadd.f32 0.0, %v1794
        %v1796 = vpop.f32.mrf.mxu0
        %v1797 = vadd.f32 0.0, %v1796
        %1798 = vmatprep.mubr.f32.mxu0 %v1513
        %1799 = vmatmul.mubr.f32.gmra.mxu0 %v1511
        %v1800 = vpop.f32.mrf.mxu0
        %v1801 = vadd.f32 0.0, %v1800
        %v1802 = vpop.f32.mrf.mxu0
        %v1803 = vadd.f32 0.0, %v1802
        %1804 = vmatprep.mubr.f32.mxu0 %v1519
        %1805 = vmatmul.mubr.f32.gmra.mxu0 %v1517
        %v1806 = vpop.f32.mrf.mxu0
        %v1807 = vadd.f32 0.0, %v1806
        %v1808 = vpop.f32.mrf.mxu0
        %v1809 = vadd.f32 0.0, %v1808
        %1810 = vmatprep.mubr.f32.mxu0 %v1525
        %1811 = vmatmul.mubr.f32.gmra.mxu0 %v1523
        %v1812 = vpop.f32.mrf.mxu0
        %v1813 = vadd.f32 0.0, %v1812
        %v1814 = vpop.f32.mrf.mxu0
        %v1815 = vadd.f32 0.0, %v1814
        %1816 = vmatprep.mubr.f32.mxu0 %v1531
        %1817 = vmatmul.mubr.f32.gmra.mxu0 %v1529
        %v1818 = vpop.f32.mrf.mxu0
        %v1819 = vadd.f32 0.0, %v1818
        %v1820 = vpop.f32.mrf.mxu0
        %v1821 = vadd.f32 0.0, %v1820
        %1822 = vdwg.mxu0
        %1823 = vmatprep.subr.mxu0 %v1060
        %1824 = vmatpush1.msra.mxu0 %v1059
        %1825 = vmatprep.subr.mxu0 %v1056
        %1826 = vmatpush1.msra.mxu0 %v1055
        %1827 = vmatprep.subr.mxu0 %v1052
        %1828 = vmatpush1.msra.mxu0 %v1051
        %1829 = vmatprep.subr.mxu0 %v1048
        %1830 = vmatpush1.msra.mxu0 %v1047
        %1831 = vmatprep.subr.mxu0 %v1044
        %1832 = vmatpush1.msra.mxu0 %v1043
        %1833 = vmatprep.subr.mxu0 %v1040
        %1834 = vmatpush1.msra.mxu0 %v1039
        %1835 = vmatprep.subr.mxu0 %v1036
        %1836 = vmatpush1.msra.mxu0 %v1035
        %1837 = vmatprep.subr.mxu0 %v1032
        %1838 = vmatpush1.msra.mxu0 %v1031
        %1839 = vmatprep.subr.mxu0 %v1028
        %1840 = vmatpush1.msra.mxu0 %v1027
        %1841 = vmatprep.subr.mxu0 %v1024
        %1842 = vmatpush1.msra.mxu0 %v1023
        %1843 = vmatprep.subr.mxu0 %v1020
        %1844 = vmatpush1.msra.mxu0 %v1019
        %1845 = vmatprep.subr.mxu0 %v1016
        %1846 = vmatpush1.msra.mxu0 %v1015
        %1847 = vmatprep.subr.mxu0 %v1012
        %1848 = vmatpush1.msra.mxu0 %v1011
        %1849 = vmatprep.subr.mxu0 %v1008
        %1850 = vmatpush1.msra.mxu0 %v1007
        %1851 = vmatprep.subr.mxu0 %v1004
        %1852 = vmatpush1.msra.mxu0 %v1003
        %1853 = vmatprep.subr.mxu0 %v1000
        %1854 = vmatpush1.msra.mxu0 %v999
        %1855 = vmatprep.subr.mxu0 %v1124
        %1856 = vmatpush2.msra.mxu0 %v1123
        %1857 = vmatprep.subr.mxu0 %v1120
        %1858 = vmatpush2.msra.mxu0 %v1119
        %1859 = vmatprep.subr.mxu0 %v1116
        %1860 = vmatpush2.msra.mxu0 %v1115
        %1861 = vmatprep.subr.mxu0 %v1112
        %1862 = vmatpush2.msra.mxu0 %v1111
        %1863 = vmatprep.subr.mxu0 %v1108
        %1864 = vmatpush2.msra.mxu0 %v1107
        %1865 = vmatprep.subr.mxu0 %v1104
        %1866 = vmatpush2.msra.mxu0 %v1103
        %1867 = vmatprep.subr.mxu0 %v1100
        %1868 = vmatpush2.msra.mxu0 %v1099
        %1869 = vmatprep.subr.mxu0 %v1096
        %1870 = vmatpush2.msra.mxu0 %v1095
        %1871 = vmatprep.subr.mxu0 %v1092
        %1872 = vmatpush2.msra.mxu0 %v1091
        %1873 = vmatprep.subr.mxu0 %v1088
        %1874 = vmatpush2.msra.mxu0 %v1087
        %1875 = vmatprep.subr.mxu0 %v1084
        %1876 = vmatpush2.msra.mxu0 %v1083
        %1877 = vmatprep.subr.mxu0 %v1080
        %1878 = vmatpush2.msra.mxu0 %v1079
        %1879 = vmatprep.subr.mxu0 %v1076
        %1880 = vmatpush2.msra.mxu0 %v1075
        %1881 = vmatprep.subr.mxu0 %v1072
        %1882 = vmatpush2.msra.mxu0 %v1071
        %1883 = vmatprep.subr.mxu0 %v1068
        %1884 = vmatpush2.msra.mxu0 %v1067
        %1885 = vmatprep.subr.mxu0 %v1064
        %1886 = vmatpush2.msra.mxu0 %v1063
        %1887 = vmatprep.mubr.f32.mxu0 %v1697
        %1888 = vmatmul.mubr.f32.gmra.mxu0 %v1696
        %v1889 = vpop.f32.mrf.mxu0
        %v1890 = vadd.f32 %v1777, %v1889
        %v1891 = vpop.f32.mrf.mxu0
        %v1892 = vadd.f32 %v1779, %v1891
        %1893 = vmatprep.mubr.f32.mxu0 %v1701
        %1894 = vmatmul.mubr.f32.gmra.mxu0 %v1700
        %v1895 = vpop.f32.mrf.mxu0
        %v1896 = vadd.f32 %v1783, %v1895
        %v1897 = vpop.f32.mrf.mxu0
        %v1898 = vadd.f32 %v1785, %v1897
        %1899 = vmatprep.mubr.f32.mxu0 %v1705
        %1900 = vmatmul.mubr.f32.gmra.mxu0 %v1704
        %v1901 = vpop.f32.mrf.mxu0
        %v1902 = vadd.f32 %v1789, %v1901
        %v1903 = vpop.f32.mrf.mxu0
        %v1904 = vadd.f32 %v1791, %v1903
        %1905 = vmatprep.mubr.f32.mxu0 %v1709
        %1906 = vmatmul.mubr.f32.gmra.mxu0 %v1708
        %v1907 = vpop.f32.mrf.mxu0
        %v1908 = vadd.f32 %v1795, %v1907
        %v1909 = vpop.f32.mrf.mxu0
        %v1910 = vadd.f32 %v1797, %v1909
        %1911 = vmatprep.mubr.f32.mxu0 %v1650
        %1912 = vmatmul.mubr.f32.gmra.mxu0 %v1648
        %v1913 = vpop.f32.mrf.mxu0
        %v1914 = vadd.f32 %v1801, %v1913
        %v1915 = vpop.f32.mrf.mxu0
        %v1916 = vadd.f32 %v1803, %v1915
        %1917 = vmatprep.mubr.f32.mxu0 %v1656
        %1918 = vmatmul.mubr.f32.gmra.mxu0 %v1654
        %v1919 = vpop.f32.mrf.mxu0
        %v1920 = vadd.f32 %v1807, %v1919
        %v1921 = vpop.f32.mrf.mxu0
        %v1922 = vadd.f32 %v1809, %v1921
        %1923 = vmatprep.mubr.f32.mxu0 %v1662
        %1924 = vmatmul.mubr.f32.gmra.mxu0 %v1660
        %v1925 = vpop.f32.mrf.mxu0
        %v1926 = vadd.f32 %v1813, %v1925
        %v1927 = vpop.f32.mrf.mxu0
        %v1928 = vadd.f32 %v1815, %v1927
        %1929 = vmatprep.mubr.f32.mxu0 %v1668
        %1930 = vmatmul.mubr.f32.gmra.mxu0 %v1666
        %v1931 = vpop.f32.mrf.mxu0
        %v1932 = vadd.f32 %v1819, %v1931
        %v1933 = vpop.f32.mrf.mxu0
        %v1934 = vadd.f32 %v1821, %v1933
        %1935 = vdwg.mxu0
        %1936 = vmatprep.subr.mxu0 %v934
        %1937 = vmatpush1.msra.mxu0 %v933
        %1938 = vmatprep.subr.mxu0 %v930
        %1939 = vmatpush1.msra.mxu0 %v929
        %1940 = vmatprep.subr.mxu0 %v926
        %1941 = vmatpush1.msra.mxu0 %v925
        %1942 = vmatprep.subr.mxu0 %v922
        %1943 = vmatpush1.msra.mxu0 %v921
        %1944 = vmatprep.subr.mxu0 %v918
        %1945 = vmatpush1.msra.mxu0 %v917
        %1946 = vmatprep.subr.mxu0 %v914
        %1947 = vmatpush1.msra.mxu0 %v913
        %1948 = vmatprep.subr.mxu0 %v910
        %1949 = vmatpush1.msra.mxu0 %v909
        %1950 = vmatprep.subr.mxu0 %v906
        %1951 = vmatpush1.msra.mxu0 %v905
        %1952 = vmatprep.subr.mxu0 %v902
        %1953 = vmatpush1.msra.mxu0 %v901
        %1954 = vmatprep.subr.mxu0 %v898
        %1955 = vmatpush1.msra.mxu0 %v897
        %1956 = vmatprep.subr.mxu0 %v894
        %1957 = vmatpush1.msra.mxu0 %v893
        %1958 = vmatprep.subr.mxu0 %v890
        %1959 = vmatpush1.msra.mxu0 %v889
        %1960 = vmatprep.subr.mxu0 %v886
        %1961 = vmatpush1.msra.mxu0 %v885
        %1962 = vmatprep.subr.mxu0 %v882
        %1963 = vmatpush1.msra.mxu0 %v881
        %1964 = vmatprep.subr.mxu0 %v878
        %1965 = vmatpush1.msra.mxu0 %v877
        %1966 = vmatprep.subr.mxu0 %v874
        %1967 = vmatpush1.msra.mxu0 %v873
        %1968 = vmatprep.subr.mxu0 %v998
        %1969 = vmatpush2.msra.mxu0 %v997
        %1970 = vmatprep.subr.mxu0 %v994
        %1971 = vmatpush2.msra.mxu0 %v993
        %1972 = vmatprep.subr.mxu0 %v990
        %1973 = vmatpush2.msra.mxu0 %v989
        %1974 = vmatprep.subr.mxu0 %v986
        %1975 = vmatpush2.msra.mxu0 %v985
        %1976 = vmatprep.subr.mxu0 %v982
        %1977 = vmatpush2.msra.mxu0 %v981
        %1978 = vmatprep.subr.mxu0 %v978
        %1979 = vmatpush2.msra.mxu0 %v977
        %1980 = vmatprep.subr.mxu0 %v974
        %1981 = vmatpush2.msra.mxu0 %v973
        %1982 = vmatprep.subr.mxu0 %v970
        %1983 = vmatpush2.msra.mxu0 %v969
        %1984 = vmatprep.subr.mxu0 %v966
        %1985 = vmatpush2.msra.mxu0 %v965
        %1986 = vmatprep.subr.mxu0 %v962
        %1987 = vmatpush2.msra.mxu0 %v961
        %1988 = vmatprep.subr.mxu0 %v958
        %1989 = vmatpush2.msra.mxu0 %v957
        %1990 = vmatprep.subr.mxu0 %v954
        %1991 = vmatpush2.msra.mxu0 %v953
        %1992 = vmatprep.subr.mxu0 %v950
        %1993 = vmatpush2.msra.mxu0 %v949
        %1994 = vmatprep.subr.mxu0 %v946
        %1995 = vmatpush2.msra.mxu0 %v945
        %1996 = vmatprep.subr.mxu0 %v942
        %1997 = vmatpush2.msra.mxu0 %v941
        %1998 = vmatprep.subr.mxu0 %v938
        %1999 = vmatpush2.msra.mxu0 %v937
        %2000 = vmatprep.mubr.f32.mxu0 %v1695
        %2001 = vmatmul.mubr.f32.gmra.mxu0 %v1694
        %v2002 = vpop.f32.mrf.mxu0
        %v2003 = vadd.f32 0.0, %v2002
        %v2004 = vpop.f32.mrf.mxu0
        %v2005 = vadd.f32 0.0, %v2004
        %2006 = vmatprep.mubr.f32.mxu0 %v1699
        %2007 = vmatmul.mubr.f32.gmra.mxu0 %v1698
        %v2008 = vpop.f32.mrf.mxu0
        %v2009 = vadd.f32 0.0, %v2008
        %v2010 = vpop.f32.mrf.mxu0
        %v2011 = vadd.f32 0.0, %v2010
        %2012 = vmatprep.mubr.f32.mxu0 %v1703
        %2013 = vmatmul.mubr.f32.gmra.mxu0 %v1702
        %v2014 = vpop.f32.mrf.mxu0
        %v2015 = vadd.f32 0.0, %v2014
        %v2016 = vpop.f32.mrf.mxu0
        %v2017 = vadd.f32 0.0, %v2016
        %2018 = vmatprep.mubr.f32.mxu0 %v1707
        %2019 = vmatmul.mubr.f32.gmra.mxu0 %v1706
        %v2020 = vpop.f32.mrf.mxu0
        %v2021 = vadd.f32 0.0, %v2020
        %v2022 = vpop.f32.mrf.mxu0
        %v2023 = vadd.f32 0.0, %v2022
        %2024 = vmatprep.mubr.f32.mxu0 %v1513
        %2025 = vmatmul.mubr.f32.gmra.mxu0 %v1511
        %v2026 = vpop.f32.mrf.mxu0
        %v2027 = vadd.f32 0.0, %v2026
        %v2028 = vpop.f32.mrf.mxu0
        %v2029 = vadd.f32 0.0, %v2028
        %2030 = vmatprep.mubr.f32.mxu0 %v1519
        %2031 = vmatmul.mubr.f32.gmra.mxu0 %v1517
        %v2032 = vpop.f32.mrf.mxu0
        %v2033 = vadd.f32 0.0, %v2032
        %v2034 = vpop.f32.mrf.mxu0
        %v2035 = vadd.f32 0.0, %v2034
        %2036 = vmatprep.mubr.f32.mxu0 %v1525
        %2037 = vmatmul.mubr.f32.gmra.mxu0 %v1523
        %v2038 = vpop.f32.mrf.mxu0
        %v2039 = vadd.f32 0.0, %v2038
        %v2040 = vpop.f32.mrf.mxu0
        %v2041 = vadd.f32 0.0, %v2040
        %2042 = vmatprep.mubr.f32.mxu0 %v1531
        %2043 = vmatmul.mubr.f32.gmra.mxu0 %v1529
        %v2044 = vpop.f32.mrf.mxu0
        %v2045 = vadd.f32 0.0, %v2044
        %v2046 = vpop.f32.mrf.mxu0
        %v2047 = vadd.f32 0.0, %v2046
        %2048 = vdwg.mxu0
        %2049 = vmatprep.subr.mxu0 %v1062
        %2050 = vmatpush1.msra.mxu0 %v1061
        %2051 = vmatprep.subr.mxu0 %v1058
        %2052 = vmatpush1.msra.mxu0 %v1057
        %2053 = vmatprep.subr.mxu0 %v1054
        %2054 = vmatpush1.msra.mxu0 %v1053
        %2055 = vmatprep.subr.mxu0 %v1050
        %2056 = vmatpush1.msra.mxu0 %v1049
        %2057 = vmatprep.subr.mxu0 %v1046
        %2058 = vmatpush1.msra.mxu0 %v1045
        %2059 = vmatprep.subr.mxu0 %v1042
        %2060 = vmatpush1.msra.mxu0 %v1041
        %2061 = vmatprep.subr.mxu0 %v1038
        %2062 = vmatpush1.msra.mxu0 %v1037
        %2063 = vmatprep.subr.mxu0 %v1034
        %2064 = vmatpush1.msra.mxu0 %v1033
        %2065 = vmatprep.subr.mxu0 %v1030
        %2066 = vmatpush1.msra.mxu0 %v1029
        %2067 = vmatprep.subr.mxu0 %v1026
        %2068 = vmatpush1.msra.mxu0 %v1025
        %2069 = vmatprep.subr.mxu0 %v1022
        %2070 = vmatpush1.msra.mxu0 %v1021
        %2071 = vmatprep.subr.mxu0 %v1018
        %2072 = vmatpush1.msra.mxu0 %v1017
        %2073 = vmatprep.subr.mxu0 %v1014
        %2074 = vmatpush1.msra.mxu0 %v1013
        %2075 = vmatprep.subr.mxu0 %v1010
        %2076 = vmatpush1.msra.mxu0 %v1009
        %2077 = vmatprep.subr.mxu0 %v1006
        %2078 = vmatpush1.msra.mxu0 %v1005
        %2079 = vmatprep.subr.mxu0 %v1002
        %2080 = vmatpush1.msra.mxu0 %v1001
        %2081 = vmatprep.subr.mxu0 %v1126
        %2082 = vmatpush2.msra.mxu0 %v1125
        %2083 = vmatprep.subr.mxu0 %v1122
        %2084 = vmatpush2.msra.mxu0 %v1121
        %2085 = vmatprep.subr.mxu0 %v1118
        %2086 = vmatpush2.msra.mxu0 %v1117
        %2087 = vmatprep.subr.mxu0 %v1114
        %2088 = vmatpush2.msra.mxu0 %v1113
        %2089 = vmatprep.subr.mxu0 %v1110
        %2090 = vmatpush2.msra.mxu0 %v1109
        %2091 = vmatprep.subr.mxu0 %v1106
        %2092 = vmatpush2.msra.mxu0 %v1105
        %2093 = vmatprep.subr.mxu0 %v1102
        %2094 = vmatpush2.msra.mxu0 %v1101
        %2095 = vmatprep.subr.mxu0 %v1098
        %2096 = vmatpush2.msra.mxu0 %v1097
        %2097 = vmatprep.subr.mxu0 %v1094
        %2098 = vmatpush2.msra.mxu0 %v1093
        %2099 = vmatprep.subr.mxu0 %v1090
        %2100 = vmatpush2.msra.mxu0 %v1089
        %2101 = vmatprep.subr.mxu0 %v1086
        %2102 = vmatpush2.msra.mxu0 %v1085
        %2103 = vmatprep.subr.mxu0 %v1082
        %2104 = vmatpush2.msra.mxu0 %v1081
        %2105 = vmatprep.subr.mxu0 %v1078
        %2106 = vmatpush2.msra.mxu0 %v1077
        %2107 = vmatprep.subr.mxu0 %v1074
        %2108 = vmatpush2.msra.mxu0 %v1073
        %2109 = vmatprep.subr.mxu0 %v1070
        %2110 = vmatpush2.msra.mxu0 %v1069
        %2111 = vmatprep.subr.mxu0 %v1066
        %2112 = vmatpush2.msra.mxu0 %v1065
        %2113 = vmatprep.mubr.f32.mxu0 %v1697
        %2114 = vmatmul.mubr.f32.gmra.mxu0 %v1696
        %v2115 = vpop.f32.mrf.mxu0
        %v2116 = vadd.f32 %v2003, %v2115
        %v2117 = vpop.f32.mrf.mxu0
        %v2118 = vadd.f32 %v2005, %v2117
        %2119 = vmatprep.mubr.f32.mxu0 %v1701
        %2120 = vmatmul.mubr.f32.gmra.mxu0 %v1700
        %v2121 = vpop.f32.mrf.mxu0
        %v2122 = vadd.f32 %v2009, %v2121
        %v2123 = vpop.f32.mrf.mxu0
        %v2124 = vadd.f32 %v2011, %v2123
        %2125 = vmatprep.mubr.f32.mxu0 %v1705
        %2126 = vmatmul.mubr.f32.gmra.mxu0 %v1704
        %v2127 = vpop.f32.mrf.mxu0
        %v2128 = vadd.f32 %v2015, %v2127
        %v2129 = vpop.f32.mrf.mxu0
        %v2130 = vadd.f32 %v2017, %v2129
        %2131 = vmatprep.mubr.f32.mxu0 %v1709
        %2132 = vmatmul.mubr.f32.gmra.mxu0 %v1708
        %v2133 = vpop.f32.mrf.mxu0
        %v2134 = vadd.f32 %v2021, %v2133
        %v2135 = vpop.f32.mrf.mxu0
        %v2136 = vadd.f32 %v2023, %v2135
        %2137 = vmatprep.mubr.f32.mxu0 %v1650
        %2138 = vmatmul.mubr.f32.gmra.mxu0 %v1648
        %v2139 = vpop.f32.mrf.mxu0
        %v2140 = vadd.f32 %v2027, %v2139
        %v2141 = vpop.f32.mrf.mxu0
        %v2142 = vadd.f32 %v2029, %v2141
        %2143 = vmatprep.mubr.f32.mxu0 %v1656
        %2144 = vmatmul.mubr.f32.gmra.mxu0 %v1654
        %v2145 = vpop.f32.mrf.mxu0
        %v2146 = vadd.f32 %v2033, %v2145
        %v2147 = vpop.f32.mrf.mxu0
        %v2148 = vadd.f32 %v2035, %v2147
        %2149 = vmatprep.mubr.f32.mxu0 %v1662
        %2150 = vmatmul.mubr.f32.gmra.mxu0 %v1660
        %v2151 = vpop.f32.mrf.mxu0
        %v2152 = vadd.f32 %v2039, %v2151
        %v2153 = vpop.f32.mrf.mxu0
        %v2154 = vadd.f32 %v2041, %v2153
        %2155 = vmatprep.mubr.f32.mxu0 %v1668
        %2156 = vmatmul.mubr.f32.gmra.mxu0 %v1666
        %v2157 = vpop.f32.mrf.mxu0
        %v2158 = vadd.f32 %v2045, %v2157
        %v2159 = vpop.f32.mrf.mxu0
        %v2160 = vadd.f32 %v2047, %v2159
        %2161 = vdwg.mxu0
        %v2162 = vmul.f32 %v1487, %v1890
        %v2163 = vmul.f32 %v1489, %v1892
        %v2164 = vmul.f32 %v1624, %v2116
        %v2165 = vmul.f32 %v1626, %v2118
        %v2166 = vmul.f32 %v1493, %v1896
        %v2167 = vmul.f32 %v1495, %v1898
        %v2168 = vmul.f32 %v1630, %v2122
        %v2169 = vmul.f32 %v1632, %v2124
        %v2170 = vmul.f32 %v1499, %v1902
        %v2171 = vmul.f32 %v1501, %v1904
        %v2172 = vmul.f32 %v1636, %v2128
        %v2173 = vmul.f32 %v1638, %v2130
        %v2174 = vmul.f32 %v1505, %v1908
        %v2175 = vmul.f32 %v1507, %v1910
        %v2176 = vmul.f32 %v1642, %v2134
        %v2177 = vmul.f32 %v1644, %v2136
        %v2178 = vmul.f32 %v1487, %v1914
        %v2179 = vmul.f32 %v1489, %v1916
        %v2180 = vmul.f32 %v1624, %v2140
        %v2181 = vmul.f32 %v1626, %v2142
        %v2182 = vmul.f32 %v1493, %v1920
        %v2183 = vmul.f32 %v1495, %v1922
        %v2184 = vmul.f32 %v1630, %v2146
        %v2185 = vmul.f32 %v1632, %v2148
        %v2186 = vmul.f32 %v1499, %v1926
        %v2187 = vmul.f32 %v1501, %v1928
        %v2188 = vmul.f32 %v1636, %v2152
        %v2189 = vmul.f32 %v1638, %v2154
        %v2190 = vmul.f32 %v1505, %v1932
        %v2191 = vmul.f32 %v1507, %v1934
        %v2192 = vmul.f32 %v1642, %v2158
        %v2193 = vmul.f32 %v1644, %v2160
        %v2194 = vadd.f32 %v2178, 1e-06
        %v2195 = vadd.f32 %v2179, 1e-06
        %v2196 = vadd.f32 %v2180, 1e-06
        %v2197 = vadd.f32 %v2181, 1e-06
        %v2198 = vadd.f32 %v2182, 1e-06
        %v2199 = vadd.f32 %v2183, 1e-06
        %v2200 = vadd.f32 %v2184, 1e-06
        %v2201 = vadd.f32 %v2185, 1e-06
        %v2202 = vadd.f32 %v2186, 1e-06
        %v2203 = vadd.f32 %v2187, 1e-06
        %v2204 = vadd.f32 %v2188, 1e-06
        %v2205 = vadd.f32 %v2189, 1e-06
        %v2206 = vadd.f32 %v2190, 1e-06
        %v2207 = vadd.f32 %v2191, 1e-06
        %v2208 = vadd.f32 %v2192, 1e-06
        %v2209 = vadd.f32 %v2193, 1e-06
        %v2210 = vrcp.pop %v2194
        %v2211 = vmul.f32 %v2162, %v2210
        %v2212 = vrcp.pop %v2195
        %v2213 = vmul.f32 %v2163, %v2212
        %v2214 = vrcp.pop %v2196
        %v2215 = vmul.f32 %v2164, %v2214
        %v2216 = vrcp.pop %v2197
        %v2217 = vmul.f32 %v2165, %v2216
        %v2218 = vrcp.pop %v2198
        %v2219 = vmul.f32 %v2166, %v2218
        %v2220 = vrcp.pop %v2199
        %v2221 = vmul.f32 %v2167, %v2220
        %v2222 = vrcp.pop %v2200
        %v2223 = vmul.f32 %v2168, %v2222
        %v2224 = vrcp.pop %v2201
        %v2225 = vmul.f32 %v2169, %v2224
        %v2226 = vrcp.pop %v2202
        %v2227 = vmul.f32 %v2170, %v2226
        %v2228 = vrcp.pop %v2203
        %v2229 = vmul.f32 %v2171, %v2228
        %v2230 = vrcp.pop %v2204
        %v2231 = vmul.f32 %v2172, %v2230
        %v2232 = vrcp.pop %v2205
        %v2233 = vmul.f32 %v2173, %v2232
        %v2234 = vrcp.pop %v2206
        %v2235 = vmul.f32 %v2174, %v2234
        %v2236 = vrcp.pop %v2207
        %v2237 = vmul.f32 %v2175, %v2236
        %v2238 = vrcp.pop %v2208
        %v2239 = vmul.f32 %v2176, %v2238
        %v2240 = vrcp.pop %v2209
        %v2241 = vmul.f32 %v2177, %v2240
        %v2243 = vsel %vm1383, %v823, 0
        %v2246 = vsel %vm1383, %v824, 0
        %v2249 = vsel %vm1383, %v825, 0
        %v2252 = vsel %vm1383, %v826, 0
        %2254 = vmatprep.subr.mxu0 0.0
        %2255 = vmatpush1.msra.mxu0 0.0
        %2256 = vmatprep.subr.mxu0 0.0
        %2257 = vmatpush1.msra.mxu0 0.0
        %2258 = vmatprep.subr.mxu0 0.0
        %2259 = vmatpush1.msra.mxu0 0.0
        %2260 = vmatprep.subr.mxu0 0.0
        %2261 = vmatpush1.msra.mxu0 0.0
        %2262 = vmatprep.subr.mxu0 0.0
        %2263 = vmatpush1.msra.mxu0 0.0
        %2264 = vmatprep.subr.mxu0 0.0
        %2265 = vmatpush1.msra.mxu0 0.0
        %2266 = vmatprep.subr.mxu0 0.0
        %2267 = vmatpush1.msra.mxu0 0.0
        %2268 = vmatprep.subr.mxu0 0.0
        %2269 = vmatpush1.msra.mxu0 0.0
        %2270 = vmatprep.subr.mxu0 0.0
        %2271 = vmatpush1.msra.mxu0 0.0
        %2272 = vmatprep.subr.mxu0 0.0
        %2273 = vmatpush1.msra.mxu0 0.0
        %2274 = vmatprep.subr.mxu0 0.0
        %2275 = vmatpush1.msra.mxu0 0.0
        %2276 = vmatprep.subr.mxu0 0.0
        %2277 = vmatpush1.msra.mxu0 0.0
        %2278 = vmatprep.subr.mxu0 %v2237
        %2279 = vmatpush1.msra.mxu0 %v2235
        %2280 = vmatprep.subr.mxu0 %v2229
        %2281 = vmatpush1.msra.mxu0 %v2227
        %2282 = vmatprep.subr.mxu0 %v2221
        %2283 = vmatpush1.msra.mxu0 %v2219
        %2284 = vmatprep.subr.mxu0 %v2213
        %2285 = vmatpush1.msra.mxu0 %v2211
        %2286 = vmatprep.subr.mxu0 0.0
        %2287 = vmatpush2.msra.mxu0 0.0
        %2288 = vmatprep.subr.mxu0 0.0
        %2289 = vmatpush2.msra.mxu0 0.0
        %2290 = vmatprep.subr.mxu0 0.0
        %2291 = vmatpush2.msra.mxu0 0.0
        %2292 = vmatprep.subr.mxu0 0.0
        %2293 = vmatpush2.msra.mxu0 0.0
        %2294 = vmatprep.subr.mxu0 0.0
        %2295 = vmatpush2.msra.mxu0 0.0
        %2296 = vmatprep.subr.mxu0 0.0
        %2297 = vmatpush2.msra.mxu0 0.0
        %2298 = vmatprep.subr.mxu0 0.0
        %2299 = vmatpush2.msra.mxu0 0.0
        %2300 = vmatprep.subr.mxu0 0.0
        %2301 = vmatpush2.msra.mxu0 0.0
        %2302 = vmatprep.subr.mxu0 0.0
        %2303 = vmatpush2.msra.mxu0 0.0
        %2304 = vmatprep.subr.mxu0 0.0
        %2305 = vmatpush2.msra.mxu0 0.0
        %2306 = vmatprep.subr.mxu0 0.0
        %2307 = vmatpush2.msra.mxu0 0.0
        %2308 = vmatprep.subr.mxu0 0.0
        %2309 = vmatpush2.msra.mxu0 0.0
        %2310 = vmatprep.subr.mxu0 0.0
        %2311 = vmatpush2.msra.mxu0 0.0
        %2312 = vmatprep.subr.mxu0 0.0
        %2313 = vmatpush2.msra.mxu0 0.0
        %2314 = vmatprep.subr.mxu0 0.0
        %2315 = vmatpush2.msra.mxu0 0.0
        %2316 = vmatprep.subr.mxu0 0.0
        %2317 = vmatpush2.msra.mxu0 0.0
        %2318 = vmatprep.mubr.f32.mxu0 0.0
        %2319 = vmatmul.mubr.f32.gmra.mxu0 %v2243
        %v2320 = vpop.f32.mrf.mxu0
        %v2321 = vadd.f32 0.0, %v2320
        %v2322 = vpop.f32.mrf.mxu0
        %v2323 = vadd.f32 0.0, %v2322
        %2324 = vmatprep.mubr.f32.mxu0 0.0
        %2325 = vmatmul.mubr.f32.gmra.mxu0 %v2246
        %v2326 = vpop.f32.mrf.mxu0
        %v2327 = vadd.f32 0.0, %v2326
        %v2328 = vpop.f32.mrf.mxu0
        %v2329 = vadd.f32 0.0, %v2328
        %2330 = vmatprep.mubr.f32.mxu0 0.0
        %2331 = vmatmul.mubr.f32.gmra.mxu0 %v2249
        %v2332 = vpop.f32.mrf.mxu0
        %v2333 = vadd.f32 0.0, %v2332
        %v2334 = vpop.f32.mrf.mxu0
        %v2335 = vadd.f32 0.0, %v2334
        %2336 = vmatprep.mubr.f32.mxu0 0.0
        %2337 = vmatmul.mubr.f32.gmra.mxu0 %v2252
        %v2338 = vpop.f32.mrf.mxu0
        %v2339 = vadd.f32 0.0, %v2338
        %v2340 = vpop.f32.mrf.mxu0
        %v2341 = vadd.f32 0.0, %v2340
        %2342 = vdwg.mxu0
        %2343 = vmatprep.subr.mxu0 0.0
        %2344 = vmatpush1.msra.mxu0 0.0
        %2345 = vmatprep.subr.mxu0 0.0
        %2346 = vmatpush1.msra.mxu0 0.0
        %2347 = vmatprep.subr.mxu0 0.0
        %2348 = vmatpush1.msra.mxu0 0.0
        %2349 = vmatprep.subr.mxu0 0.0
        %2350 = vmatpush1.msra.mxu0 0.0
        %2351 = vmatprep.subr.mxu0 0.0
        %2352 = vmatpush1.msra.mxu0 0.0
        %2353 = vmatprep.subr.mxu0 0.0
        %2354 = vmatpush1.msra.mxu0 0.0
        %2355 = vmatprep.subr.mxu0 0.0
        %2356 = vmatpush1.msra.mxu0 0.0
        %2357 = vmatprep.subr.mxu0 0.0
        %2358 = vmatpush1.msra.mxu0 0.0
        %2359 = vmatprep.subr.mxu0 0.0
        %2360 = vmatpush1.msra.mxu0 0.0
        %2361 = vmatprep.subr.mxu0 0.0
        %2362 = vmatpush1.msra.mxu0 0.0
        %2363 = vmatprep.subr.mxu0 0.0
        %2364 = vmatpush1.msra.mxu0 0.0
        %2365 = vmatprep.subr.mxu0 0.0
        %2366 = vmatpush1.msra.mxu0 0.0
        %2367 = vmatprep.subr.mxu0 %v2241
        %2368 = vmatpush1.msra.mxu0 %v2239
        %2369 = vmatprep.subr.mxu0 %v2233
        %2370 = vmatpush1.msra.mxu0 %v2231
        %2371 = vmatprep.subr.mxu0 %v2225
        %2372 = vmatpush1.msra.mxu0 %v2223
        %2373 = vmatprep.subr.mxu0 %v2217
        %2374 = vmatpush1.msra.mxu0 %v2215
        %2375 = vmatprep.subr.mxu0 0.0
        %2376 = vmatpush2.msra.mxu0 0.0
        %2377 = vmatprep.subr.mxu0 0.0
        %2378 = vmatpush2.msra.mxu0 0.0
        %2379 = vmatprep.subr.mxu0 0.0
        %2380 = vmatpush2.msra.mxu0 0.0
        %2381 = vmatprep.subr.mxu0 0.0
        %2382 = vmatpush2.msra.mxu0 0.0
        %2383 = vmatprep.subr.mxu0 0.0
        %2384 = vmatpush2.msra.mxu0 0.0
        %2385 = vmatprep.subr.mxu0 0.0
        %2386 = vmatpush2.msra.mxu0 0.0
        %2387 = vmatprep.subr.mxu0 0.0
        %2388 = vmatpush2.msra.mxu0 0.0
        %2389 = vmatprep.subr.mxu0 0.0
        %2390 = vmatpush2.msra.mxu0 0.0
        %2391 = vmatprep.subr.mxu0 0.0
        %2392 = vmatpush2.msra.mxu0 0.0
        %2393 = vmatprep.subr.mxu0 0.0
        %2394 = vmatpush2.msra.mxu0 0.0
        %2395 = vmatprep.subr.mxu0 0.0
        %2396 = vmatpush2.msra.mxu0 0.0
        %2397 = vmatprep.subr.mxu0 0.0
        %2398 = vmatpush2.msra.mxu0 0.0
        %2399 = vmatprep.subr.mxu0 0.0
        %2400 = vmatpush2.msra.mxu0 0.0
        %2401 = vmatprep.subr.mxu0 0.0
        %2402 = vmatpush2.msra.mxu0 0.0
        %2403 = vmatprep.subr.mxu0 0.0
        %2404 = vmatpush2.msra.mxu0 0.0
        %2405 = vmatprep.subr.mxu0 0.0
        %2406 = vmatpush2.msra.mxu0 0.0
        %2407 = vmatprep.mubr.f32.mxu0 0.0
        %2408 = vmatmul.mubr.f32.gmra.mxu0 %v2243
        %v2409 = vpop.f32.mrf.mxu0
        %v2410 = vadd.f32 0.0, %v2409
        %v2411 = vpop.f32.mrf.mxu0
        %v2412 = vadd.f32 0.0, %v2411
        %2413 = vmatprep.mubr.f32.mxu0 0.0
        %2414 = vmatmul.mubr.f32.gmra.mxu0 %v2246
        %v2415 = vpop.f32.mrf.mxu0
        %v2416 = vadd.f32 0.0, %v2415
        %v2417 = vpop.f32.mrf.mxu0
        %v2418 = vadd.f32 0.0, %v2417
        %2419 = vmatprep.mubr.f32.mxu0 0.0
        %2420 = vmatmul.mubr.f32.gmra.mxu0 %v2249
        %v2421 = vpop.f32.mrf.mxu0
        %v2422 = vadd.f32 0.0, %v2421
        %v2423 = vpop.f32.mrf.mxu0
        %v2424 = vadd.f32 0.0, %v2423
        %2425 = vmatprep.mubr.f32.mxu0 0.0
        %2426 = vmatmul.mubr.f32.gmra.mxu0 %v2252
        %v2427 = vpop.f32.mrf.mxu0
        %v2428 = vadd.f32 0.0, %v2427
        %v2429 = vpop.f32.mrf.mxu0
        %v2430 = vadd.f32 0.0, %v2429
        %2431 = vdwg.mxu0
        %v2432 = vadd.f32 %v539, %v2321
        %v2433 = vadd.f32 %v540, %v2323
        %v2434 = vadd.f32 %v541, %v2410
        %v2435 = vadd.f32 %v542, %v2412
        %v2436 = vadd.f32 %v543, %v2327
        %v2437 = vadd.f32 %v544, %v2329
        %v2438 = vadd.f32 %v545, %v2416
        %v2439 = vadd.f32 %v546, %v2418
        %v2440 = vadd.f32 %v547, %v2333
        %v2441 = vadd.f32 %v548, %v2335
        %v2442 = vadd.f32 %v549, %v2422
        %v2443 = vadd.f32 %v550, %v2424
        %v2444 = vadd.f32 %v551, %v2339
        %v2445 = vadd.f32 %v552, %v2341
        %v2446 = vadd.f32 %v553, %v2428
        %v2447 = vadd.f32 %v554, %v2430
        %2449 = vset.pattern.permute.xlu0 0
        %2450 = vperm.xlu0 %2449, %v827
        %v2451 = vpop.permute.xlu0 %2450
        %2454 = vset.pattern.permute.xlu0 0
        %2455 = vperm.xlu0 %2454, %v828
        %v2456 = vpop.permute.xlu0 %2455
        %2459 = vset.pattern.permute.xlu0 0
        %2460 = vperm.xlu0 %2459, %v829
        %v2461 = vpop.permute.xlu0 %2460
        %2464 = vset.pattern.permute.xlu0 0
        %2465 = vperm.xlu0 %2464, %v830
        %v2466 = vpop.permute.xlu0 %2465
        %v2468 = vadd.f32 %v2432, %v2451
        %v2469 = vadd.f32 %v2433, %v2451
        %v2470 = vadd.f32 %v2434, %v2451
        %v2471 = vadd.f32 %v2435, %v2451
        %v2472 = vadd.f32 %v2436, %v2456
        %v2473 = vadd.f32 %v2437, %v2456
        %v2474 = vadd.f32 %v2438, %v2456
        %v2475 = vadd.f32 %v2439, %v2456
        %v2476 = vadd.f32 %v2440, %v2461
        %v2477 = vadd.f32 %v2441, %v2461
        %v2478 = vadd.f32 %v2442, %v2461
        %v2479 = vadd.f32 %v2443, %v2461
        %v2480 = vadd.f32 %v2444, %v2466
        %v2481 = vadd.f32 %v2445, %v2466
        %v2482 = vadd.f32 %v2446, %v2466
        %v2483 = vadd.f32 %v2447, %v2466
        %v2484 = vmul.f32 %v2468, %v2468
        %v2485 = vmul.f32 %v2469, %v2469
        %v2486 = vmul.f32 %v2470, %v2470
        %v2487 = vmul.f32 %v2471, %v2471
        %v2488 = vmul.f32 %v2472, %v2472
        %v2489 = vmul.f32 %v2473, %v2473
        %v2490 = vmul.f32 %v2474, %v2474
        %v2491 = vmul.f32 %v2475, %v2475
        %v2492 = vmul.f32 %v2476, %v2476
        %v2493 = vmul.f32 %v2477, %v2477
        %v2494 = vmul.f32 %v2478, %v2478
        %v2495 = vmul.f32 %v2479, %v2479
        %v2496 = vmul.f32 %v2480, %v2480
        %v2497 = vmul.f32 %v2481, %v2481
        %v2498 = vmul.f32 %v2482, %v2482
        %v2499 = vmul.f32 %v2483, %v2483
        %2500 = vmatprep.subr.mxu0 %v1188
        %2501 = vmatpush1.msra.mxu0 %v1187
        %2502 = vmatprep.subr.mxu0 %v1184
        %2503 = vmatpush1.msra.mxu0 %v1183
        %2504 = vmatprep.subr.mxu0 %v1180
        %2505 = vmatpush1.msra.mxu0 %v1179
        %2506 = vmatprep.subr.mxu0 %v1176
        %2507 = vmatpush1.msra.mxu0 %v1175
        %2508 = vmatprep.subr.mxu0 %v1172
        %2509 = vmatpush1.msra.mxu0 %v1171
        %2510 = vmatprep.subr.mxu0 %v1168
        %2511 = vmatpush1.msra.mxu0 %v1167
        %2512 = vmatprep.subr.mxu0 %v1164
        %2513 = vmatpush1.msra.mxu0 %v1163
        %2514 = vmatprep.subr.mxu0 %v1160
        %2515 = vmatpush1.msra.mxu0 %v1159
        %2516 = vmatprep.subr.mxu0 %v1156
        %2517 = vmatpush1.msra.mxu0 %v1155
        %2518 = vmatprep.subr.mxu0 %v1152
        %2519 = vmatpush1.msra.mxu0 %v1151
        %2520 = vmatprep.subr.mxu0 %v1148
        %2521 = vmatpush1.msra.mxu0 %v1147
        %2522 = vmatprep.subr.mxu0 %v1144
        %2523 = vmatpush1.msra.mxu0 %v1143
        %2524 = vmatprep.subr.mxu0 %v1140
        %2525 = vmatpush1.msra.mxu0 %v1139
        %2526 = vmatprep.subr.mxu0 %v1136
        %2527 = vmatpush1.msra.mxu0 %v1135
        %2528 = vmatprep.subr.mxu0 %v1132
        %2529 = vmatpush1.msra.mxu0 %v1131
        %2530 = vmatprep.subr.mxu0 %v1128
        %2531 = vmatpush1.msra.mxu0 %v1127
        %2532 = vmatprep.subr.mxu0 %v1252
        %2533 = vmatpush2.msra.mxu0 %v1251
        %2534 = vmatprep.subr.mxu0 %v1248
        %2535 = vmatpush2.msra.mxu0 %v1247
        %2536 = vmatprep.subr.mxu0 %v1244
        %2537 = vmatpush2.msra.mxu0 %v1243
        %2538 = vmatprep.subr.mxu0 %v1240
        %2539 = vmatpush2.msra.mxu0 %v1239
        %2540 = vmatprep.subr.mxu0 %v1236
        %2541 = vmatpush2.msra.mxu0 %v1235
        %2542 = vmatprep.subr.mxu0 %v1232
        %2543 = vmatpush2.msra.mxu0 %v1231
        %2544 = vmatprep.subr.mxu0 %v1228
        %2545 = vmatpush2.msra.mxu0 %v1227
        %2546 = vmatprep.subr.mxu0 %v1224
        %2547 = vmatpush2.msra.mxu0 %v1223
        %2548 = vmatprep.subr.mxu0 %v1220
        %2549 = vmatpush2.msra.mxu0 %v1219
        %2550 = vmatprep.subr.mxu0 %v1216
        %2551 = vmatpush2.msra.mxu0 %v1215
        %2552 = vmatprep.subr.mxu0 %v1212
        %2553 = vmatpush2.msra.mxu0 %v1211
        %2554 = vmatprep.subr.mxu0 %v1208
        %2555 = vmatpush2.msra.mxu0 %v1207
        %2556 = vmatprep.subr.mxu0 %v1204
        %2557 = vmatpush2.msra.mxu0 %v1203
        %2558 = vmatprep.subr.mxu0 %v1200
        %2559 = vmatpush2.msra.mxu0 %v1199
        %2560 = vmatprep.subr.mxu0 %v1196
        %2561 = vmatpush2.msra.mxu0 %v1195
        %2562 = vmatprep.subr.mxu0 %v1192
        %2563 = vmatpush2.msra.mxu0 %v1191
        %2564 = vmatprep.mubr.f32.mxu0 %v2469
        %2565 = vmatmul.mubr.f32.gmra.mxu0 %v2468
        %v2566 = vpop.f32.mrf.mxu0
        %v2567 = vadd.f32 0.0, %v2566
        %v2568 = vpop.f32.mrf.mxu0
        %v2569 = vadd.f32 0.0, %v2568
        %2570 = vmatprep.mubr.f32.mxu0 %v2473
        %2571 = vmatmul.mubr.f32.gmra.mxu0 %v2472
        %v2572 = vpop.f32.mrf.mxu0
        %v2573 = vadd.f32 0.0, %v2572
        %v2574 = vpop.f32.mrf.mxu0
        %v2575 = vadd.f32 0.0, %v2574
        %2576 = vmatprep.mubr.f32.mxu0 %v2477
        %2577 = vmatmul.mubr.f32.gmra.mxu0 %v2476
        %v2578 = vpop.f32.mrf.mxu0
        %v2579 = vadd.f32 0.0, %v2578
        %v2580 = vpop.f32.mrf.mxu0
        %v2581 = vadd.f32 0.0, %v2580
        %2582 = vmatprep.mubr.f32.mxu0 %v2481
        %2583 = vmatmul.mubr.f32.gmra.mxu0 %v2480
        %v2584 = vpop.f32.mrf.mxu0
        %v2585 = vadd.f32 0.0, %v2584
        %v2586 = vpop.f32.mrf.mxu0
        %v2587 = vadd.f32 0.0, %v2586
        %2588 = vmatprep.mubr.f32.mxu0 %v2485
        %2589 = vmatmul.mubr.f32.gmra.mxu0 %v2484
        %v2590 = vpop.f32.mrf.mxu0
        %v2591 = vadd.f32 0.0, %v2590
        %v2592 = vpop.f32.mrf.mxu0
        %v2593 = vadd.f32 0.0, %v2592
        %2594 = vmatprep.mubr.f32.mxu0 %v2489
        %2595 = vmatmul.mubr.f32.gmra.mxu0 %v2488
        %v2596 = vpop.f32.mrf.mxu0
        %v2597 = vadd.f32 0.0, %v2596
        %v2598 = vpop.f32.mrf.mxu0
        %v2599 = vadd.f32 0.0, %v2598
        %2600 = vmatprep.mubr.f32.mxu0 %v2493
        %2601 = vmatmul.mubr.f32.gmra.mxu0 %v2492
        %v2602 = vpop.f32.mrf.mxu0
        %v2603 = vadd.f32 0.0, %v2602
        %v2604 = vpop.f32.mrf.mxu0
        %v2605 = vadd.f32 0.0, %v2604
        %2606 = vmatprep.mubr.f32.mxu0 %v2497
        %2607 = vmatmul.mubr.f32.gmra.mxu0 %v2496
        %v2608 = vpop.f32.mrf.mxu0
        %v2609 = vadd.f32 0.0, %v2608
        %v2610 = vpop.f32.mrf.mxu0
        %v2611 = vadd.f32 0.0, %v2610
        %2612 = vdwg.mxu0
        %2613 = vmatprep.subr.mxu0 %v1316
        %2614 = vmatpush1.msra.mxu0 %v1315
        %2615 = vmatprep.subr.mxu0 %v1312
        %2616 = vmatpush1.msra.mxu0 %v1311
        %2617 = vmatprep.subr.mxu0 %v1308
        %2618 = vmatpush1.msra.mxu0 %v1307
        %2619 = vmatprep.subr.mxu0 %v1304
        %2620 = vmatpush1.msra.mxu0 %v1303
        %2621 = vmatprep.subr.mxu0 %v1300
        %2622 = vmatpush1.msra.mxu0 %v1299
        %2623 = vmatprep.subr.mxu0 %v1296
        %2624 = vmatpush1.msra.mxu0 %v1295
        %2625 = vmatprep.subr.mxu0 %v1292
        %2626 = vmatpush1.msra.mxu0 %v1291
        %2627 = vmatprep.subr.mxu0 %v1288
        %2628 = vmatpush1.msra.mxu0 %v1287
        %2629 = vmatprep.subr.mxu0 %v1284
        %2630 = vmatpush1.msra.mxu0 %v1283
        %2631 = vmatprep.subr.mxu0 %v1280
        %2632 = vmatpush1.msra.mxu0 %v1279
        %2633 = vmatprep.subr.mxu0 %v1276
        %2634 = vmatpush1.msra.mxu0 %v1275
        %2635 = vmatprep.subr.mxu0 %v1272
        %2636 = vmatpush1.msra.mxu0 %v1271
        %2637 = vmatprep.subr.mxu0 %v1268
        %2638 = vmatpush1.msra.mxu0 %v1267
        %2639 = vmatprep.subr.mxu0 %v1264
        %2640 = vmatpush1.msra.mxu0 %v1263
        %2641 = vmatprep.subr.mxu0 %v1260
        %2642 = vmatpush1.msra.mxu0 %v1259
        %2643 = vmatprep.subr.mxu0 %v1256
        %2644 = vmatpush1.msra.mxu0 %v1255
        %2645 = vmatprep.subr.mxu0 %v1380
        %2646 = vmatpush2.msra.mxu0 %v1379
        %2647 = vmatprep.subr.mxu0 %v1376
        %2648 = vmatpush2.msra.mxu0 %v1375
        %2649 = vmatprep.subr.mxu0 %v1372
        %2650 = vmatpush2.msra.mxu0 %v1371
        %2651 = vmatprep.subr.mxu0 %v1368
        %2652 = vmatpush2.msra.mxu0 %v1367
        %2653 = vmatprep.subr.mxu0 %v1364
        %2654 = vmatpush2.msra.mxu0 %v1363
        %2655 = vmatprep.subr.mxu0 %v1360
        %2656 = vmatpush2.msra.mxu0 %v1359
        %2657 = vmatprep.subr.mxu0 %v1356
        %2658 = vmatpush2.msra.mxu0 %v1355
        %2659 = vmatprep.subr.mxu0 %v1352
        %2660 = vmatpush2.msra.mxu0 %v1351
        %2661 = vmatprep.subr.mxu0 %v1348
        %2662 = vmatpush2.msra.mxu0 %v1347
        %2663 = vmatprep.subr.mxu0 %v1344
        %2664 = vmatpush2.msra.mxu0 %v1343
        %2665 = vmatprep.subr.mxu0 %v1340
        %2666 = vmatpush2.msra.mxu0 %v1339
        %2667 = vmatprep.subr.mxu0 %v1336
        %2668 = vmatpush2.msra.mxu0 %v1335
        %2669 = vmatprep.subr.mxu0 %v1332
        %2670 = vmatpush2.msra.mxu0 %v1331
        %2671 = vmatprep.subr.mxu0 %v1328
        %2672 = vmatpush2.msra.mxu0 %v1327
        %2673 = vmatprep.subr.mxu0 %v1324
        %2674 = vmatpush2.msra.mxu0 %v1323
        %2675 = vmatprep.subr.mxu0 %v1320
        %2676 = vmatpush2.msra.mxu0 %v1319
        %2677 = vmatprep.mubr.f32.mxu0 %v2471
        %2678 = vmatmul.mubr.f32.gmra.mxu0 %v2470
        %v2679 = vpop.f32.mrf.mxu0
        %v2680 = vadd.f32 %v2567, %v2679
        %v2681 = vpop.f32.mrf.mxu0
        %v2682 = vadd.f32 %v2569, %v2681
        %2683 = vmatprep.mubr.f32.mxu0 %v2475
        %2684 = vmatmul.mubr.f32.gmra.mxu0 %v2474
        %v2685 = vpop.f32.mrf.mxu0
        %v2686 = vadd.f32 %v2573, %v2685
        %v2687 = vpop.f32.mrf.mxu0
        %v2688 = vadd.f32 %v2575, %v2687
        %2689 = vmatprep.mubr.f32.mxu0 %v2479
        %2690 = vmatmul.mubr.f32.gmra.mxu0 %v2478
        %v2691 = vpop.f32.mrf.mxu0
        %v2692 = vadd.f32 %v2579, %v2691
        %v2693 = vpop.f32.mrf.mxu0
        %v2694 = vadd.f32 %v2581, %v2693
        %2695 = vmatprep.mubr.f32.mxu0 %v2483
        %2696 = vmatmul.mubr.f32.gmra.mxu0 %v2482
        %v2697 = vpop.f32.mrf.mxu0
        %v2698 = vadd.f32 %v2585, %v2697
        %v2699 = vpop.f32.mrf.mxu0
        %v2700 = vadd.f32 %v2587, %v2699
        %2701 = vmatprep.mubr.f32.mxu0 %v2487
        %2702 = vmatmul.mubr.f32.gmra.mxu0 %v2486
        %v2703 = vpop.f32.mrf.mxu0
        %v2704 = vadd.f32 %v2591, %v2703
        %v2705 = vpop.f32.mrf.mxu0
        %v2706 = vadd.f32 %v2593, %v2705
        %2707 = vmatprep.mubr.f32.mxu0 %v2491
        %2708 = vmatmul.mubr.f32.gmra.mxu0 %v2490
        %v2709 = vpop.f32.mrf.mxu0
        %v2710 = vadd.f32 %v2597, %v2709
        %v2711 = vpop.f32.mrf.mxu0
        %v2712 = vadd.f32 %v2599, %v2711
        %2713 = vmatprep.mubr.f32.mxu0 %v2495
        %2714 = vmatmul.mubr.f32.gmra.mxu0 %v2494
        %v2715 = vpop.f32.mrf.mxu0
        %v2716 = vadd.f32 %v2603, %v2715
        %v2717 = vpop.f32.mrf.mxu0
        %v2718 = vadd.f32 %v2605, %v2717
        %2719 = vmatprep.mubr.f32.mxu0 %v2499
        %2720 = vmatmul.mubr.f32.gmra.mxu0 %v2498
        %v2721 = vpop.f32.mrf.mxu0
        %v2722 = vadd.f32 %v2609, %v2721
        %v2723 = vpop.f32.mrf.mxu0
        %v2724 = vadd.f32 %v2611, %v2723
        %2725 = vdwg.mxu0
        %2726 = vmatprep.subr.mxu0 %v1190
        %2727 = vmatpush1.msra.mxu0 %v1189
        %2728 = vmatprep.subr.mxu0 %v1186
        %2729 = vmatpush1.msra.mxu0 %v1185
        %2730 = vmatprep.subr.mxu0 %v1182
        %2731 = vmatpush1.msra.mxu0 %v1181
        %2732 = vmatprep.subr.mxu0 %v1178
        %2733 = vmatpush1.msra.mxu0 %v1177
        %2734 = vmatprep.subr.mxu0 %v1174
        %2735 = vmatpush1.msra.mxu0 %v1173
        %2736 = vmatprep.subr.mxu0 %v1170
        %2737 = vmatpush1.msra.mxu0 %v1169
        %2738 = vmatprep.subr.mxu0 %v1166
        %2739 = vmatpush1.msra.mxu0 %v1165
        %2740 = vmatprep.subr.mxu0 %v1162
        %2741 = vmatpush1.msra.mxu0 %v1161
        %2742 = vmatprep.subr.mxu0 %v1158
        %2743 = vmatpush1.msra.mxu0 %v1157
        %2744 = vmatprep.subr.mxu0 %v1154
        %2745 = vmatpush1.msra.mxu0 %v1153
        %2746 = vmatprep.subr.mxu0 %v1150
        %2747 = vmatpush1.msra.mxu0 %v1149
        %2748 = vmatprep.subr.mxu0 %v1146
        %2749 = vmatpush1.msra.mxu0 %v1145
        %2750 = vmatprep.subr.mxu0 %v1142
        %2751 = vmatpush1.msra.mxu0 %v1141
        %2752 = vmatprep.subr.mxu0 %v1138
        %2753 = vmatpush1.msra.mxu0 %v1137
        %2754 = vmatprep.subr.mxu0 %v1134
        %2755 = vmatpush1.msra.mxu0 %v1133
        %2756 = vmatprep.subr.mxu0 %v1130
        %2757 = vmatpush1.msra.mxu0 %v1129
        %2758 = vmatprep.subr.mxu0 %v1254
        %2759 = vmatpush2.msra.mxu0 %v1253
        %2760 = vmatprep.subr.mxu0 %v1250
        %2761 = vmatpush2.msra.mxu0 %v1249
        %2762 = vmatprep.subr.mxu0 %v1246
        %2763 = vmatpush2.msra.mxu0 %v1245
        %2764 = vmatprep.subr.mxu0 %v1242
        %2765 = vmatpush2.msra.mxu0 %v1241
        %2766 = vmatprep.subr.mxu0 %v1238
        %2767 = vmatpush2.msra.mxu0 %v1237
        %2768 = vmatprep.subr.mxu0 %v1234
        %2769 = vmatpush2.msra.mxu0 %v1233
        %2770 = vmatprep.subr.mxu0 %v1230
        %2771 = vmatpush2.msra.mxu0 %v1229
        %2772 = vmatprep.subr.mxu0 %v1226
        %2773 = vmatpush2.msra.mxu0 %v1225
        %2774 = vmatprep.subr.mxu0 %v1222
        %2775 = vmatpush2.msra.mxu0 %v1221
        %2776 = vmatprep.subr.mxu0 %v1218
        %2777 = vmatpush2.msra.mxu0 %v1217
        %2778 = vmatprep.subr.mxu0 %v1214
        %2779 = vmatpush2.msra.mxu0 %v1213
        %2780 = vmatprep.subr.mxu0 %v1210
        %2781 = vmatpush2.msra.mxu0 %v1209
        %2782 = vmatprep.subr.mxu0 %v1206
        %2783 = vmatpush2.msra.mxu0 %v1205
        %2784 = vmatprep.subr.mxu0 %v1202
        %2785 = vmatpush2.msra.mxu0 %v1201
        %2786 = vmatprep.subr.mxu0 %v1198
        %2787 = vmatpush2.msra.mxu0 %v1197
        %2788 = vmatprep.subr.mxu0 %v1194
        %2789 = vmatpush2.msra.mxu0 %v1193
        %2790 = vmatprep.mubr.f32.mxu0 %v2469
        %2791 = vmatmul.mubr.f32.gmra.mxu0 %v2468
        %v2792 = vpop.f32.mrf.mxu0
        %v2793 = vadd.f32 0.0, %v2792
        %v2794 = vpop.f32.mrf.mxu0
        %v2795 = vadd.f32 0.0, %v2794
        %2796 = vmatprep.mubr.f32.mxu0 %v2473
        %2797 = vmatmul.mubr.f32.gmra.mxu0 %v2472
        %v2798 = vpop.f32.mrf.mxu0
        %v2799 = vadd.f32 0.0, %v2798
        %v2800 = vpop.f32.mrf.mxu0
        %v2801 = vadd.f32 0.0, %v2800
        %2802 = vmatprep.mubr.f32.mxu0 %v2477
        %2803 = vmatmul.mubr.f32.gmra.mxu0 %v2476
        %v2804 = vpop.f32.mrf.mxu0
        %v2805 = vadd.f32 0.0, %v2804
        %v2806 = vpop.f32.mrf.mxu0
        %v2807 = vadd.f32 0.0, %v2806
        %2808 = vmatprep.mubr.f32.mxu0 %v2481
        %2809 = vmatmul.mubr.f32.gmra.mxu0 %v2480
        %v2810 = vpop.f32.mrf.mxu0
        %v2811 = vadd.f32 0.0, %v2810
        %v2812 = vpop.f32.mrf.mxu0
        %v2813 = vadd.f32 0.0, %v2812
        %2814 = vmatprep.mubr.f32.mxu0 %v2485
        %2815 = vmatmul.mubr.f32.gmra.mxu0 %v2484
        %v2816 = vpop.f32.mrf.mxu0
        %v2817 = vadd.f32 0.0, %v2816
        %v2818 = vpop.f32.mrf.mxu0
        %v2819 = vadd.f32 0.0, %v2818
        %2820 = vmatprep.mubr.f32.mxu0 %v2489
        %2821 = vmatmul.mubr.f32.gmra.mxu0 %v2488
        %v2822 = vpop.f32.mrf.mxu0
        %v2823 = vadd.f32 0.0, %v2822
        %v2824 = vpop.f32.mrf.mxu0
        %v2825 = vadd.f32 0.0, %v2824
        %2826 = vmatprep.mubr.f32.mxu0 %v2493
        %2827 = vmatmul.mubr.f32.gmra.mxu0 %v2492
        %v2828 = vpop.f32.mrf.mxu0
        %v2829 = vadd.f32 0.0, %v2828
        %v2830 = vpop.f32.mrf.mxu0
        %v2831 = vadd.f32 0.0, %v2830
        %2832 = vmatprep.mubr.f32.mxu0 %v2497
        %2833 = vmatmul.mubr.f32.gmra.mxu0 %v2496
        %v2834 = vpop.f32.mrf.mxu0
        %v2835 = vadd.f32 0.0, %v2834
        %v2836 = vpop.f32.mrf.mxu0
        %v2837 = vadd.f32 0.0, %v2836
        %2838 = vdwg.mxu0
        %2839 = vmatprep.subr.mxu0 %v1318
        %2840 = vmatpush1.msra.mxu0 %v1317
        %2841 = vmatprep.subr.mxu0 %v1314
        %2842 = vmatpush1.msra.mxu0 %v1313
        %2843 = vmatprep.subr.mxu0 %v1310
        %2844 = vmatpush1.msra.mxu0 %v1309
        %2845 = vmatprep.subr.mxu0 %v1306
        %2846 = vmatpush1.msra.mxu0 %v1305
        %2847 = vmatprep.subr.mxu0 %v1302
        %2848 = vmatpush1.msra.mxu0 %v1301
        %2849 = vmatprep.subr.mxu0 %v1298
        %2850 = vmatpush1.msra.mxu0 %v1297
        %2851 = vmatprep.subr.mxu0 %v1294
        %2852 = vmatpush1.msra.mxu0 %v1293
        %2853 = vmatprep.subr.mxu0 %v1290
        %2854 = vmatpush1.msra.mxu0 %v1289
        %2855 = vmatprep.subr.mxu0 %v1286
        %2856 = vmatpush1.msra.mxu0 %v1285
        %2857 = vmatprep.subr.mxu0 %v1282
        %2858 = vmatpush1.msra.mxu0 %v1281
        %2859 = vmatprep.subr.mxu0 %v1278
        %2860 = vmatpush1.msra.mxu0 %v1277
        %2861 = vmatprep.subr.mxu0 %v1274
        %2862 = vmatpush1.msra.mxu0 %v1273
        %2863 = vmatprep.subr.mxu0 %v1270
        %2864 = vmatpush1.msra.mxu0 %v1269
        %2865 = vmatprep.subr.mxu0 %v1266
        %2866 = vmatpush1.msra.mxu0 %v1265
        %2867 = vmatprep.subr.mxu0 %v1262
        %2868 = vmatpush1.msra.mxu0 %v1261
        %2869 = vmatprep.subr.mxu0 %v1258
        %2870 = vmatpush1.msra.mxu0 %v1257
        %2871 = vmatprep.subr.mxu0 %v1382
        %2872 = vmatpush2.msra.mxu0 %v1381
        %2873 = vmatprep.subr.mxu0 %v1378
        %2874 = vmatpush2.msra.mxu0 %v1377
        %2875 = vmatprep.subr.mxu0 %v1374
        %2876 = vmatpush2.msra.mxu0 %v1373
        %2877 = vmatprep.subr.mxu0 %v1370
        %2878 = vmatpush2.msra.mxu0 %v1369
        %2879 = vmatprep.subr.mxu0 %v1366
        %2880 = vmatpush2.msra.mxu0 %v1365
        %2881 = vmatprep.subr.mxu0 %v1362
        %2882 = vmatpush2.msra.mxu0 %v1361
        %2883 = vmatprep.subr.mxu0 %v1358
        %2884 = vmatpush2.msra.mxu0 %v1357
        %2885 = vmatprep.subr.mxu0 %v1354
        %2886 = vmatpush2.msra.mxu0 %v1353
        %2887 = vmatprep.subr.mxu0 %v1350
        %2888 = vmatpush2.msra.mxu0 %v1349
        %2889 = vmatprep.subr.mxu0 %v1346
        %2890 = vmatpush2.msra.mxu0 %v1345
        %2891 = vmatprep.subr.mxu0 %v1342
        %2892 = vmatpush2.msra.mxu0 %v1341
        %2893 = vmatprep.subr.mxu0 %v1338
        %2894 = vmatpush2.msra.mxu0 %v1337
        %2895 = vmatprep.subr.mxu0 %v1334
        %2896 = vmatpush2.msra.mxu0 %v1333
        %2897 = vmatprep.subr.mxu0 %v1330
        %2898 = vmatpush2.msra.mxu0 %v1329
        %2899 = vmatprep.subr.mxu0 %v1326
        %2900 = vmatpush2.msra.mxu0 %v1325
        %2901 = vmatprep.subr.mxu0 %v1322
        %2902 = vmatpush2.msra.mxu0 %v1321
        %2903 = vmatprep.mubr.f32.mxu0 %v2471
        %2904 = vmatmul.mubr.f32.gmra.mxu0 %v2470
        %v2905 = vpop.f32.mrf.mxu0
        %v2906 = vadd.f32 %v2793, %v2905
        %v2907 = vpop.f32.mrf.mxu0
        %v2908 = vadd.f32 %v2795, %v2907
        %2909 = vmatprep.mubr.f32.mxu0 %v2475
        %2910 = vmatmul.mubr.f32.gmra.mxu0 %v2474
        %v2911 = vpop.f32.mrf.mxu0
        %v2912 = vadd.f32 %v2799, %v2911
        %v2913 = vpop.f32.mrf.mxu0
        %v2914 = vadd.f32 %v2801, %v2913
        %2915 = vmatprep.mubr.f32.mxu0 %v2479
        %2916 = vmatmul.mubr.f32.gmra.mxu0 %v2478
        %v2917 = vpop.f32.mrf.mxu0
        %v2918 = vadd.f32 %v2805, %v2917
        %v2919 = vpop.f32.mrf.mxu0
        %v2920 = vadd.f32 %v2807, %v2919
        %2921 = vmatprep.mubr.f32.mxu0 %v2483
        %2922 = vmatmul.mubr.f32.gmra.mxu0 %v2482
        %v2923 = vpop.f32.mrf.mxu0
        %v2924 = vadd.f32 %v2811, %v2923
        %v2925 = vpop.f32.mrf.mxu0
        %v2926 = vadd.f32 %v2813, %v2925
        %2927 = vmatprep.mubr.f32.mxu0 %v2487
        %2928 = vmatmul.mubr.f32.gmra.mxu0 %v2486
        %v2929 = vpop.f32.mrf.mxu0
        %v2930 = vadd.f32 %v2817, %v2929
        %v2931 = vpop.f32.mrf.mxu0
        %v2932 = vadd.f32 %v2819, %v2931
        %2933 = vmatprep.mubr.f32.mxu0 %v2491
        %2934 = vmatmul.mubr.f32.gmra.mxu0 %v2490
        %v2935 = vpop.f32.mrf.mxu0
        %v2936 = vadd.f32 %v2823, %v2935
        %v2937 = vpop.f32.mrf.mxu0
        %v2938 = vadd.f32 %v2825, %v2937
        %2939 = vmatprep.mubr.f32.mxu0 %v2495
        %2940 = vmatmul.mubr.f32.gmra.mxu0 %v2494
        %v2941 = vpop.f32.mrf.mxu0
        %v2942 = vadd.f32 %v2829, %v2941
        %v2943 = vpop.f32.mrf.mxu0
        %v2944 = vadd.f32 %v2831, %v2943
        %2945 = vmatprep.mubr.f32.mxu0 %v2499
        %2946 = vmatmul.mubr.f32.gmra.mxu0 %v2498
        %v2947 = vpop.f32.mrf.mxu0
        %v2948 = vadd.f32 %v2835, %v2947
        %v2949 = vpop.f32.mrf.mxu0
        %v2950 = vadd.f32 %v2837, %v2949
        %2951 = vdwg.mxu0
        %v2952 = vmul.f32 %v2680, %v2680
        %v2953 = vmul.f32 %v2682, %v2682
        %v2954 = vmul.f32 %v2906, %v2906
        %v2955 = vmul.f32 %v2908, %v2908
        %v2956 = vmul.f32 %v2686, %v2686
        %v2957 = vmul.f32 %v2688, %v2688
        %v2958 = vmul.f32 %v2912, %v2912
        %v2959 = vmul.f32 %v2914, %v2914
        %v2960 = vmul.f32 %v2692, %v2692
        %v2961 = vmul.f32 %v2694, %v2694
        %v2962 = vmul.f32 %v2918, %v2918
        %v2963 = vmul.f32 %v2920, %v2920
        %v2964 = vmul.f32 %v2698, %v2698
        %v2965 = vmul.f32 %v2700, %v2700
        %v2966 = vmul.f32 %v2924, %v2924
        %v2967 = vmul.f32 %v2926, %v2926
        %v2968 = vsub.f32 %v2704, %v2952
        %v2969 = vsub.f32 %v2706, %v2953
        %v2970 = vsub.f32 %v2930, %v2954
        %v2971 = vsub.f32 %v2932, %v2955
        %v2972 = vsub.f32 %v2710, %v2956
        %v2973 = vsub.f32 %v2712, %v2957
        %v2974 = vsub.f32 %v2936, %v2958
        %v2975 = vsub.f32 %v2938, %v2959
        %v2976 = vsub.f32 %v2716, %v2960
        %v2977 = vsub.f32 %v2718, %v2961
        %v2978 = vsub.f32 %v2942, %v2962
        %v2979 = vsub.f32 %v2944, %v2963
        %v2980 = vsub.f32 %v2722, %v2964
        %v2981 = vsub.f32 %v2724, %v2965
        %v2982 = vsub.f32 %v2948, %v2966
        %v2983 = vsub.f32 %v2950, %v2967
        %v2984 = vadd.f32 %v2968, 1e-05
        %v2985 = vadd.f32 %v2969, 1e-05
        %v2986 = vadd.f32 %v2970, 1e-05
        %v2987 = vadd.f32 %v2971, 1e-05
        %v2988 = vadd.f32 %v2972, 1e-05
        %v2989 = vadd.f32 %v2973, 1e-05
        %v2990 = vadd.f32 %v2974, 1e-05
        %v2991 = vadd.f32 %v2975, 1e-05
        %v2992 = vadd.f32 %v2976, 1e-05
        %v2993 = vadd.f32 %v2977, 1e-05
        %v2994 = vadd.f32 %v2978, 1e-05
        %v2995 = vadd.f32 %v2979, 1e-05
        %v2996 = vadd.f32 %v2980, 1e-05
        %v2997 = vadd.f32 %v2981, 1e-05
        %v2998 = vadd.f32 %v2982, 1e-05
        %v2999 = vadd.f32 %v2983, 1e-05
        %v3000 = vrsqrt.pop %v2984
        %v3001 = vrsqrt.pop %v2985
        %v3002 = vrsqrt.pop %v2986
        %v3003 = vrsqrt.pop %v2987
        %v3004 = vrsqrt.pop %v2988
        %v3005 = vrsqrt.pop %v2989
        %v3006 = vrsqrt.pop %v2990
        %v3007 = vrsqrt.pop %v2991
        %v3008 = vrsqrt.pop %v2992
        %v3009 = vrsqrt.pop %v2993
        %v3010 = vrsqrt.pop %v2994
        %v3011 = vrsqrt.pop %v2995
        %v3012 = vrsqrt.pop %v2996
        %v3013 = vrsqrt.pop %v2997
        %v3014 = vrsqrt.pop %v2998
        %v3015 = vrsqrt.pop %v2999
        %3017 = vset.pattern.permute.xlu0 0
        %3018 = vperm.xlu0 %3017, %v831
        %v3019 = vpop.permute.xlu0 %3018
        %3022 = vset.pattern.permute.xlu0 0
        %3023 = vperm.xlu0 %3022, %v832
        %v3024 = vpop.permute.xlu0 %3023
        %3027 = vset.pattern.permute.xlu0 0
        %3028 = vperm.xlu0 %3027, %v833
        %v3029 = vpop.permute.xlu0 %3028
        %3032 = vset.pattern.permute.xlu0 0
        %3033 = vperm.xlu0 %3032, %v834
        %v3034 = vpop.permute.xlu0 %3033
        %v3036 = vmul.f32 %v3019, %v3000
        %v3037 = vmul.f32 %v3019, %v3001
        %v3038 = vmul.f32 %v3019, %v3002
        %v3039 = vmul.f32 %v3019, %v3003
        %v3040 = vmul.f32 %v3024, %v3004
        %v3041 = vmul.f32 %v3024, %v3005
        %v3042 = vmul.f32 %v3024, %v3006
        %v3043 = vmul.f32 %v3024, %v3007
        %v3044 = vmul.f32 %v3029, %v3008
        %v3045 = vmul.f32 %v3029, %v3009
        %v3046 = vmul.f32 %v3029, %v3010
        %v3047 = vmul.f32 %v3029, %v3011
        %v3048 = vmul.f32 %v3034, %v3012
        %v3049 = vmul.f32 %v3034, %v3013
        %v3050 = vmul.f32 %v3034, %v3014
        %v3051 = vmul.f32 %v3034, %v3015
        %v3052 = vmul.f32 %v2468, %v3036
        %v3053 = vmul.f32 %v2469, %v3037
        %v3054 = vmul.f32 %v2470, %v3038
        %v3055 = vmul.f32 %v2471, %v3039
        %v3056 = vmul.f32 %v2472, %v3040
        %v3057 = vmul.f32 %v2473, %v3041
        %v3058 = vmul.f32 %v2474, %v3042
        %v3059 = vmul.f32 %v2475, %v3043
        %v3060 = vmul.f32 %v2476, %v3044
        %v3061 = vmul.f32 %v2477, %v3045
        %v3062 = vmul.f32 %v2478, %v3046
        %v3063 = vmul.f32 %v2479, %v3047
        %v3064 = vmul.f32 %v2480, %v3048
        %v3065 = vmul.f32 %v2481, %v3049
        %v3066 = vmul.f32 %v2482, %v3050
        %v3067 = vmul.f32 %v2483, %v3051
        %v3068 = vmul.f32 %v2680, %v3036
        %v3069 = vmul.f32 %v2682, %v3037
        %v3070 = vmul.f32 %v2906, %v3038
        %v3071 = vmul.f32 %v2908, %v3039
        %v3072 = vmul.f32 %v2686, %v3040
        %v3073 = vmul.f32 %v2688, %v3041
        %v3074 = vmul.f32 %v2912, %v3042
        %v3075 = vmul.f32 %v2914, %v3043
        %v3076 = vmul.f32 %v2692, %v3044
        %v3077 = vmul.f32 %v2694, %v3045
        %v3078 = vmul.f32 %v2918, %v3046
        %v3079 = vmul.f32 %v2920, %v3047
        %v3080 = vmul.f32 %v2698, %v3048
        %v3081 = vmul.f32 %v2700, %v3049
        %v3082 = vmul.f32 %v2924, %v3050
        %v3083 = vmul.f32 %v2926, %v3051
        %3085 = vset.pattern.permute.xlu0 0
        %3086 = vperm.xlu0 %3085, %v835
        %v3087 = vpop.permute.xlu0 %3086
        %3090 = vset.pattern.permute.xlu0 0
        %3091 = vperm.xlu0 %3090, %v836
        %v3092 = vpop.permute.xlu0 %3091
        %3095 = vset.pattern.permute.xlu0 0
        %3096 = vperm.xlu0 %3095, %v837
        %v3097 = vpop.permute.xlu0 %3096
        %3100 = vset.pattern.permute.xlu0 0
        %3101 = vperm.xlu0 %3100, %v838
        %v3102 = vpop.permute.xlu0 %3101
        %v3104 = vsub.f32 %v3087, %v3068
        %v3105 = vsub.f32 %v3087, %v3069
        %v3106 = vsub.f32 %v3087, %v3070
        %v3107 = vsub.f32 %v3087, %v3071
        %v3108 = vsub.f32 %v3092, %v3072
        %v3109 = vsub.f32 %v3092, %v3073
        %v3110 = vsub.f32 %v3092, %v3074
        %v3111 = vsub.f32 %v3092, %v3075
        %v3112 = vsub.f32 %v3097, %v3076
        %v3113 = vsub.f32 %v3097, %v3077
        %v3114 = vsub.f32 %v3097, %v3078
        %v3115 = vsub.f32 %v3097, %v3079
        %v3116 = vsub.f32 %v3102, %v3080
        %v3117 = vsub.f32 %v3102, %v3081
        %v3118 = vsub.f32 %v3102, %v3082
        %v3119 = vsub.f32 %v3102, %v3083
        %v3120 = vadd.f32 %v3052, %v3104
        %v3121 = vadd.f32 %v3053, %v3105
        %v3122 = vadd.f32 %v3054, %v3106
        %v3123 = vadd.f32 %v3055, %v3107
        %v3124 = vadd.f32 %v3056, %v3108
        %v3125 = vadd.f32 %v3057, %v3109
        %v3126 = vadd.f32 %v3058, %v3110
        %v3127 = vadd.f32 %v3059, %v3111
        %v3128 = vadd.f32 %v3060, %v3112
        %v3129 = vadd.f32 %v3061, %v3113
        %v3130 = vadd.f32 %v3062, %v3114
        %v3131 = vadd.f32 %v3063, %v3115
        %v3132 = vadd.f32 %v3064, %v3116
        %v3133 = vadd.f32 %v3065, %v3117
        %v3134 = vadd.f32 %v3066, %v3118
        %v3135 = vadd.f32 %v3067, %v3119
        %3137 = vset.pattern.permute.xlu0 0
        %3138 = vperm.xlu0 %3137, %v847
        %v3139 = vpop.permute.xlu0 %3138
        %3142 = vset.pattern.permute.xlu0 0
        %3143 = vperm.xlu0 %3142, %v848
        %v3144 = vpop.permute.xlu0 %3143
        %3147 = vset.pattern.permute.xlu0 0
        %3148 = vperm.xlu0 %3147, %v849
        %v3149 = vpop.permute.xlu0 %3148
        %3152 = vset.pattern.permute.xlu0 0
        %3153 = vperm.xlu0 %3152, %v850
        %v3154 = vpop.permute.xlu0 %3153
        %3157 = vset.pattern.permute.xlu0 0
        %3158 = vperm.xlu0 %3157, %v851
        %v3159 = vpop.permute.xlu0 %3158
        %3162 = vset.pattern.permute.xlu0 0
        %3163 = vperm.xlu0 %3162, %v852
        %v3164 = vpop.permute.xlu0 %3163
        %3167 = vset.pattern.permute.xlu0 0
        %3168 = vperm.xlu0 %3167, %v853
        %v3169 = vpop.permute.xlu0 %3168
        %3172 = vset.pattern.permute.xlu0 0
        %3173 = vperm.xlu0 %3172, %v854
        %v3174 = vpop.permute.xlu0 %3173
        %v3177 = vsel %vm1383, %v839, 0
        %v3180 = vsel %vm1383, %v840, 0
        %v3183 = vsel %vm1383, %v841, 0
        %v3186 = vsel %vm1383, %v842, 0
        %v3189 = vsel %vm1383, %v843, 0
        %v3192 = vsel %vm1383, %v844, 0
        %v3195 = vsel %vm1383, %v845, 0
        %v3198 = vsel %vm1383, %v846, 0
        %3200 = vmatprep.subr.mxu0 0.0
        %3201 = vmatpush1.msra.mxu0 0.0
        %3202 = vmatprep.subr.mxu0 0.0
        %3203 = vmatpush1.msra.mxu0 0.0
        %3204 = vmatprep.subr.mxu0 0.0
        %3205 = vmatpush1.msra.mxu0 0.0
        %3206 = vmatprep.subr.mxu0 0.0
        %3207 = vmatpush1.msra.mxu0 0.0
        %3208 = vmatprep.subr.mxu0 0.0
        %3209 = vmatpush1.msra.mxu0 0.0
        %3210 = vmatprep.subr.mxu0 0.0
        %3211 = vmatpush1.msra.mxu0 0.0
        %3212 = vmatprep.subr.mxu0 0.0
        %3213 = vmatpush1.msra.mxu0 0.0
        %3214 = vmatprep.subr.mxu0 0.0
        %3215 = vmatpush1.msra.mxu0 0.0
        %3216 = vmatprep.subr.mxu0 0.0
        %3217 = vmatpush1.msra.mxu0 0.0
        %3218 = vmatprep.subr.mxu0 0.0
        %3219 = vmatpush1.msra.mxu0 0.0
        %3220 = vmatprep.subr.mxu0 0.0
        %3221 = vmatpush1.msra.mxu0 0.0
        %3222 = vmatprep.subr.mxu0 0.0
        %3223 = vmatpush1.msra.mxu0 0.0
        %3224 = vmatprep.subr.mxu0 %v3133
        %3225 = vmatpush1.msra.mxu0 %v3132
        %3226 = vmatprep.subr.mxu0 %v3129
        %3227 = vmatpush1.msra.mxu0 %v3128
        %3228 = vmatprep.subr.mxu0 %v3125
        %3229 = vmatpush1.msra.mxu0 %v3124
        %3230 = vmatprep.subr.mxu0 %v3121
        %3231 = vmatpush1.msra.mxu0 %v3120
        %3232 = vmatprep.subr.mxu0 0.0
        %3233 = vmatpush2.msra.mxu0 0.0
        %3234 = vmatprep.subr.mxu0 0.0
        %3235 = vmatpush2.msra.mxu0 0.0
        %3236 = vmatprep.subr.mxu0 0.0
        %3237 = vmatpush2.msra.mxu0 0.0
        %3238 = vmatprep.subr.mxu0 0.0
        %3239 = vmatpush2.msra.mxu0 0.0
        %3240 = vmatprep.subr.mxu0 0.0
        %3241 = vmatpush2.msra.mxu0 0.0
        %3242 = vmatprep.subr.mxu0 0.0
        %3243 = vmatpush2.msra.mxu0 0.0
        %3244 = vmatprep.subr.mxu0 0.0
        %3245 = vmatpush2.msra.mxu0 0.0
        %3246 = vmatprep.subr.mxu0 0.0
        %3247 = vmatpush2.msra.mxu0 0.0
        %3248 = vmatprep.subr.mxu0 0.0
        %3249 = vmatpush2.msra.mxu0 0.0
        %3250 = vmatprep.subr.mxu0 0.0
        %3251 = vmatpush2.msra.mxu0 0.0
        %3252 = vmatprep.subr.mxu0 0.0
        %3253 = vmatpush2.msra.mxu0 0.0
        %3254 = vmatprep.subr.mxu0 0.0
        %3255 = vmatpush2.msra.mxu0 0.0
        %3256 = vmatprep.subr.mxu0 0.0
        %3257 = vmatpush2.msra.mxu0 0.0
        %3258 = vmatprep.subr.mxu0 0.0
        %3259 = vmatpush2.msra.mxu0 0.0
        %3260 = vmatprep.subr.mxu0 0.0
        %3261 = vmatpush2.msra.mxu0 0.0
        %3262 = vmatprep.subr.mxu0 0.0
        %3263 = vmatpush2.msra.mxu0 0.0
        %3264 = vmatprep.mubr.f32.mxu0 0.0
        %3265 = vmatmul.mubr.f32.gmra.mxu0 %v3177
        %v3266 = vpop.f32.mrf.mxu0
        %v3267 = vadd.f32 %v3139, %v3266
        %v3268 = vpop.f32.mrf.mxu0
        %v3269 = vadd.f32 %v3139, %v3268
        %3270 = vmatprep.mubr.f32.mxu0 0.0
        %3271 = vmatmul.mubr.f32.gmra.mxu0 %v3180
        %v3272 = vpop.f32.mrf.mxu0
        %v3273 = vadd.f32 %v3144, %v3272
        %v3274 = vpop.f32.mrf.mxu0
        %v3275 = vadd.f32 %v3144, %v3274
        %3276 = vmatprep.mubr.f32.mxu0 0.0
        %3277 = vmatmul.mubr.f32.gmra.mxu0 %v3183
        %v3278 = vpop.f32.mrf.mxu0
        %v3279 = vadd.f32 %v3149, %v3278
        %v3280 = vpop.f32.mrf.mxu0
        %v3281 = vadd.f32 %v3149, %v3280
        %3282 = vmatprep.mubr.f32.mxu0 0.0
        %3283 = vmatmul.mubr.f32.gmra.mxu0 %v3186
        %v3284 = vpop.f32.mrf.mxu0
        %v3285 = vadd.f32 %v3154, %v3284
        %v3286 = vpop.f32.mrf.mxu0
        %v3287 = vadd.f32 %v3154, %v3286
        %3288 = vmatprep.mubr.f32.mxu0 0.0
        %3289 = vmatmul.mubr.f32.gmra.mxu0 %v3189
        %v3290 = vpop.f32.mrf.mxu0
        %v3291 = vadd.f32 %v3159, %v3290
        %v3292 = vpop.f32.mrf.mxu0
        %v3293 = vadd.f32 %v3159, %v3292
        %3294 = vmatprep.mubr.f32.mxu0 0.0
        %3295 = vmatmul.mubr.f32.gmra.mxu0 %v3192
        %v3296 = vpop.f32.mrf.mxu0
        %v3297 = vadd.f32 %v3164, %v3296
        %v3298 = vpop.f32.mrf.mxu0
        %v3299 = vadd.f32 %v3164, %v3298
        %3300 = vmatprep.mubr.f32.mxu0 0.0
        %3301 = vmatmul.mubr.f32.gmra.mxu0 %v3195
        %v3302 = vpop.f32.mrf.mxu0
        %v3303 = vadd.f32 %v3169, %v3302
        %v3304 = vpop.f32.mrf.mxu0
        %v3305 = vadd.f32 %v3169, %v3304
        %3306 = vmatprep.mubr.f32.mxu0 0.0
        %3307 = vmatmul.mubr.f32.gmra.mxu0 %v3198
        %v3308 = vpop.f32.mrf.mxu0
        %v3309 = vadd.f32 %v3174, %v3308
        %v3310 = vpop.f32.mrf.mxu0
        %v3311 = vadd.f32 %v3174, %v3310
        %3312 = vdwg.mxu0
        %3313 = vmatprep.subr.mxu0 0.0
        %3314 = vmatpush1.msra.mxu0 0.0
        %3315 = vmatprep.subr.mxu0 0.0
        %3316 = vmatpush1.msra.mxu0 0.0
        %3317 = vmatprep.subr.mxu0 0.0
        %3318 = vmatpush1.msra.mxu0 0.0
        %3319 = vmatprep.subr.mxu0 0.0
        %3320 = vmatpush1.msra.mxu0 0.0
        %3321 = vmatprep.subr.mxu0 0.0
        %3322 = vmatpush1.msra.mxu0 0.0
        %3323 = vmatprep.subr.mxu0 0.0
        %3324 = vmatpush1.msra.mxu0 0.0
        %3325 = vmatprep.subr.mxu0 0.0
        %3326 = vmatpush1.msra.mxu0 0.0
        %3327 = vmatprep.subr.mxu0 0.0
        %3328 = vmatpush1.msra.mxu0 0.0
        %3329 = vmatprep.subr.mxu0 0.0
        %3330 = vmatpush1.msra.mxu0 0.0
        %3331 = vmatprep.subr.mxu0 0.0
        %3332 = vmatpush1.msra.mxu0 0.0
        %3333 = vmatprep.subr.mxu0 0.0
        %3334 = vmatpush1.msra.mxu0 0.0
        %3335 = vmatprep.subr.mxu0 0.0
        %3336 = vmatpush1.msra.mxu0 0.0
        %3337 = vmatprep.subr.mxu0 %v3135
        %3338 = vmatpush1.msra.mxu0 %v3134
        %3339 = vmatprep.subr.mxu0 %v3131
        %3340 = vmatpush1.msra.mxu0 %v3130
        %3341 = vmatprep.subr.mxu0 %v3127
        %3342 = vmatpush1.msra.mxu0 %v3126
        %3343 = vmatprep.subr.mxu0 %v3123
        %3344 = vmatpush1.msra.mxu0 %v3122
        %3345 = vmatprep.subr.mxu0 0.0
        %3346 = vmatpush2.msra.mxu0 0.0
        %3347 = vmatprep.subr.mxu0 0.0
        %3348 = vmatpush2.msra.mxu0 0.0
        %3349 = vmatprep.subr.mxu0 0.0
        %3350 = vmatpush2.msra.mxu0 0.0
        %3351 = vmatprep.subr.mxu0 0.0
        %3352 = vmatpush2.msra.mxu0 0.0
        %3353 = vmatprep.subr.mxu0 0.0
        %3354 = vmatpush2.msra.mxu0 0.0
        %3355 = vmatprep.subr.mxu0 0.0
        %3356 = vmatpush2.msra.mxu0 0.0
        %3357 = vmatprep.subr.mxu0 0.0
        %3358 = vmatpush2.msra.mxu0 0.0
        %3359 = vmatprep.subr.mxu0 0.0
        %3360 = vmatpush2.msra.mxu0 0.0
        %3361 = vmatprep.subr.mxu0 0.0
        %3362 = vmatpush2.msra.mxu0 0.0
        %3363 = vmatprep.subr.mxu0 0.0
        %3364 = vmatpush2.msra.mxu0 0.0
        %3365 = vmatprep.subr.mxu0 0.0
        %3366 = vmatpush2.msra.mxu0 0.0
        %3367 = vmatprep.subr.mxu0 0.0
        %3368 = vmatpush2.msra.mxu0 0.0
        %3369 = vmatprep.subr.mxu0 0.0
        %3370 = vmatpush2.msra.mxu0 0.0
        %3371 = vmatprep.subr.mxu0 0.0
        %3372 = vmatpush2.msra.mxu0 0.0
        %3373 = vmatprep.subr.mxu0 0.0
        %3374 = vmatpush2.msra.mxu0 0.0
        %3375 = vmatprep.subr.mxu0 0.0
        %3376 = vmatpush2.msra.mxu0 0.0
        %3377 = vmatprep.mubr.f32.mxu0 0.0
        %3378 = vmatmul.mubr.f32.gmra.mxu0 %v3177
        %v3379 = vpop.f32.mrf.mxu0
        %v3380 = vadd.f32 %v3139, %v3379
        %v3381 = vpop.f32.mrf.mxu0
        %v3382 = vadd.f32 %v3139, %v3381
        %3383 = vmatprep.mubr.f32.mxu0 0.0
        %3384 = vmatmul.mubr.f32.gmra.mxu0 %v3180
        %v3385 = vpop.f32.mrf.mxu0
        %v3386 = vadd.f32 %v3144, %v3385
        %v3387 = vpop.f32.mrf.mxu0
        %v3388 = vadd.f32 %v3144, %v3387
        %3389 = vmatprep.mubr.f32.mxu0 0.0
        %3390 = vmatmul.mubr.f32.gmra.mxu0 %v3183
        %v3391 = vpop.f32.mrf.mxu0
        %v3392 = vadd.f32 %v3149, %v3391
        %v3393 = vpop.f32.mrf.mxu0
        %v3394 = vadd.f32 %v3149, %v3393
        %3395 = vmatprep.mubr.f32.mxu0 0.0
        %3396 = vmatmul.mubr.f32.gmra.mxu0 %v3186
        %v3397 = vpop.f32.mrf.mxu0
        %v3398 = vadd.f32 %v3154, %v3397
        %v3399 = vpop.f32.mrf.mxu0
        %v3400 = vadd.f32 %v3154, %v3399
        %3401 = vmatprep.mubr.f32.mxu0 0.0
        %3402 = vmatmul.mubr.f32.gmra.mxu0 %v3189
        %v3403 = vpop.f32.mrf.mxu0
        %v3404 = vadd.f32 %v3159, %v3403
        %v3405 = vpop.f32.mrf.mxu0
        %v3406 = vadd.f32 %v3159, %v3405
        %3407 = vmatprep.mubr.f32.mxu0 0.0
        %3408 = vmatmul.mubr.f32.gmra.mxu0 %v3192
        %v3409 = vpop.f32.mrf.mxu0
        %v3410 = vadd.f32 %v3164, %v3409
        %v3411 = vpop.f32.mrf.mxu0
        %v3412 = vadd.f32 %v3164, %v3411
        %3413 = vmatprep.mubr.f32.mxu0 0.0
        %3414 = vmatmul.mubr.f32.gmra.mxu0 %v3195
        %v3415 = vpop.f32.mrf.mxu0
        %v3416 = vadd.f32 %v3169, %v3415
        %v3417 = vpop.f32.mrf.mxu0
        %v3418 = vadd.f32 %v3169, %v3417
        %3419 = vmatprep.mubr.f32.mxu0 0.0
        %3420 = vmatmul.mubr.f32.gmra.mxu0 %v3198
        %v3421 = vpop.f32.mrf.mxu0
        %v3422 = vadd.f32 %v3174, %v3421
        %v3423 = vpop.f32.mrf.mxu0
        %v3424 = vadd.f32 %v3174, %v3423
        %3425 = vdwg.mxu0
        %v3426 = vmax.f32 %v3267, 0.0
        %v3427 = vmax.f32 %v3269, 0.0
        %v3428 = vmax.f32 %v3380, 0.0
        %v3429 = vmax.f32 %v3382, 0.0
        %v3430 = vmax.f32 %v3273, 0.0
        %v3431 = vmax.f32 %v3275, 0.0
        %v3432 = vmax.f32 %v3386, 0.0
        %v3433 = vmax.f32 %v3388, 0.0
        %v3434 = vmax.f32 %v3279, 0.0
        %v3435 = vmax.f32 %v3281, 0.0
        %v3436 = vmax.f32 %v3392, 0.0
        %v3437 = vmax.f32 %v3394, 0.0
        %v3438 = vmax.f32 %v3285, 0.0
        %v3439 = vmax.f32 %v3287, 0.0
        %v3440 = vmax.f32 %v3398, 0.0
        %v3441 = vmax.f32 %v3400, 0.0
        %v3442 = vmax.f32 %v3291, 0.0
        %v3443 = vmax.f32 %v3293, 0.0
        %v3444 = vmax.f32 %v3404, 0.0
        %v3445 = vmax.f32 %v3406, 0.0
        %v3446 = vmax.f32 %v3297, 0.0
        %v3447 = vmax.f32 %v3299, 0.0
        %v3448 = vmax.f32 %v3410, 0.0
        %v3449 = vmax.f32 %v3412, 0.0
        %v3450 = vmax.f32 %v3303, 0.0
        %v3451 = vmax.f32 %v3305, 0.0
        %v3452 = vmax.f32 %v3416, 0.0
        %v3453 = vmax.f32 %v3418, 0.0
        %v3454 = vmax.f32 %v3309, 0.0
        %v3455 = vmax.f32 %v3311, 0.0
        %v3456 = vmax.f32 %v3422, 0.0
        %v3457 = vmax.f32 %v3424, 0.0
        %vm3458 = vcmask 523264
        %v3460 = vsel %vm3458, %v855, 0
        %v3463 = vsel %vm3458, %v856, 0
        %v3466 = vsel %vm3458, %v857, 0
        %v3469 = vsel %vm3458, %v858, 0
        %3471 = vmatprep.subr.mxu0 0.0
        %3472 = vmatpush1.msra.mxu0 0.0
        %3473 = vmatprep.subr.mxu0 0.0
        %3474 = vmatpush1.msra.mxu0 0.0
        %3475 = vmatprep.subr.mxu0 0.0
        %3476 = vmatpush1.msra.mxu0 0.0
        %3477 = vmatprep.subr.mxu0 0.0
        %3478 = vmatpush1.msra.mxu0 0.0
        %3479 = vmatprep.subr.mxu0 0.0
        %3480 = vmatpush1.msra.mxu0 0.0
        %3481 = vmatprep.subr.mxu0 0.0
        %3482 = vmatpush1.msra.mxu0 0.0
        %3483 = vmatprep.subr.mxu0 0.0
        %3484 = vmatpush1.msra.mxu0 0.0
        %3485 = vmatprep.subr.mxu0 0.0
        %3486 = vmatpush1.msra.mxu0 0.0
        %3487 = vmatprep.subr.mxu0 %v3455
        %3488 = vmatpush1.msra.mxu0 %v3454
        %3489 = vmatprep.subr.mxu0 %v3451
        %3490 = vmatpush1.msra.mxu0 %v3450
        %3491 = vmatprep.subr.mxu0 %v3447
        %3492 = vmatpush1.msra.mxu0 %v3446
        %3493 = vmatprep.subr.mxu0 %v3443
        %3494 = vmatpush1.msra.mxu0 %v3442
        %3495 = vmatprep.subr.mxu0 %v3439
        %3496 = vmatpush1.msra.mxu0 %v3438
        %3497 = vmatprep.subr.mxu0 %v3435
        %3498 = vmatpush1.msra.mxu0 %v3434
        %3499 = vmatprep.subr.mxu0 %v3431
        %3500 = vmatpush1.msra.mxu0 %v3430
        %3501 = vmatprep.subr.mxu0 %v3427
        %3502 = vmatpush1.msra.mxu0 %v3426
        %3503 = vmatprep.subr.mxu0 0.0
        %3504 = vmatpush2.msra.mxu0 0.0
        %3505 = vmatprep.subr.mxu0 0.0
        %3506 = vmatpush2.msra.mxu0 0.0
        %3507 = vmatprep.subr.mxu0 0.0
        %3508 = vmatpush2.msra.mxu0 0.0
        %3509 = vmatprep.subr.mxu0 0.0
        %3510 = vmatpush2.msra.mxu0 0.0
        %3511 = vmatprep.subr.mxu0 0.0
        %3512 = vmatpush2.msra.mxu0 0.0
        %3513 = vmatprep.subr.mxu0 0.0
        %3514 = vmatpush2.msra.mxu0 0.0
        %3515 = vmatprep.subr.mxu0 0.0
        %3516 = vmatpush2.msra.mxu0 0.0
        %3517 = vmatprep.subr.mxu0 0.0
        %3518 = vmatpush2.msra.mxu0 0.0
        %3519 = vmatprep.subr.mxu0 0.0
        %3520 = vmatpush2.msra.mxu0 0.0
        %3521 = vmatprep.subr.mxu0 0.0
        %3522 = vmatpush2.msra.mxu0 0.0
        %3523 = vmatprep.subr.mxu0 0.0
        %3524 = vmatpush2.msra.mxu0 0.0
        %3525 = vmatprep.subr.mxu0 0.0
        %3526 = vmatpush2.msra.mxu0 0.0
        %3527 = vmatprep.subr.mxu0 0.0
        %3528 = vmatpush2.msra.mxu0 0.0
        %3529 = vmatprep.subr.mxu0 0.0
        %3530 = vmatpush2.msra.mxu0 0.0
        %3531 = vmatprep.subr.mxu0 0.0
        %3532 = vmatpush2.msra.mxu0 0.0
        %3533 = vmatprep.subr.mxu0 0.0
        %3534 = vmatpush2.msra.mxu0 0.0
        %3535 = vmatprep.mubr.f32.mxu0 0.0
        %3536 = vmatmul.mubr.f32.gmra.mxu0 %v3460
        %v3537 = vpop.f32.mrf.mxu0
        %v3538 = vadd.f32 0.0, %v3537
        %v3539 = vpop.f32.mrf.mxu0
        %v3540 = vadd.f32 0.0, %v3539
        %3541 = vmatprep.mubr.f32.mxu0 0.0
        %3542 = vmatmul.mubr.f32.gmra.mxu0 %v3463
        %v3543 = vpop.f32.mrf.mxu0
        %v3544 = vadd.f32 0.0, %v3543
        %v3545 = vpop.f32.mrf.mxu0
        %v3546 = vadd.f32 0.0, %v3545
        %3547 = vmatprep.mubr.f32.mxu0 0.0
        %3548 = vmatmul.mubr.f32.gmra.mxu0 %v3466
        %v3549 = vpop.f32.mrf.mxu0
        %v3550 = vadd.f32 0.0, %v3549
        %v3551 = vpop.f32.mrf.mxu0
        %v3552 = vadd.f32 0.0, %v3551
        %3553 = vmatprep.mubr.f32.mxu0 0.0
        %3554 = vmatmul.mubr.f32.gmra.mxu0 %v3469
        %v3555 = vpop.f32.mrf.mxu0
        %v3556 = vadd.f32 0.0, %v3555
        %v3557 = vpop.f32.mrf.mxu0
        %v3558 = vadd.f32 0.0, %v3557
        %3559 = vdwg.mxu0
        %3560 = vmatprep.subr.mxu0 0.0
        %3561 = vmatpush1.msra.mxu0 0.0
        %3562 = vmatprep.subr.mxu0 0.0
        %3563 = vmatpush1.msra.mxu0 0.0
        %3564 = vmatprep.subr.mxu0 0.0
        %3565 = vmatpush1.msra.mxu0 0.0
        %3566 = vmatprep.subr.mxu0 0.0
        %3567 = vmatpush1.msra.mxu0 0.0
        %3568 = vmatprep.subr.mxu0 0.0
        %3569 = vmatpush1.msra.mxu0 0.0
        %3570 = vmatprep.subr.mxu0 0.0
        %3571 = vmatpush1.msra.mxu0 0.0
        %3572 = vmatprep.subr.mxu0 0.0
        %3573 = vmatpush1.msra.mxu0 0.0
        %3574 = vmatprep.subr.mxu0 0.0
        %3575 = vmatpush1.msra.mxu0 0.0
        %3576 = vmatprep.subr.mxu0 %v3457
        %3577 = vmatpush1.msra.mxu0 %v3456
        %3578 = vmatprep.subr.mxu0 %v3453
        %3579 = vmatpush1.msra.mxu0 %v3452
        %3580 = vmatprep.subr.mxu0 %v3449
        %3581 = vmatpush1.msra.mxu0 %v3448
        %3582 = vmatprep.subr.mxu0 %v3445
        %3583 = vmatpush1.msra.mxu0 %v3444
        %3584 = vmatprep.subr.mxu0 %v3441
        %3585 = vmatpush1.msra.mxu0 %v3440
        %3586 = vmatprep.subr.mxu0 %v3437
        %3587 = vmatpush1.msra.mxu0 %v3436
        %3588 = vmatprep.subr.mxu0 %v3433
        %3589 = vmatpush1.msra.mxu0 %v3432
        %3590 = vmatprep.subr.mxu0 %v3429
        %3591 = vmatpush1.msra.mxu0 %v3428
        %3592 = vmatprep.subr.mxu0 0.0
        %3593 = vmatpush2.msra.mxu0 0.0
        %3594 = vmatprep.subr.mxu0 0.0
        %3595 = vmatpush2.msra.mxu0 0.0
        %3596 = vmatprep.subr.mxu0 0.0
        %3597 = vmatpush2.msra.mxu0 0.0
        %3598 = vmatprep.subr.mxu0 0.0
        %3599 = vmatpush2.msra.mxu0 0.0
        %3600 = vmatprep.subr.mxu0 0.0
        %3601 = vmatpush2.msra.mxu0 0.0
        %3602 = vmatprep.subr.mxu0 0.0
        %3603 = vmatpush2.msra.mxu0 0.0
        %3604 = vmatprep.subr.mxu0 0.0
        %3605 = vmatpush2.msra.mxu0 0.0
        %3606 = vmatprep.subr.mxu0 0.0
        %3607 = vmatpush2.msra.mxu0 0.0
        %3608 = vmatprep.subr.mxu0 0.0
        %3609 = vmatpush2.msra.mxu0 0.0
        %3610 = vmatprep.subr.mxu0 0.0
        %3611 = vmatpush2.msra.mxu0 0.0
        %3612 = vmatprep.subr.mxu0 0.0
        %3613 = vmatpush2.msra.mxu0 0.0
        %3614 = vmatprep.subr.mxu0 0.0
        %3615 = vmatpush2.msra.mxu0 0.0
        %3616 = vmatprep.subr.mxu0 0.0
        %3617 = vmatpush2.msra.mxu0 0.0
        %3618 = vmatprep.subr.mxu0 0.0
        %3619 = vmatpush2.msra.mxu0 0.0
        %3620 = vmatprep.subr.mxu0 0.0
        %3621 = vmatpush2.msra.mxu0 0.0
        %3622 = vmatprep.subr.mxu0 0.0
        %3623 = vmatpush2.msra.mxu0 0.0
        %3624 = vmatprep.mubr.f32.mxu0 0.0
        %3625 = vmatmul.mubr.f32.gmra.mxu0 %v3460
        %v3626 = vpop.f32.mrf.mxu0
        %v3627 = vadd.f32 0.0, %v3626
        %v3628 = vpop.f32.mrf.mxu0
        %v3629 = vadd.f32 0.0, %v3628
        %3630 = vmatprep.mubr.f32.mxu0 0.0
        %3631 = vmatmul.mubr.f32.gmra.mxu0 %v3463
        %v3632 = vpop.f32.mrf.mxu0
        %v3633 = vadd.f32 0.0, %v3632
        %v3634 = vpop.f32.mrf.mxu0
        %v3635 = vadd.f32 0.0, %v3634
        %3636 = vmatprep.mubr.f32.mxu0 0.0
        %3637 = vmatmul.mubr.f32.gmra.mxu0 %v3466
        %v3638 = vpop.f32.mrf.mxu0
        %v3639 = vadd.f32 0.0, %v3638
        %v3640 = vpop.f32.mrf.mxu0
        %v3641 = vadd.f32 0.0, %v3640
        %3642 = vmatprep.mubr.f32.mxu0 0.0
        %3643 = vmatmul.mubr.f32.gmra.mxu0 %v3469
        %v3644 = vpop.f32.mrf.mxu0
        %v3645 = vadd.f32 0.0, %v3644
        %v3646 = vpop.f32.mrf.mxu0
        %v3647 = vadd.f32 0.0, %v3646
        %3648 = vdwg.mxu0
        %v3649 = vadd.f32 %v3120, %v3538
        %v3650 = vadd.f32 %v3121, %v3540
        %v3651 = vadd.f32 %v3122, %v3627
        %v3652 = vadd.f32 %v3123, %v3629
        %v3653 = vadd.f32 %v3124, %v3544
        %v3654 = vadd.f32 %v3125, %v3546
        %v3655 = vadd.f32 %v3126, %v3633
        %v3656 = vadd.f32 %v3127, %v3635
        %v3657 = vadd.f32 %v3128, %v3550
        %v3658 = vadd.f32 %v3129, %v3552
        %v3659 = vadd.f32 %v3130, %v3639
        %v3660 = vadd.f32 %v3131, %v3641
        %v3661 = vadd.f32 %v3132, %v3556
        %v3662 = vadd.f32 %v3133, %v3558
        %v3663 = vadd.f32 %v3134, %v3645
        %v3664 = vadd.f32 %v3135, %v3647
        %3666 = vset.pattern.permute.xlu0 0
        %3667 = vperm.xlu0 %3666, %v859
        %v3668 = vpop.permute.xlu0 %3667
        %3671 = vset.pattern.permute.xlu0 0
        %3672 = vperm.xlu0 %3671, %v860
        %v3673 = vpop.permute.xlu0 %3672
        %3676 = vset.pattern.permute.xlu0 0
        %3677 = vperm.xlu0 %3676, %v861
        %v3678 = vpop.permute.xlu0 %3677
        %3681 = vset.pattern.permute.xlu0 0
        %3682 = vperm.xlu0 %3681, %v862
        %v3683 = vpop.permute.xlu0 %3682
        %v3685 = vadd.f32 %v3649, %v3668
        %v3686 = vadd.f32 %v3650, %v3668
        %v3687 = vadd.f32 %v3651, %v3668
        %v3688 = vadd.f32 %v3652, %v3668
        %v3689 = vadd.f32 %v3653, %v3673
        %v3690 = vadd.f32 %v3654, %v3673
        %v3691 = vadd.f32 %v3655, %v3673
        %v3692 = vadd.f32 %v3656, %v3673
        %v3693 = vadd.f32 %v3657, %v3678
        %v3694 = vadd.f32 %v3658, %v3678
        %v3695 = vadd.f32 %v3659, %v3678
        %v3696 = vadd.f32 %v3660, %v3678
        %v3697 = vadd.f32 %v3661, %v3683
        %v3698 = vadd.f32 %v3662, %v3683
        %v3699 = vadd.f32 %v3663, %v3683
        %v3700 = vadd.f32 %v3664, %v3683
        %v3701 = vmul.f32 %v3685, %v3685
        %v3702 = vmul.f32 %v3686, %v3686
        %v3703 = vmul.f32 %v3687, %v3687
        %v3704 = vmul.f32 %v3688, %v3688
        %v3705 = vmul.f32 %v3689, %v3689
        %v3706 = vmul.f32 %v3690, %v3690
        %v3707 = vmul.f32 %v3691, %v3691
        %v3708 = vmul.f32 %v3692, %v3692
        %v3709 = vmul.f32 %v3693, %v3693
        %v3710 = vmul.f32 %v3694, %v3694
        %v3711 = vmul.f32 %v3695, %v3695
        %v3712 = vmul.f32 %v3696, %v3696
        %v3713 = vmul.f32 %v3697, %v3697
        %v3714 = vmul.f32 %v3698, %v3698
        %v3715 = vmul.f32 %v3699, %v3699
        %v3716 = vmul.f32 %v3700, %v3700
        %3717 = vmatprep.subr.mxu0 %v1188
        %3718 = vmatpush1.msra.mxu0 %v1187
        %3719 = vmatprep.subr.mxu0 %v1184
        %3720 = vmatpush1.msra.mxu0 %v1183
        %3721 = vmatprep.subr.mxu0 %v1180
        %3722 = vmatpush1.msra.mxu0 %v1179
        %3723 = vmatprep.subr.mxu0 %v1176
        %3724 = vmatpush1.msra.mxu0 %v1175
        %3725 = vmatprep.subr.mxu0 %v1172
        %3726 = vmatpush1.msra.mxu0 %v1171
        %3727 = vmatprep.subr.mxu0 %v1168
        %3728 = vmatpush1.msra.mxu0 %v1167
        %3729 = vmatprep.subr.mxu0 %v1164
        %3730 = vmatpush1.msra.mxu0 %v1163
        %3731 = vmatprep.subr.mxu0 %v1160
        %3732 = vmatpush1.msra.mxu0 %v1159
        %3733 = vmatprep.subr.mxu0 %v1156
        %3734 = vmatpush1.msra.mxu0 %v1155
        %3735 = vmatprep.subr.mxu0 %v1152
        %3736 = vmatpush1.msra.mxu0 %v1151
        %3737 = vmatprep.subr.mxu0 %v1148
        %3738 = vmatpush1.msra.mxu0 %v1147
        %3739 = vmatprep.subr.mxu0 %v1144
        %3740 = vmatpush1.msra.mxu0 %v1143
        %3741 = vmatprep.subr.mxu0 %v1140
        %3742 = vmatpush1.msra.mxu0 %v1139
        %3743 = vmatprep.subr.mxu0 %v1136
        %3744 = vmatpush1.msra.mxu0 %v1135
        %3745 = vmatprep.subr.mxu0 %v1132
        %3746 = vmatpush1.msra.mxu0 %v1131
        %3747 = vmatprep.subr.mxu0 %v1128
        %3748 = vmatpush1.msra.mxu0 %v1127
        %3749 = vmatprep.subr.mxu0 %v1252
        %3750 = vmatpush2.msra.mxu0 %v1251
        %3751 = vmatprep.subr.mxu0 %v1248
        %3752 = vmatpush2.msra.mxu0 %v1247
        %3753 = vmatprep.subr.mxu0 %v1244
        %3754 = vmatpush2.msra.mxu0 %v1243
        %3755 = vmatprep.subr.mxu0 %v1240
        %3756 = vmatpush2.msra.mxu0 %v1239
        %3757 = vmatprep.subr.mxu0 %v1236
        %3758 = vmatpush2.msra.mxu0 %v1235
        %3759 = vmatprep.subr.mxu0 %v1232
        %3760 = vmatpush2.msra.mxu0 %v1231
        %3761 = vmatprep.subr.mxu0 %v1228
        %3762 = vmatpush2.msra.mxu0 %v1227
        %3763 = vmatprep.subr.mxu0 %v1224
        %3764 = vmatpush2.msra.mxu0 %v1223
        %3765 = vmatprep.subr.mxu0 %v1220
        %3766 = vmatpush2.msra.mxu0 %v1219
        %3767 = vmatprep.subr.mxu0 %v1216
        %3768 = vmatpush2.msra.mxu0 %v1215
        %3769 = vmatprep.subr.mxu0 %v1212
        %3770 = vmatpush2.msra.mxu0 %v1211
        %3771 = vmatprep.subr.mxu0 %v1208
        %3772 = vmatpush2.msra.mxu0 %v1207
        %3773 = vmatprep.subr.mxu0 %v1204
        %3774 = vmatpush2.msra.mxu0 %v1203
        %3775 = vmatprep.subr.mxu0 %v1200
        %3776 = vmatpush2.msra.mxu0 %v1199
        %3777 = vmatprep.subr.mxu0 %v1196
        %3778 = vmatpush2.msra.mxu0 %v1195
        %3779 = vmatprep.subr.mxu0 %v1192
        %3780 = vmatpush2.msra.mxu0 %v1191
        %3781 = vmatprep.mubr.f32.mxu0 %v3686
        %3782 = vmatmul.mubr.f32.gmra.mxu0 %v3685
        %v3783 = vpop.f32.mrf.mxu0
        %v3784 = vadd.f32 0.0, %v3783
        %v3785 = vpop.f32.mrf.mxu0
        %v3786 = vadd.f32 0.0, %v3785
        %3787 = vmatprep.mubr.f32.mxu0 %v3690
        %3788 = vmatmul.mubr.f32.gmra.mxu0 %v3689
        %v3789 = vpop.f32.mrf.mxu0
        %v3790 = vadd.f32 0.0, %v3789
        %v3791 = vpop.f32.mrf.mxu0
        %v3792 = vadd.f32 0.0, %v3791
        %3793 = vmatprep.mubr.f32.mxu0 %v3694
        %3794 = vmatmul.mubr.f32.gmra.mxu0 %v3693
        %v3795 = vpop.f32.mrf.mxu0
        %v3796 = vadd.f32 0.0, %v3795
        %v3797 = vpop.f32.mrf.mxu0
        %v3798 = vadd.f32 0.0, %v3797
        %3799 = vmatprep.mubr.f32.mxu0 %v3698
        %3800 = vmatmul.mubr.f32.gmra.mxu0 %v3697
        %v3801 = vpop.f32.mrf.mxu0
        %v3802 = vadd.f32 0.0, %v3801
        %v3803 = vpop.f32.mrf.mxu0
        %v3804 = vadd.f32 0.0, %v3803
        %3805 = vmatprep.mubr.f32.mxu0 %v3702
        %3806 = vmatmul.mubr.f32.gmra.mxu0 %v3701
        %v3807 = vpop.f32.mrf.mxu0
        %v3808 = vadd.f32 0.0, %v3807
        %v3809 = vpop.f32.mrf.mxu0
        %v3810 = vadd.f32 0.0, %v3809
        %3811 = vmatprep.mubr.f32.mxu0 %v3706
        %3812 = vmatmul.mubr.f32.gmra.mxu0 %v3705
        %v3813 = vpop.f32.mrf.mxu0
        %v3814 = vadd.f32 0.0, %v3813
        %v3815 = vpop.f32.mrf.mxu0
        %v3816 = vadd.f32 0.0, %v3815
        %3817 = vmatprep.mubr.f32.mxu0 %v3710
        %3818 = vmatmul.mubr.f32.gmra.mxu0 %v3709
        %v3819 = vpop.f32.mrf.mxu0
        %v3820 = vadd.f32 0.0, %v3819
        %v3821 = vpop.f32.mrf.mxu0
        %v3822 = vadd.f32 0.0, %v3821
        %3823 = vmatprep.mubr.f32.mxu0 %v3714
        %3824 = vmatmul.mubr.f32.gmra.mxu0 %v3713
        %v3825 = vpop.f32.mrf.mxu0
        %v3826 = vadd.f32 0.0, %v3825
        %v3827 = vpop.f32.mrf.mxu0
        %v3828 = vadd.f32 0.0, %v3827
        %3829 = vdwg.mxu0
        %3830 = vmatprep.subr.mxu0 %v1316
        %3831 = vmatpush1.msra.mxu0 %v1315
        %3832 = vmatprep.subr.mxu0 %v1312
        %3833 = vmatpush1.msra.mxu0 %v1311
        %3834 = vmatprep.subr.mxu0 %v1308
        %3835 = vmatpush1.msra.mxu0 %v1307
        %3836 = vmatprep.subr.mxu0 %v1304
        %3837 = vmatpush1.msra.mxu0 %v1303
        %3838 = vmatprep.subr.mxu0 %v1300
        %3839 = vmatpush1.msra.mxu0 %v1299
        %3840 = vmatprep.subr.mxu0 %v1296
        %3841 = vmatpush1.msra.mxu0 %v1295
        %3842 = vmatprep.subr.mxu0 %v1292
        %3843 = vmatpush1.msra.mxu0 %v1291
        %3844 = vmatprep.subr.mxu0 %v1288
        %3845 = vmatpush1.msra.mxu0 %v1287
        %3846 = vmatprep.subr.mxu0 %v1284
        %3847 = vmatpush1.msra.mxu0 %v1283
        %3848 = vmatprep.subr.mxu0 %v1280
        %3849 = vmatpush1.msra.mxu0 %v1279
        %3850 = vmatprep.subr.mxu0 %v1276
        %3851 = vmatpush1.msra.mxu0 %v1275
        %3852 = vmatprep.subr.mxu0 %v1272
        %3853 = vmatpush1.msra.mxu0 %v1271
        %3854 = vmatprep.subr.mxu0 %v1268
        %3855 = vmatpush1.msra.mxu0 %v1267
        %3856 = vmatprep.subr.mxu0 %v1264
        %3857 = vmatpush1.msra.mxu0 %v1263
        %3858 = vmatprep.subr.mxu0 %v1260
        %3859 = vmatpush1.msra.mxu0 %v1259
        %3860 = vmatprep.subr.mxu0 %v1256
        %3861 = vmatpush1.msra.mxu0 %v1255
        %3862 = vmatprep.subr.mxu0 %v1380
        %3863 = vmatpush2.msra.mxu0 %v1379
        %3864 = vmatprep.subr.mxu0 %v1376
        %3865 = vmatpush2.msra.mxu0 %v1375
        %3866 = vmatprep.subr.mxu0 %v1372
        %3867 = vmatpush2.msra.mxu0 %v1371
        %3868 = vmatprep.subr.mxu0 %v1368
        %3869 = vmatpush2.msra.mxu0 %v1367
        %3870 = vmatprep.subr.mxu0 %v1364
        %3871 = vmatpush2.msra.mxu0 %v1363
        %3872 = vmatprep.subr.mxu0 %v1360
        %3873 = vmatpush2.msra.mxu0 %v1359
        %3874 = vmatprep.subr.mxu0 %v1356
        %3875 = vmatpush2.msra.mxu0 %v1355
        %3876 = vmatprep.subr.mxu0 %v1352
        %3877 = vmatpush2.msra.mxu0 %v1351
        %3878 = vmatprep.subr.mxu0 %v1348
        %3879 = vmatpush2.msra.mxu0 %v1347
        %3880 = vmatprep.subr.mxu0 %v1344
        %3881 = vmatpush2.msra.mxu0 %v1343
        %3882 = vmatprep.subr.mxu0 %v1340
        %3883 = vmatpush2.msra.mxu0 %v1339
        %3884 = vmatprep.subr.mxu0 %v1336
        %3885 = vmatpush2.msra.mxu0 %v1335
        %3886 = vmatprep.subr.mxu0 %v1332
        %3887 = vmatpush2.msra.mxu0 %v1331
        %3888 = vmatprep.subr.mxu0 %v1328
        %3889 = vmatpush2.msra.mxu0 %v1327
        %3890 = vmatprep.subr.mxu0 %v1324
        %3891 = vmatpush2.msra.mxu0 %v1323
        %3892 = vmatprep.subr.mxu0 %v1320
        %3893 = vmatpush2.msra.mxu0 %v1319
        %3894 = vmatprep.mubr.f32.mxu0 %v3688
        %3895 = vmatmul.mubr.f32.gmra.mxu0 %v3687
        %v3896 = vpop.f32.mrf.mxu0
        %v3897 = vadd.f32 %v3784, %v3896
        %v3898 = vpop.f32.mrf.mxu0
        %v3899 = vadd.f32 %v3786, %v3898
        %3900 = vmatprep.mubr.f32.mxu0 %v3692
        %3901 = vmatmul.mubr.f32.gmra.mxu0 %v3691
        %v3902 = vpop.f32.mrf.mxu0
        %v3903 = vadd.f32 %v3790, %v3902
        %v3904 = vpop.f32.mrf.mxu0
        %v3905 = vadd.f32 %v3792, %v3904
        %3906 = vmatprep.mubr.f32.mxu0 %v3696
        %3907 = vmatmul.mubr.f32.gmra.mxu0 %v3695
        %v3908 = vpop.f32.mrf.mxu0
        %v3909 = vadd.f32 %v3796, %v3908
        %v3910 = vpop.f32.mrf.mxu0
        %v3911 = vadd.f32 %v3798, %v3910
        %3912 = vmatprep.mubr.f32.mxu0 %v3700
        %3913 = vmatmul.mubr.f32.gmra.mxu0 %v3699
        %v3914 = vpop.f32.mrf.mxu0
        %v3915 = vadd.f32 %v3802, %v3914
        %v3916 = vpop.f32.mrf.mxu0
        %v3917 = vadd.f32 %v3804, %v3916
        %3918 = vmatprep.mubr.f32.mxu0 %v3704
        %3919 = vmatmul.mubr.f32.gmra.mxu0 %v3703
        %v3920 = vpop.f32.mrf.mxu0
        %v3921 = vadd.f32 %v3808, %v3920
        %v3922 = vpop.f32.mrf.mxu0
        %v3923 = vadd.f32 %v3810, %v3922
        %3924 = vmatprep.mubr.f32.mxu0 %v3708
        %3925 = vmatmul.mubr.f32.gmra.mxu0 %v3707
        %v3926 = vpop.f32.mrf.mxu0
        %v3927 = vadd.f32 %v3814, %v3926
        %v3928 = vpop.f32.mrf.mxu0
        %v3929 = vadd.f32 %v3816, %v3928
        %3930 = vmatprep.mubr.f32.mxu0 %v3712
        %3931 = vmatmul.mubr.f32.gmra.mxu0 %v3711
        %v3932 = vpop.f32.mrf.mxu0
        %v3933 = vadd.f32 %v3820, %v3932
        %v3934 = vpop.f32.mrf.mxu0
        %v3935 = vadd.f32 %v3822, %v3934
        %3936 = vmatprep.mubr.f32.mxu0 %v3716
        %3937 = vmatmul.mubr.f32.gmra.mxu0 %v3715
        %v3938 = vpop.f32.mrf.mxu0
        %v3939 = vadd.f32 %v3826, %v3938
        %v3940 = vpop.f32.mrf.mxu0
        %v3941 = vadd.f32 %v3828, %v3940
        %3942 = vdwg.mxu0
        %3943 = vmatprep.subr.mxu0 %v1190
        %3944 = vmatpush1.msra.mxu0 %v1189
        %3945 = vmatprep.subr.mxu0 %v1186
        %3946 = vmatpush1.msra.mxu0 %v1185
        %3947 = vmatprep.subr.mxu0 %v1182
        %3948 = vmatpush1.msra.mxu0 %v1181
        %3949 = vmatprep.subr.mxu0 %v1178
        %3950 = vmatpush1.msra.mxu0 %v1177
        %3951 = vmatprep.subr.mxu0 %v1174
        %3952 = vmatpush1.msra.mxu0 %v1173
        %3953 = vmatprep.subr.mxu0 %v1170
        %3954 = vmatpush1.msra.mxu0 %v1169
        %3955 = vmatprep.subr.mxu0 %v1166
        %3956 = vmatpush1.msra.mxu0 %v1165
        %3957 = vmatprep.subr.mxu0 %v1162
        %3958 = vmatpush1.msra.mxu0 %v1161
        %3959 = vmatprep.subr.mxu0 %v1158
        %3960 = vmatpush1.msra.mxu0 %v1157
        %3961 = vmatprep.subr.mxu0 %v1154
        %3962 = vmatpush1.msra.mxu0 %v1153
        %3963 = vmatprep.subr.mxu0 %v1150
        %3964 = vmatpush1.msra.mxu0 %v1149
        %3965 = vmatprep.subr.mxu0 %v1146
        %3966 = vmatpush1.msra.mxu0 %v1145
        %3967 = vmatprep.subr.mxu0 %v1142
        %3968 = vmatpush1.msra.mxu0 %v1141
        %3969 = vmatprep.subr.mxu0 %v1138
        %3970 = vmatpush1.msra.mxu0 %v1137
        %3971 = vmatprep.subr.mxu0 %v1134
        %3972 = vmatpush1.msra.mxu0 %v1133
        %3973 = vmatprep.subr.mxu0 %v1130
        %3974 = vmatpush1.msra.mxu0 %v1129
        %3975 = vmatprep.subr.mxu0 %v1254
        %3976 = vmatpush2.msra.mxu0 %v1253
        %3977 = vmatprep.subr.mxu0 %v1250
        %3978 = vmatpush2.msra.mxu0 %v1249
        %3979 = vmatprep.subr.mxu0 %v1246
        %3980 = vmatpush2.msra.mxu0 %v1245
        %3981 = vmatprep.subr.mxu0 %v1242
        %3982 = vmatpush2.msra.mxu0 %v1241
        %3983 = vmatprep.subr.mxu0 %v1238
        %3984 = vmatpush2.msra.mxu0 %v1237
        %3985 = vmatprep.subr.mxu0 %v1234
        %3986 = vmatpush2.msra.mxu0 %v1233
        %3987 = vmatprep.subr.mxu0 %v1230
        %3988 = vmatpush2.msra.mxu0 %v1229
        %3989 = vmatprep.subr.mxu0 %v1226
        %3990 = vmatpush2.msra.mxu0 %v1225
        %3991 = vmatprep.subr.mxu0 %v1222
        %3992 = vmatpush2.msra.mxu0 %v1221
        %3993 = vmatprep.subr.mxu0 %v1218
        %3994 = vmatpush2.msra.mxu0 %v1217
        %3995 = vmatprep.subr.mxu0 %v1214
        %3996 = vmatpush2.msra.mxu0 %v1213
        %3997 = vmatprep.subr.mxu0 %v1210
        %3998 = vmatpush2.msra.mxu0 %v1209
        %3999 = vmatprep.subr.mxu0 %v1206
        %4000 = vmatpush2.msra.mxu0 %v1205
        %4001 = vmatprep.subr.mxu0 %v1202
        %4002 = vmatpush2.msra.mxu0 %v1201
        %4003 = vmatprep.subr.mxu0 %v1198
        %4004 = vmatpush2.msra.mxu0 %v1197
        %4005 = vmatprep.subr.mxu0 %v1194
        %4006 = vmatpush2.msra.mxu0 %v1193
        %4007 = vmatprep.mubr.f32.mxu0 %v3686
        %4008 = vmatmul.mubr.f32.gmra.mxu0 %v3685
        %v4009 = vpop.f32.mrf.mxu0
        %v4010 = vadd.f32 0.0, %v4009
        %v4011 = vpop.f32.mrf.mxu0
        %v4012 = vadd.f32 0.0, %v4011
        %4013 = vmatprep.mubr.f32.mxu0 %v3690
        %4014 = vmatmul.mubr.f32.gmra.mxu0 %v3689
        %v4015 = vpop.f32.mrf.mxu0
        %v4016 = vadd.f32 0.0, %v4015
        %v4017 = vpop.f32.mrf.mxu0
        %v4018 = vadd.f32 0.0, %v4017
        %4019 = vmatprep.mubr.f32.mxu0 %v3694
        %4020 = vmatmul.mubr.f32.gmra.mxu0 %v3693
        %v4021 = vpop.f32.mrf.mxu0
        %v4022 = vadd.f32 0.0, %v4021
        %v4023 = vpop.f32.mrf.mxu0
        %v4024 = vadd.f32 0.0, %v4023
        %4025 = vmatprep.mubr.f32.mxu0 %v3698
        %4026 = vmatmul.mubr.f32.gmra.mxu0 %v3697
        %v4027 = vpop.f32.mrf.mxu0
        %v4028 = vadd.f32 0.0, %v4027
        %v4029 = vpop.f32.mrf.mxu0
        %v4030 = vadd.f32 0.0, %v4029
        %4031 = vmatprep.mubr.f32.mxu0 %v3702
        %4032 = vmatmul.mubr.f32.gmra.mxu0 %v3701
        %v4033 = vpop.f32.mrf.mxu0
        %v4034 = vadd.f32 0.0, %v4033
        %v4035 = vpop.f32.mrf.mxu0
        %v4036 = vadd.f32 0.0, %v4035
        %4037 = vmatprep.mubr.f32.mxu0 %v3706
        %4038 = vmatmul.mubr.f32.gmra.mxu0 %v3705
        %v4039 = vpop.f32.mrf.mxu0
        %v4040 = vadd.f32 0.0, %v4039
        %v4041 = vpop.f32.mrf.mxu0
        %v4042 = vadd.f32 0.0, %v4041
        %4043 = vmatprep.mubr.f32.mxu0 %v3710
        %4044 = vmatmul.mubr.f32.gmra.mxu0 %v3709
        %v4045 = vpop.f32.mrf.mxu0
        %v4046 = vadd.f32 0.0, %v4045
        %v4047 = vpop.f32.mrf.mxu0
        %v4048 = vadd.f32 0.0, %v4047
        %4049 = vmatprep.mubr.f32.mxu0 %v3714
        %4050 = vmatmul.mubr.f32.gmra.mxu0 %v3713
        %v4051 = vpop.f32.mrf.mxu0
        %v4052 = vadd.f32 0.0, %v4051
        %v4053 = vpop.f32.mrf.mxu0
        %v4054 = vadd.f32 0.0, %v4053
        %4055 = vdwg.mxu0
        %4056 = vmatprep.subr.mxu0 %v1318
        %4057 = vmatpush1.msra.mxu0 %v1317
        %4058 = vmatprep.subr.mxu0 %v1314
        %4059 = vmatpush1.msra.mxu0 %v1313
        %4060 = vmatprep.subr.mxu0 %v1310
        %4061 = vmatpush1.msra.mxu0 %v1309
        %4062 = vmatprep.subr.mxu0 %v1306
        %4063 = vmatpush1.msra.mxu0 %v1305
        %4064 = vmatprep.subr.mxu0 %v1302
        %4065 = vmatpush1.msra.mxu0 %v1301
        %4066 = vmatprep.subr.mxu0 %v1298
        %4067 = vmatpush1.msra.mxu0 %v1297
        %4068 = vmatprep.subr.mxu0 %v1294
        %4069 = vmatpush1.msra.mxu0 %v1293
        %4070 = vmatprep.subr.mxu0 %v1290
        %4071 = vmatpush1.msra.mxu0 %v1289
        %4072 = vmatprep.subr.mxu0 %v1286
        %4073 = vmatpush1.msra.mxu0 %v1285
        %4074 = vmatprep.subr.mxu0 %v1282
        %4075 = vmatpush1.msra.mxu0 %v1281
        %4076 = vmatprep.subr.mxu0 %v1278
        %4077 = vmatpush1.msra.mxu0 %v1277
        %4078 = vmatprep.subr.mxu0 %v1274
        %4079 = vmatpush1.msra.mxu0 %v1273
        %4080 = vmatprep.subr.mxu0 %v1270
        %4081 = vmatpush1.msra.mxu0 %v1269
        %4082 = vmatprep.subr.mxu0 %v1266
        %4083 = vmatpush1.msra.mxu0 %v1265
        %4084 = vmatprep.subr.mxu0 %v1262
        %4085 = vmatpush1.msra.mxu0 %v1261
        %4086 = vmatprep.subr.mxu0 %v1258
        %4087 = vmatpush1.msra.mxu0 %v1257
        %4088 = vmatprep.subr.mxu0 %v1382
        %4089 = vmatpush2.msra.mxu0 %v1381
        %4090 = vmatprep.subr.mxu0 %v1378
        %4091 = vmatpush2.msra.mxu0 %v1377
        %4092 = vmatprep.subr.mxu0 %v1374
        %4093 = vmatpush2.msra.mxu0 %v1373
        %4094 = vmatprep.subr.mxu0 %v1370
        %4095 = vmatpush2.msra.mxu0 %v1369
        %4096 = vmatprep.subr.mxu0 %v1366
        %4097 = vmatpush2.msra.mxu0 %v1365
        %4098 = vmatprep.subr.mxu0 %v1362
        %4099 = vmatpush2.msra.mxu0 %v1361
        %4100 = vmatprep.subr.mxu0 %v1358
        %4101 = vmatpush2.msra.mxu0 %v1357
        %4102 = vmatprep.subr.mxu0 %v1354
        %4103 = vmatpush2.msra.mxu0 %v1353
        %4104 = vmatprep.subr.mxu0 %v1350
        %4105 = vmatpush2.msra.mxu0 %v1349
        %4106 = vmatprep.subr.mxu0 %v1346
        %4107 = vmatpush2.msra.mxu0 %v1345
        %4108 = vmatprep.subr.mxu0 %v1342
        %4109 = vmatpush2.msra.mxu0 %v1341
        %4110 = vmatprep.subr.mxu0 %v1338
        %4111 = vmatpush2.msra.mxu0 %v1337
        %4112 = vmatprep.subr.mxu0 %v1334
        %4113 = vmatpush2.msra.mxu0 %v1333
        %4114 = vmatprep.subr.mxu0 %v1330
        %4115 = vmatpush2.msra.mxu0 %v1329
        %4116 = vmatprep.subr.mxu0 %v1326
        %4117 = vmatpush2.msra.mxu0 %v1325
        %4118 = vmatprep.subr.mxu0 %v1322
        %4119 = vmatpush2.msra.mxu0 %v1321
        %4120 = vmatprep.mubr.f32.mxu0 %v3688
        %4121 = vmatmul.mubr.f32.gmra.mxu0 %v3687
        %v4122 = vpop.f32.mrf.mxu0
        %v4123 = vadd.f32 %v4010, %v4122
        %v4124 = vpop.f32.mrf.mxu0
        %v4125 = vadd.f32 %v4012, %v4124
        %4126 = vmatprep.mubr.f32.mxu0 %v3692
        %4127 = vmatmul.mubr.f32.gmra.mxu0 %v3691
        %v4128 = vpop.f32.mrf.mxu0
        %v4129 = vadd.f32 %v4016, %v4128
        %v4130 = vpop.f32.mrf.mxu0
        %v4131 = vadd.f32 %v4018, %v4130
        %4132 = vmatprep.mubr.f32.mxu0 %v3696
        %4133 = vmatmul.mubr.f32.gmra.mxu0 %v3695
        %v4134 = vpop.f32.mrf.mxu0
        %v4135 = vadd.f32 %v4022, %v4134
        %v4136 = vpop.f32.mrf.mxu0
        %v4137 = vadd.f32 %v4024, %v4136
        %4138 = vmatprep.mubr.f32.mxu0 %v3700
        %4139 = vmatmul.mubr.f32.gmra.mxu0 %v3699
        %v4140 = vpop.f32.mrf.mxu0
        %v4141 = vadd.f32 %v4028, %v4140
        %v4142 = vpop.f32.mrf.mxu0
        %v4143 = vadd.f32 %v4030, %v4142
        %4144 = vmatprep.mubr.f32.mxu0 %v3704
        %4145 = vmatmul.mubr.f32.gmra.mxu0 %v3703
        %v4146 = vpop.f32.mrf.mxu0
        %v4147 = vadd.f32 %v4034, %v4146
        %v4148 = vpop.f32.mrf.mxu0
        %v4149 = vadd.f32 %v4036, %v4148
        %4150 = vmatprep.mubr.f32.mxu0 %v3708
        %4151 = vmatmul.mubr.f32.gmra.mxu0 %v3707
        %v4152 = vpop.f32.mrf.mxu0
        %v4153 = vadd.f32 %v4040, %v4152
        %v4154 = vpop.f32.mrf.mxu0
        %v4155 = vadd.f32 %v4042, %v4154
        %4156 = vmatprep.mubr.f32.mxu0 %v3712
        %4157 = vmatmul.mubr.f32.gmra.mxu0 %v3711
        %v4158 = vpop.f32.mrf.mxu0
        %v4159 = vadd.f32 %v4046, %v4158
        %v4160 = vpop.f32.mrf.mxu0
        %v4161 = vadd.f32 %v4048, %v4160
        %4162 = vmatprep.mubr.f32.mxu0 %v3716
        %4163 = vmatmul.mubr.f32.gmra.mxu0 %v3715
        %v4164 = vpop.f32.mrf.mxu0
        %v4165 = vadd.f32 %v4052, %v4164
        %v4166 = vpop.f32.mrf.mxu0
        %v4167 = vadd.f32 %v4054, %v4166
        %4168 = vdwg.mxu0
        %v4169 = vmul.f32 %v3897, %v3897
        %v4170 = vmul.f32 %v3899, %v3899
        %v4171 = vmul.f32 %v4123, %v4123
        %v4172 = vmul.f32 %v4125, %v4125
        %v4173 = vmul.f32 %v3903, %v3903
        %v4174 = vmul.f32 %v3905, %v3905
        %v4175 = vmul.f32 %v4129, %v4129
        %v4176 = vmul.f32 %v4131, %v4131
        %v4177 = vmul.f32 %v3909, %v3909
        %v4178 = vmul.f32 %v3911, %v3911
        %v4179 = vmul.f32 %v4135, %v4135
        %v4180 = vmul.f32 %v4137, %v4137
        %v4181 = vmul.f32 %v3915, %v3915
        %v4182 = vmul.f32 %v3917, %v3917
        %v4183 = vmul.f32 %v4141, %v4141
        %v4184 = vmul.f32 %v4143, %v4143
        %v4185 = vsub.f32 %v3921, %v4169
        %v4186 = vsub.f32 %v3923, %v4170
        %v4187 = vsub.f32 %v4147, %v4171
        %v4188 = vsub.f32 %v4149, %v4172
        %v4189 = vsub.f32 %v3927, %v4173
        %v4190 = vsub.f32 %v3929, %v4174
        %v4191 = vsub.f32 %v4153, %v4175
        %v4192 = vsub.f32 %v4155, %v4176
        %v4193 = vsub.f32 %v3933, %v4177
        %v4194 = vsub.f32 %v3935, %v4178
        %v4195 = vsub.f32 %v4159, %v4179
        %v4196 = vsub.f32 %v4161, %v4180
        %v4197 = vsub.f32 %v3939, %v4181
        %v4198 = vsub.f32 %v3941, %v4182
        %v4199 = vsub.f32 %v4165, %v4183
        %v4200 = vsub.f32 %v4167, %v4184
        %v4201 = vadd.f32 %v4185, 1e-05
        %v4202 = vadd.f32 %v4186, 1e-05
        %v4203 = vadd.f32 %v4187, 1e-05
        %v4204 = vadd.f32 %v4188, 1e-05
        %v4205 = vadd.f32 %v4189, 1e-05
        %v4206 = vadd.f32 %v4190, 1e-05
        %v4207 = vadd.f32 %v4191, 1e-05
        %v4208 = vadd.f32 %v4192, 1e-05
        %v4209 = vadd.f32 %v4193, 1e-05
        %v4210 = vadd.f32 %v4194, 1e-05
        %v4211 = vadd.f32 %v4195, 1e-05
        %v4212 = vadd.f32 %v4196, 1e-05
        %v4213 = vadd.f32 %v4197, 1e-05
        %v4214 = vadd.f32 %v4198, 1e-05
        %v4215 = vadd.f32 %v4199, 1e-05
        %v4216 = vadd.f32 %v4200, 1e-05
        %v4217 = vrsqrt.pop %v4201
        %v4218 = vrsqrt.pop %v4202
        %v4219 = vrsqrt.pop %v4203
        %v4220 = vrsqrt.pop %v4204
        %v4221 = vrsqrt.pop %v4205
        %v4222 = vrsqrt.pop %v4206
        %v4223 = vrsqrt.pop %v4207
        %v4224 = vrsqrt.pop %v4208
        %v4225 = vrsqrt.pop %v4209
        %v4226 = vrsqrt.pop %v4210
        %v4227 = vrsqrt.pop %v4211
        %v4228 = vrsqrt.pop %v4212
        %v4229 = vrsqrt.pop %v4213
        %v4230 = vrsqrt.pop %v4214
        %v4231 = vrsqrt.pop %v4215
        %v4232 = vrsqrt.pop %v4216
        %4234 = vset.pattern.permute.xlu0 0
        %4235 = vperm.xlu0 %4234, %v863
        %v4236 = vpop.permute.xlu0 %4235
        %4239 = vset.pattern.permute.xlu0 0
        %4240 = vperm.xlu0 %4239, %v864
        %v4241 = vpop.permute.xlu0 %4240
        %4244 = vset.pattern.permute.xlu0 0
        %4245 = vperm.xlu0 %4244, %v865
        %v4246 = vpop.permute.xlu0 %4245
        %4249 = vset.pattern.permute.xlu0 0
        %4250 = vperm.xlu0 %4249, %v866
        %v4251 = vpop.permute.xlu0 %4250
        %v4253 = vmul.f32 %v4236, %v4217
        %v4254 = vmul.f32 %v4236, %v4218
        %v4255 = vmul.f32 %v4236, %v4219
        %v4256 = vmul.f32 %v4236, %v4220
        %v4257 = vmul.f32 %v4241, %v4221
        %v4258 = vmul.f32 %v4241, %v4222
        %v4259 = vmul.f32 %v4241, %v4223
        %v4260 = vmul.f32 %v4241, %v4224
        %v4261 = vmul.f32 %v4246, %v4225
        %v4262 = vmul.f32 %v4246, %v4226
        %v4263 = vmul.f32 %v4246, %v4227
        %v4264 = vmul.f32 %v4246, %v4228
        %v4265 = vmul.f32 %v4251, %v4229
        %v4266 = vmul.f32 %v4251, %v4230
        %v4267 = vmul.f32 %v4251, %v4231
        %v4268 = vmul.f32 %v4251, %v4232
        %v4269 = vmul.f32 %v3685, %v4253
        %v4270 = vmul.f32 %v3686, %v4254
        %v4271 = vmul.f32 %v3687, %v4255
        %v4272 = vmul.f32 %v3688, %v4256
        %v4273 = vmul.f32 %v3689, %v4257
        %v4274 = vmul.f32 %v3690, %v4258
        %v4275 = vmul.f32 %v3691, %v4259
        %v4276 = vmul.f32 %v3692, %v4260
        %v4277 = vmul.f32 %v3693, %v4261
        %v4278 = vmul.f32 %v3694, %v4262
        %v4279 = vmul.f32 %v3695, %v4263
        %v4280 = vmul.f32 %v3696, %v4264
        %v4281 = vmul.f32 %v3697, %v4265
        %v4282 = vmul.f32 %v3698, %v4266
        %v4283 = vmul.f32 %v3699, %v4267
        %v4284 = vmul.f32 %v3700, %v4268
        %v4285 = vmul.f32 %v3897, %v4253
        %v4286 = vmul.f32 %v3899, %v4254
        %v4287 = vmul.f32 %v4123, %v4255
        %v4288 = vmul.f32 %v4125, %v4256
        %v4289 = vmul.f32 %v3903, %v4257
        %v4290 = vmul.f32 %v3905, %v4258
        %v4291 = vmul.f32 %v4129, %v4259
        %v4292 = vmul.f32 %v4131, %v4260
        %v4293 = vmul.f32 %v3909, %v4261
        %v4294 = vmul.f32 %v3911, %v4262
        %v4295 = vmul.f32 %v4135, %v4263
        %v4296 = vmul.f32 %v4137, %v4264
        %v4297 = vmul.f32 %v3915, %v4265
        %v4298 = vmul.f32 %v3917, %v4266
        %v4299 = vmul.f32 %v4141, %v4267
        %v4300 = vmul.f32 %v4143, %v4268
        %4302 = vset.pattern.permute.xlu0 0
        %4303 = vperm.xlu0 %4302, %v867
        %v4304 = vpop.permute.xlu0 %4303
        %4307 = vset.pattern.permute.xlu0 0
        %4308 = vperm.xlu0 %4307, %v868
        %v4309 = vpop.permute.xlu0 %4308
        %4312 = vset.pattern.permute.xlu0 0
        %4313 = vperm.xlu0 %4312, %v869
        %v4314 = vpop.permute.xlu0 %4313
        %4317 = vset.pattern.permute.xlu0 0
        %4318 = vperm.xlu0 %4317, %v870
        %v4319 = vpop.permute.xlu0 %4318
        %v4321 = vsub.f32 %v4304, %v4285
        %v4322 = vsub.f32 %v4304, %v4286
        %v4323 = vsub.f32 %v4304, %v4287
        %v4324 = vsub.f32 %v4304, %v4288
        %v4325 = vsub.f32 %v4309, %v4289
        %v4326 = vsub.f32 %v4309, %v4290
        %v4327 = vsub.f32 %v4309, %v4291
        %v4328 = vsub.f32 %v4309, %v4292
        %v4329 = vsub.f32 %v4314, %v4293
        %v4330 = vsub.f32 %v4314, %v4294
        %v4331 = vsub.f32 %v4314, %v4295
        %v4332 = vsub.f32 %v4314, %v4296
        %v4333 = vsub.f32 %v4319, %v4297
        %v4334 = vsub.f32 %v4319, %v4298
        %v4335 = vsub.f32 %v4319, %v4299
        %v4336 = vsub.f32 %v4319, %v4300
        %v4337 = vadd.f32 %v4269, %v4321
        %v4338 = vadd.f32 %v4270, %v4322
        %v4339 = vadd.f32 %v4271, %v4323
        %v4340 = vadd.f32 %v4272, %v4324
        %v4341 = vadd.f32 %v4273, %v4325
        %v4342 = vadd.f32 %v4274, %v4326
        %v4343 = vadd.f32 %v4275, %v4327
        %v4344 = vadd.f32 %v4276, %v4328
        %v4345 = vadd.f32 %v4277, %v4329
        %v4346 = vadd.f32 %v4278, %v4330
        %v4347 = vadd.f32 %v4279, %v4331
        %v4348 = vadd.f32 %v4280, %v4332
        %v4349 = vadd.f32 %v4281, %v4333
        %v4350 = vadd.f32 %v4282, %v4334
        %v4351 = vadd.f32 %v4283, %v4335
        %v4352 = vadd.f32 %v4284, %v4336
        %4353 = vst [vmem:[%s529] sm:$0xff] %v4337
        %4354 = vst [vmem:[%s529 + $0x8] sm:$0xff] %v4338
        %4355 = vst [vmem:[%s529 + $0x10] sm:$0xff] %v4339
        %4356 = vst [vmem:[%s529 + $0x18] sm:$0xff] %v4340
        %4357 = vst [vmem:[%s529 + $0x20] sm:$0xff] %v4341
        %4358 = vst [vmem:[%s529 + $0x28] sm:$0xff] %v4342
        %4359 = vst [vmem:[%s529 + $0x30] sm:$0xff] %v4343
        %4360 = vst [vmem:[%s529 + $0x38] sm:$0xff] %v4344
        %4361 = vst [vmem:[%s529 + $0x40] sm:$0xff] %v4345
        %4362 = vst [vmem:[%s529 + $0x48] sm:$0xff] %v4346
        %4363 = vst [vmem:[%s529 + $0x50] sm:$0xff] %v4347
        %4364 = vst [vmem:[%s529 + $0x58] sm:$0xff] %v4348
        %4365 = vst [vmem:[%s529 + $0x60] sm:$0xff] %v4349
        %4366 = vst [vmem:[%s529 + $0x68] sm:$0xff] %v4350
        %4367 = vst [vmem:[%s529 + $0x70] sm:$0xff] %v4351
        %4368 = vst [vmem:[%s529 + $0x78] sm:$0xff] %v4352
        %s4369 = sand.u32 %s337, 1
        %s4370 = sand.u32 %s337, 1
        %s4371 = smul.addr %s4370, 128
        %s4372 = scalar_lea.vmem [#allocation3], %s4371
        // Predicated region
        $region100: #{_lambda_.1} parent=94 // pred_check
          %p4373 = pneg %p347
        $region101: #{_lambda_.1} parent=94 // pred_check_branch
          %4375 = sbr.rel (%p4373) target = $region103
        $region102: #{_lambda_.1} parent=94 // pred_region
          %s4376 = smul.u32 4, %s25
          %s4377 = smul.addr %s4376, 8
          %s4378 = scalar_lea.vmem %s14, %s4377
          // Predicated region
          $region104: #{_lambda_.1} parent=102 // pred_check
            _
          $region105: #{_lambda_.1} parent=102 // pred_check_branch
            %4380 = sbr.rel (0) target = $region107
          $region106: #{_lambda_.1} parent=102 // pred_region
            // Predicated region
            $region108: #{_lambda_.1} parent=106 // pred_check
              _
            $region109: #{_lambda_.1} parent=106 // pred_check_branch
              %4382 = sbr.rel (0) target = $region111
            $region110: #{_lambda_.1} parent=106 // pred_region
              loop: start=0, step=1, limit=1
              $region112: #{_lambda_.1} parent=110 // loop_pre_header
                _
              $region113: #{_lambda_.1} parent=110 // loop_header
                %s4384 = sphi 0, %s4388
                %p4385 = scmp.ge.s32.totalorder %s4384, 1
                %s4389 = sphi %s4372, %s4372
                %s4390 = sphi %s4378, %s4378
              $region114: #{_lambda_.1} parent=110 // loop_header_branch
                %4387 = sbr.rel (%p4385) target = $region118
              $region115: #{_lambda_.1} parent=110 // loop_body
                %v4391 = vld [vmem:[%s4389] sm:$0xff]
                %4392 = vst [vmem:[%s4390] sm:$0xff] %v4391
                %v4393 = vld [vmem:[%s4389 + $0x8] sm:$0xff]
                %4394 = vst [vmem:[%s4390 + $0x8] sm:$0xff] %v4393
                %v4395 = vld [vmem:[%s4389 + $0x10] sm:$0xff]
                %4396 = vst [vmem:[%s4390 + $0x10] sm:$0xff] %v4395
                %v4397 = vld [vmem:[%s4389 + $0x18] sm:$0xff]
                %4398 = vst [vmem:[%s4390 + $0x18] sm:$0xff] %v4397
                %v4399 = vld [vmem:[%s4389 + $0x20] sm:$0xff]
                %4400 = vst [vmem:[%s4390 + $0x40] sm:$0xff] %v4399
                %v4401 = vld [vmem:[%s4389 + $0x28] sm:$0xff]
                %4402 = vst [vmem:[%s4390 + $0x48] sm:$0xff] %v4401
                %v4403 = vld [vmem:[%s4389 + $0x30] sm:$0xff]
                %4404 = vst [vmem:[%s4390 + $0x50] sm:$0xff] %v4403
                %v4405 = vld [vmem:[%s4389 + $0x38] sm:$0xff]
                %4406 = vst [vmem:[%s4390 + $0x58] sm:$0xff] %v4405
                %v4407 = vld [vmem:[%s4389 + $0x40] sm:$0xff]
                %4408 = vst [vmem:[%s4390 + $0x80] sm:$0xff] %v4407
                %v4409 = vld [vmem:[%s4389 + $0x48] sm:$0xff]
                %4410 = vst [vmem:[%s4390 + $0x88] sm:$0xff] %v4409
                %v4411 = vld [vmem:[%s4389 + $0x50] sm:$0xff]
                %4412 = vst [vmem:[%s4390 + $0x90] sm:$0xff] %v4411
                %v4413 = vld [vmem:[%s4389 + $0x58] sm:$0xff]
                %4414 = vst [vmem:[%s4390 + $0x98] sm:$0xff] %v4413
                %v4415 = vld [vmem:[%s4389 + $0x60] sm:$0xff]
                %4416 = vst [vmem:[%s4390 + $0xc0] sm:$0xff] %v4415
                %v4417 = vld [vmem:[%s4389 + $0x68] sm:$0xff]
                %4418 = vst [vmem:[%s4390 + $0xc8] sm:$0xff] %v4417
                %v4419 = vld [vmem:[%s4389 + $0x70] sm:$0xff]
                %4420 = vst [vmem:[%s4390 + $0xd0] sm:$0xff] %v4419
                %v4421 = vld [vmem:[%s4389 + $0x78] sm:$0xff]
                %4422 = vst [vmem:[%s4390 + $0xd8] sm:$0xff] %v4421
              $region116: #{_lambda_.1} parent=110 // loop_footer
                %s4388 = sadd.s32 1, %s4384
              $region117: #{_lambda_.1} parent=110 // loop_footer_branch
                %4383 = sbr.rel target = $region113
              $region118: #{_lambda_.1} parent=110 // loop_exit
                _
            $region111: #{_lambda_.1} parent=106 // pred_fallthru
              _
            // Predicated region
            $region119: #{_lambda_.1} parent=106 // pred_check
              _
            $region120: #{_lambda_.1} parent=106 // pred_check_branch
              %4424 = sbr.rel target = $region122
            $region121: #{_lambda_.1} parent=106 // pred_region
              _
            $region122: #{_lambda_.1} parent=106 // pred_fallthru
              _
          $region107: #{_lambda_.1} parent=102 // pred_fallthru
            _
          %4425 = vnop
        $region103: #{_lambda_.1} parent=94 // pred_fallthru
          _
      $region95: #{_lambda_.1} parent=5 // pred_fallthru
        _
      %p4426 = scmp.le.s32.totalorder 2, %s20
      // Predicated region
      $region123: #{_lambda_.1} parent=5 // pred_check
        %p4427 = pneg %p4426
      $region124: #{_lambda_.1} parent=5 // pred_check_branch
        %4429 = sbr.rel (%p4427) target = $region126
      $region125: #{_lambda_.1} parent=5 // pred_region
        %s4430 = ssub.s32 %s20, 2
        // Predicated region
        $region127: #{_lambda_.1} parent=125 // pred_check
          %p4431 = pneg %p353
        $region128: #{_lambda_.1} parent=125 // pred_check_branch
          %4433 = sbr.rel (%p4431) target = $region130
        $region129: #{_lambda_.1} parent=125 // pred_region
          %s4434 = sand.u32 %s338, 1
          %s4435 = sand.u32 %s338, 1
          %s4436 = smul.addr %s4435, 128
          %s4437 = scalar_lea.vmem [#allocation3], %s4436
        $region130: #{_lambda_.1} parent=125 // pred_fallthru
          _
      $region126: #{_lambda_.1} parent=5 // pred_fallthru
        _
    $region6: #{_lambda_.1} parent=1 // loop_footer
      %s24 = sadd.s32 1, %s20
    $region7: #{_lambda_.1} parent=1 // loop_footer_branch
      %19 = sbr.rel target = $region3
    $region8: #{_lambda_.1} parent=1 // loop_exit
      _

</llo_original>
